<compile_context>
chip_gen: v5e
topology: v5e:2x2
jax: 0.10.0
libtpu: 0.0.40
codegen_flags: <defaults>
</compile_context>

<pallas_src>
import jax
import jax.numpy as jnp
from jax.experimental import pallas as pl
from jax.experimental.pallas import tpu as pltpu


def _round_up(x, m):
    return (x + m - 1) // m * m


# ----------------------------------------------------------------------------
# Pallas kernel: GEMM + bias + ReLU (used for the im2col convs), M-tiled.
# ----------------------------------------------------------------------------
def _linear_relu_kernel(x_ref, w_ref, b_ref, o_ref):
    acc = jnp.dot(x_ref[...], w_ref[...], preferred_element_type=jnp.float32)
    o_ref[...] = jnp.maximum(acc + b_ref[...], 0.0)


def linear_relu(x, w, b2d, *, tm=256):
    """relu(x @ w + b), tiled over rows of x ("parallel" grid axis)."""
    M, K = x.shape
    K2, N = w.shape
    assert K == K2 and b2d.shape == (1, N)
    mp = _round_up(M, 8)
    tm = _round_up(min(tm, mp), 8)
    mp = _round_up(mp, tm)
    if mp != M:
        x = jnp.pad(x, ((0, mp - M), (0, 0)))
    out = pl.pallas_call(
        _linear_relu_kernel,
        out_shape=jax.ShapeDtypeStruct((mp, N), jnp.float32),
        grid=(mp // tm,),
        in_specs=[
            pl.BlockSpec((tm, K), lambda i: (i, 0)),
            pl.BlockSpec((K, N), lambda i: (0, 0)),
            pl.BlockSpec((1, N), lambda i: (0, 0)),
        ],
        out_specs=pl.BlockSpec((tm, N), lambda i: (i, 0)),
        compiler_params=pltpu.CompilerParams(
            dimension_semantics=("parallel",),
            vmem_limit_bytes=16 << 20),
    )(x, w, b2d)
    return out[:M] if mp != M else out


# ----------------------------------------------------------------------------
# Pallas kernel: fused fc1(+ReLU) / fc2(+ReLU), tiled over the hidden axis.
#   cat([feat, act]) @ W1 == feat @ W1[:F] + act @ W1[F:]   (same for W2)
# ----------------------------------------------------------------------------
def _mlp_kernel(feat_ref, act_ref, w1f_ref, w1a_ref, b1_ref,
                w2h_ref, w2a_ref, b2_ref, o_ref, acc_ref):
    k = pl.program_id(0)

    @pl.when(k == 0)
    def _():
        acc_ref[...] = jnp.zeros_like(acc_ref)

    # fc1 hidden tile (B, tH), computed and ReLU'd in f32.
    h = jnp.dot(feat_ref[...], w1f_ref[...], preferred_element_type=jnp.float32)
    h = h + jnp.dot(act_ref[...], w1a_ref[...], preferred_element_type=jnp.float32)
    h = jnp.maximum(h + b1_ref[...], 0.0)

    # fc2 partial sum over this hidden tile.
    acc_ref[...] += jnp.dot(h.astype(w2h_ref.dtype), w2h_ref[...],
                            preferred_element_type=jnp.float32)

    @pl.when(k == pl.num_programs(0) - 1)
    def _():
        o = acc_ref[...] + jnp.dot(act_ref[...], w2a_ref[...],
                                   preferred_element_type=jnp.float32)
        o_ref[...] = jnp.maximum(o + b2_ref[...], 0.0)


def curiosity_mlp(feat, act, w1f, w1a, b1, w2h, w2a, b2, *, th=512):
    B, F = feat.shape
    _, A = act.shape
    Hp = w1f.shape[1]
    th = min(th, Hp)
    assert Hp % th == 0, (Hp, th)
    return pl.pallas_call(
        _mlp_kernel,
        out_shape=jax.ShapeDtypeStruct((B, F), jnp.float32),
        grid=(Hp // th,),
        in_specs=[
            pl.BlockSpec((B, F), lambda k: (0, 0)),
            pl.BlockSpec((B, A), lambda k: (0, 0)),
            pl.BlockSpec((F, th), lambda k: (0, k)),
            pl.BlockSpec((A, th), lambda k: (0, k)),
            pl.BlockSpec((1, th), lambda k: (0, k)),
            pl.BlockSpec((th, F), lambda k: (k, 0)),
            pl.BlockSpec((A, F), lambda k: (0, 0)),
            pl.BlockSpec((1, F), lambda k: (0, 0)),
        ],
        out_specs=pl.BlockSpec((B, F), lambda k: (0, 0)),
        scratch_shapes=[pltpu.VMEM((B, F), jnp.float32)],
        compiler_params=pltpu.CompilerParams(
            dimension_semantics=("arbitrary",),
            vmem_limit_bytes=24 << 20),
    )(feat, act, w1f, w1a, b1, w2h, w2a, b2)


# ----------------------------------------------------------------------------
# im2col helpers (GEMM runs inside the Pallas kernel above)
# ----------------------------------------------------------------------------
def _conv_out(h, k=3, stride=2, pad=1):
    return (h + 2 * pad - k) // stride + 1


def _im2col_nchw(x, k, stride, pad):
    # x: (B, C, H, W) -> rows (B*Ho*Wo), features in (C, kh, kw) order.
    B, C, H, W = x.shape
    Ho, Wo = _conv_out(H, k, stride, pad), _conv_out(W, k, stride, pad)
    xp = jnp.pad(x, ((0, 0), (0, 0), (pad, pad), (pad, pad)))
    cols = []
    for di in range(k):
        for dj in range(k):
            cols.append(xp[:, :, di:di + stride * Ho:stride,
                              dj:dj + stride * Wo:stride])
    patches = jnp.stack(cols, axis=-1)            # (B, C, Ho, Wo, k*k)
    patches = patches.transpose(0, 2, 3, 1, 4)    # (B, Ho, Wo, C, k*k)
    return patches.reshape(B * Ho * Wo, C * k * k), Ho, Wo


def _im2col_nhwc(x, k, stride, pad):
    # x: (B, H, W, C) -> rows (B*Ho*Wo), features in (kh, kw, C) order.
    B, H, W, C = x.shape
    Ho, Wo = _conv_out(H, k, stride, pad), _conv_out(W, k, stride, pad)
    xp = jnp.pad(x, ((0, 0), (pad, pad), (pad, pad), (0, 0)))
    cols = []
    for di in range(k):
        for dj in range(k):
            cols.append(xp[:, di:di + stride * Ho:stride,
                              dj:dj + stride * Wo:stride, :])
    patches = jnp.stack(cols, axis=3)             # (B, Ho, Wo, k*k, C)
    return patches.reshape(B * Ho * Wo, k * k * C), Ho, Wo


def conv1_relu(x_nchw, w_mat, b2d):
    B = x_nchw.shape[0]
    patches, Ho, Wo = _im2col_nchw(x_nchw, 3, 2, 1)
    out = linear_relu(patches, w_mat, b2d)
    return out.reshape(B, Ho, Wo, w_mat.shape[1])          # NHWC, no transpose


def conv2_relu(x_nhwc, w_mat, b2d):
    B = x_nhwc.shape[0]
    patches, Ho, Wo = _im2col_nhwc(x_nhwc, 3, 2, 1)
    out = linear_relu(patches, w_mat, b2d)
    return out.reshape(B, Ho, Wo, w_mat.shape[1])          # NHWC


# ----------------------------------------------------------------------------
# Parameters: synthetic init (PyTorch-style uniform) + one-time prep
# ----------------------------------------------------------------------------
def init_params(key, in_channels, n_actions, cnn_output_size, hidden=2000):
    ks = jax.random.split(key, 8)

    def u(k, shape, fan_in):
        bound = 1.0 / float(fan_in) ** 0.5
        return jax.random.uniform(k, shape, jnp.float32, -bound, bound)

    return {
        "conv1_w": u(ks[0], (16, in_channels, 3, 3), in_channels * 9),
        "conv1_b": u(ks[1], (16,), in_channels * 9),
        "conv2_w": u(ks[2], (32, 16, 3, 3), 16 * 9),
        "conv2_b": u(ks[3], (32,), 16 * 9),
        # fc1: Linear(cnn_output_size + n_actions, 2000), stored as (in, out);
        # rows [:F] act on conv features (NCHW flatten order), rows [F:] on action.
        "w1": u(ks[4], (cnn_output_size + n_actions, hidden),
                cnn_output_size + n_actions),
        "b1": u(ks[5], (hidden,), cnn_output_size + n_actions),
        # fc2: Linear(2000 + n_actions, cnn_output_size)
        "w2": u(ks[6], (hidden + n_actions, cnn_output_size), hidden + n_actions),
        "b2": u(ks[7], (cnn_output_size,), hidden + n_actions),
    }


def prepare_params(raw, in_channels, n_actions, spatial_hw,
                   hidden=2000, th=512):
    """One-time layout prep: split/permute/pad/cast weights for the kernels."""
    H, W = spatial_hw
    Ho1, Wo1 = _conv_out(H), _conv_out(W)
    Ho2, Wo2 = _conv_out(Ho1), _conv_out(Wo1)
    C2 = 32
    F = C2 * Ho2 * Wo2
    A = n_actions
    Hp = _round_up(hidden, th)                         # 2000 -> 2048

    # conv GEMM weights (feature order must match the im2col used).
    conv1_wm = raw["conv1_w"].reshape(16, in_channels * 9).T          # (C,kh,kw)
    conv2_wm = raw["conv2_w"].transpose(2, 3, 1, 0).reshape(9 * 16, 32)  # (kh,kw,C)

    # fc1: split feature/action rows; permute feature rows from PyTorch's
    # NCHW flatten order (c, ho, wo) to our NHWC flatten order (ho, wo, c).
    w1 = raw["w1"]
    w1f = w1[:F].reshape(C2, Ho2, Wo2, hidden).transpose(1, 2, 0, 3)
    w1f = w1f.reshape(F, hidden)
    w1a = w1[F:]

    # fc2: split hidden/action rows (output columns stay in PyTorch order).
    w2 = raw["w2"]
    w2h, w2a = w2[:hidden], w2[hidden:]

    # zero-pad the hidden axis to Hp (padded h columns are exactly 0 after ReLU
    # and their w2h rows are 0, so the result is unchanged).
    pad_h = Hp - hidden
    w1f = jnp.pad(w1f, ((0, 0), (0, pad_h)))
    w1a = jnp.pad(w1a, ((0, 0), (0, pad_h)))
    b1 = jnp.pad(raw["b1"], (0, pad_h)).reshape(1, Hp)
    w2h = jnp.pad(w2h, ((0, pad_h), (0, 0)))

    return {
        "conv1_wm": conv1_wm, "conv1_b": raw["conv1_b"].reshape(1, 16),
        "conv2_wm": conv2_wm, "conv2_b": raw["conv2_b"].reshape(1, 32),
        "w1f": w1f.astype(jnp.bfloat16), "w1a": w1a.astype(jnp.bfloat16),
        "b1": b1.astype(jnp.float32),
        "w2h": w2h.astype(jnp.bfloat16), "w2a": w2a.astype(jnp.bfloat16),
        "b2": raw["b2"].reshape(1, F).astype(jnp.float32),
    }


# ----------------------------------------------------------------------------
# Forward pass (== CuriosityRewarder.forward)
# ----------------------------------------------------------------------------
@jax.jit
def curiosity_forward(params, state, action_oh):
    B = state.shape[0]
    # SimpleConvNet (torch.no_grad == plain inference here); NHWC internally.
    f = conv1_relu(state, params["conv1_wm"], params["conv1_b"])
    f = conv2_relu(f, params["conv2_wm"], params["conv2_b"])
    feat = f.reshape(B, -1).astype(jnp.bfloat16)     # (B, F), NHWC flatten
    act = action_oh.astype(jnp.bfloat16)             # (B, A)
    return curiosity_mlp(feat, act,
                         params["w1f"], params["w1a"], params["b1"],
                         params["w2h"], params["w2a"], params["b2"])


if __name__ == "__main__":
    B, C, H, W = 2, 4, 16, 16
    n_actions = 8

    Ho2 = _conv_out(_conv_out(H))
    Wo2 = _conv_out(_conv_out(W))
    cnn_output_size = 32 * Ho2 * Wo2                  # 32 * 4 * 4 = 512

    key = jax.random.PRNGKey(0)
    k_state, k_params = jax.random.split(key)
    state = jax.random.normal(k_state, (B, C, H, W), jnp.float32)
    actions = jnp.array([1, 5], dtype=jnp.int32)
    action_oh = jax.nn.one_hot(actions, n_actions, dtype=jnp.float32)  # (B, A)

    raw = init_params(k_params, C, n_actions, cnn_output_size)
    params = prepare_params(raw, C, n_actions, (H, W))

    out = curiosity_forward(params, state, action_oh)
    out = jax.block_until_ready(out)

    assert out.shape == (B, cnn_output_size), out.shape
    assert bool(jnp.all(jnp.isfinite(out)))
    assert bool(jnp.all(out >= 0.0))                  # final ReLU
    print("KERNEL_OK")
</pallas_src>

<mosaic_0001>
module attributes {stable_mosaic.version = 11 : i64} {
  func.func @_linear_relu_kernel(%arg0: i32, %arg1: memref<128x36xf32, #tpu.memory_space<vmem>>, %arg2: memref<36x16xf32, #tpu.memory_space<vmem>>, %arg3: memref<1x16xf32, #tpu.memory_space<vmem>>, %arg4: memref<128x16xf32, #tpu.memory_space<vmem>>) attributes {dimension_semantics = [#tpu.dimension_semantics<parallel>], iteration_bounds = array<i64: 1>, scalar_prefetch = 0 : i64, scratch_operands = 0 : i64, tpu.core_type = #tpu.core_type<tc>, window_params = [{transform_indices = @transform_0, window_bounds = array<i64: 128, 36>}, {pipeline_mode = #tpu.pipeline_mode<synchronous>, transform_indices = @transform_1, window_bounds = array<i64: 36, 16>}, {pipeline_mode = #tpu.pipeline_mode<synchronous>, transform_indices = @transform_2, window_bounds = array<i64: 1, 16>}, {transform_indices = @transform_3, window_bounds = array<i64: 128, 16>}]} {
    %c0 = arith.constant 0 : index
    %c0_0 = arith.constant 0 : index
    %0 = vector.load %arg1[%c0, %c0_0] : memref<128x36xf32, #tpu.memory_space<vmem>>, vector<128x36xf32>
    %c0_1 = arith.constant 0 : index
    %c0_2 = arith.constant 0 : index
    %1 = vector.load %arg2[%c0_1, %c0_2] : memref<36x16xf32, #tpu.memory_space<vmem>>, vector<36x16xf32>
    %cst = arith.constant dense<0.000000e+00> : vector<128x16xf32>
    %2 = tpu.matmul %0, %1, %cst {dimension_numbers = #tpu.dot_dimension_numbers<[1], [0], [0], [1], [0, 0, 1, 1], [], []>} : vector<128x36xf32>, vector<36x16xf32>, vector<128x16xf32> -> vector<128x16xf32>
    %c0_3 = arith.constant 0 : index
    %c0_4 = arith.constant 0 : index
    %3 = vector.load %arg3[%c0_3, %c0_4] : memref<1x16xf32, #tpu.memory_space<vmem>>, vector<1x16xf32>
    %4 = vector.broadcast %3 : vector<1x16xf32> to vector<128x16xf32>
    %5 = arith.addf %2, %4 : vector<128x16xf32>
    %cst_5 = arith.constant 0.000000e+00 : f32
    %6 = vector.broadcast %cst_5 : f32 to vector<128x16xf32>
    %7 = arith.maximumf %5, %6 : vector<128x16xf32>
    %c0_6 = arith.constant 0 : index
    %c0_7 = arith.constant 0 : index
    %8 = vector.load %arg4[%c0_6, %c0_7] : memref<128x16xf32, #tpu.memory_space<vmem>>, vector<128x16xf32>
    tpu.vector_store %arg4[%c0_6, %c0_7], %7 {strides = array<i32>} : memref<128x16xf32, #tpu.memory_space<vmem>>, vector<128x16xf32>,
    return
  }
  func.func @transform_0(%arg0: i32) -> (i32, i32) {
    %c0_i32 = arith.constant 0 : i32
    %c0_i32_0 = arith.constant 0 : i32
    return %arg0, %c0_i32 : i32, i32
  }
  func.func @transform_1(%arg0: i32) -> (i32, i32) {
    %c0_i32 = arith.constant 0 : i32
    %c0_i32_0 = arith.constant 0 : i32
    %c0_i32_1 = arith.constant 0 : i32
    return %c0_i32, %c0_i32_0 : i32, i32
  }
  func.func @transform_2(%arg0: i32) -> (i32, i32) {
    %c0_i32 = arith.constant 0 : i32
    %c0_i32_0 = arith.constant 0 : i32
    %c0_i32_1 = arith.constant 0 : i32
    return %c0_i32, %c0_i32_0 : i32, i32
  }
  func.func @transform_3(%arg0: i32) -> (i32, i32) {
    %c0_i32 = arith.constant 0 : i32
    %c0_i32_0 = arith.constant 0 : i32
    return %arg0, %c0_i32 : i32, i32
  }
}

module attributes {stable_mosaic.version = 11 : i64} {
  func.func @_linear_relu_kernel(%arg0: i32, %arg1: memref<32x144xf32, #tpu.memory_space<vmem>>, %arg2: memref<144x32xf32, #tpu.memory_space<vmem>>, %arg3: memref<1x32xf32, #tpu.memory_space<vmem>>, %arg4: memref<32x32xf32, #tpu.memory_space<vmem>>) attributes {dimension_semantics = [#tpu.dimension_semantics<parallel>], iteration_bounds = array<i64: 1>, scalar_prefetch = 0 : i64, scratch_operands = 0 : i64, tpu.core_type = #tpu.core_type<tc>, window_params = [{transform_indices = @transform_0, window_bounds = array<i64: 32, 144>}, {pipeline_mode = #tpu.pipeline_mode<synchronous>, transform_indices = @transform_1, window_bounds = array<i64: 144, 32>}, {pipeline_mode = #tpu.pipeline_mode<synchronous>, transform_indices = @transform_2, window_bounds = array<i64: 1, 32>}, {transform_indices = @transform_3, window_bounds = array<i64: 32, 32>}]} {
    %c0 = arith.constant 0 : index
    %c0_0 = arith.constant 0 : index
    %0 = vector.load %arg1[%c0, %c0_0] : memref<32x144xf32, #tpu.memory_space<vmem>>, vector<32x144xf32>
    %c0_1 = arith.constant 0 : index
    %c0_2 = arith.constant 0 : index
    %1 = vector.load %arg2[%c0_1, %c0_2] : memref<144x32xf32, #tpu.memory_space<vmem>>, vector<144x32xf32>
    %cst = arith.constant dense<0.000000e+00> : vector<32x32xf32>
    %2 = tpu.matmul %0, %1, %cst {dimension_numbers = #tpu.dot_dimension_numbers<[1], [0], [0], [1], [0, 0, 1, 1], [], []>} : vector<32x144xf32>, vector<144x32xf32>, vector<32x32xf32> -> vector<32x32xf32>
    %c0_3 = arith.constant 0 : index
    %c0_4 = arith.constant 0 : index
    %3 = vector.load %arg3[%c0_3, %c0_4] : memref<1x32xf32, #tpu.memory_space<vmem>>, vector<1x32xf32>
    %4 = vector.broadcast %3 : vector<1x32xf32> to vector<32x32xf32>
    %5 = arith.addf %2, %4 : vector<32x32xf32>
    %cst_5 = arith.constant 0.000000e+00 : f32
    %6 = vector.broadcast %cst_5 : f32 to vector<32x32xf32>
    %7 = arith.maximumf %5, %6 : vector<32x32xf32>
    %c0_6 = arith.constant 0 : index
    %c0_7 = arith.constant 0 : index
    %8 = vector.load %arg4[%c0_6, %c0_7] : memref<32x32xf32, #tpu.memory_space<vmem>>, vector<32x32xf32>
    tpu.vector_store %arg4[%c0_6, %c0_7], %7 {strides = array<i32>} : memref<32x32xf32, #tpu.memory_space<vmem>>, vector<32x32xf32>,
    return
  }
  func.func @transform_0(%arg0: i32) -> (i32, i32) {
    %c0_i32 = arith.constant 0 : i32
    %c0_i32_0 = arith.constant 0 : i32
    return %arg0, %c0_i32 : i32, i32
  }
  func.func @transform_1(%arg0: i32) -> (i32, i32) {
    %c0_i32 = arith.constant 0 : i32
    %c0_i32_0 = arith.constant 0 : i32
    %c0_i32_1 = arith.constant 0 : i32
    return %c0_i32, %c0_i32_0 : i32, i32
  }
  func.func @transform_2(%arg0: i32) -> (i32, i32) {
    %c0_i32 = arith.constant 0 : i32
    %c0_i32_0 = arith.constant 0 : i32
    %c0_i32_1 = arith.constant 0 : i32
    return %c0_i32, %c0_i32_0 : i32, i32
  }
  func.func @transform_3(%arg0: i32) -> (i32, i32) {
    %c0_i32 = arith.constant 0 : i32
    %c0_i32_0 = arith.constant 0 : i32
    return %arg0, %c0_i32 : i32, i32
  }
}

module attributes {stable_mosaic.version = 11 : i64} {
  func.func @_mlp_kernel(%arg0: i32, %arg1: memref<2x512xbf16, #tpu.memory_space<vmem>>, %arg2: memref<2x8xbf16, #tpu.memory_space<vmem>>, %arg3: memref<512x512xbf16, #tpu.memory_space<vmem>>, %arg4: memref<8x512xbf16, #tpu.memory_space<vmem>>, %arg5: memref<1x512xf32, #tpu.memory_space<vmem>>, %arg6: memref<512x512xbf16, #tpu.memory_space<vmem>>, %arg7: memref<8x512xbf16, #tpu.memory_space<vmem>>, %arg8: memref<1x512xf32, #tpu.memory_space<vmem>>, %arg9: memref<2x512xf32, #tpu.memory_space<vmem>>, %arg10: memref<2x512xf32, #tpu.memory_space<vmem>>) attributes {dimension_semantics = [#tpu.dimension_semantics<arbitrary>], iteration_bounds = array<i64: 4>, scalar_prefetch = 0 : i64, scratch_operands = 1 : i64, tpu.core_type = #tpu.core_type<tc>, window_params = [{pipeline_mode = #tpu.pipeline_mode<synchronous>, transform_indices = @transform_0, window_bounds = array<i64: 2, 512>}, {pipeline_mode = #tpu.pipeline_mode<synchronous>, transform_indices = @transform_1, window_bounds = array<i64: 2, 8>}, {transform_indices = @transform_2, window_bounds = array<i64: 512, 512>}, {transform_indices = @transform_3, window_bounds = array<i64: 8, 512>}, {transform_indices = @transform_4, window_bounds = array<i64: 1, 512>}, {transform_indices = @transform_5, window_bounds = array<i64: 512, 512>}, {pipeline_mode = #tpu.pipeline_mode<synchronous>, transform_indices = @transform_6, window_bounds = array<i64: 8, 512>}, {pipeline_mode = #tpu.pipeline_mode<synchronous>, transform_indices = @transform_7, window_bounds = array<i64: 1, 512>}, {pipeline_mode = #tpu.pipeline_mode<synchronous>, transform_indices = @transform_8, window_bounds = array<i64: 2, 512>}]} {
    %c0_i32 = arith.constant 0 : i32
    %0 = arith.cmpi eq, %arg0, %c0_i32 : i32
    %1 = arith.extui %0 : i1 to i32
    %c0_i32_0 = arith.constant 0 : i32
    %2 = arith.cmpi ne, %1, %c0_i32_0 : i32
    scf.if %2 {
      %cst_20 = arith.constant 0.000000e+00 : f32
      %24 = vector.broadcast %cst_20 : f32 to vector<2x512xf32>
      %c0_21 = arith.constant 0 : index
      %c0_22 = arith.constant 0 : index
      %25 = vector.load %arg10[%c0_21, %c0_22] : memref<2x512xf32, #tpu.memory_space<vmem>>, vector<2x512xf32>
      tpu.vector_store %arg10[%c0_21, %c0_22], %24 {strides = array<i32>} : memref<2x512xf32, #tpu.memory_space<vmem>>, vector<2x512xf32>,
    } else {
    }
    %c0 = arith.constant 0 : index
    %c0_1 = arith.constant 0 : index
    %3 = vector.load %arg1[%c0, %c0_1] : memref<2x512xbf16, #tpu.memory_space<vmem>>, vector<2x512xbf16>
    %c0_2 = arith.constant 0 : index
    %c0_3 = arith.constant 0 : index
    %4 = vector.load %arg3[%c0_2, %c0_3] : memref<512x512xbf16, #tpu.memory_space<vmem>>, vector<512x512xbf16>
    %cst = arith.constant dense<0.000000e+00> : vector<2x512xf32>
    %5 = tpu.matmul %3, %4, %cst {dimension_numbers = #tpu.dot_dimension_numbers<[1], [0], [0], [1], [0, 0, 1, 1], [], []>} : vector<2x512xbf16>, vector<512x512xbf16>, vector<2x512xf32> -> vector<2x512xf32>
    %c0_4 = arith.constant 0 : index
    %c0_5 = arith.constant 0 : index
    %6 = vector.load %arg2[%c0_4, %c0_5] : memref<2x8xbf16, #tpu.memory_space<vmem>>, vector<2x8xbf16>
    %c0_6 = arith.constant 0 : index
    %c0_7 = arith.constant 0 : index
    %7 = vector.load %arg4[%c0_6, %c0_7] : memref<8x512xbf16, #tpu.memory_space<vmem>>, vector<8x512xbf16>
    %cst_8 = arith.constant dense<0.000000e+00> : vector<2x512xf32>
    %8 = tpu.matmul %6, %7, %cst_8 {dimension_numbers = #tpu.dot_dimension_numbers<[1], [0], [0], [1], [0, 0, 1, 1], [], []>} : vector<2x8xbf16>, vector<8x512xbf16>, vector<2x512xf32> -> vector<2x512xf32>
    %9 = arith.addf %5, %8 : vector<2x512xf32>
    %c0_9 = arith.constant 0 : index
    %c0_10 = arith.constant 0 : index
    %10 = vector.load %arg5[%c0_9, %c0_10] : memref<1x512xf32, #tpu.memory_space<vmem>>, vector<1x512xf32>
    %11 = vector.broadcast %10 : vector<1x512xf32> to vector<2x512xf32>
    %12 = arith.addf %9, %11 : vector<2x512xf32>
    %cst_11 = arith.constant 0.000000e+00 : f32
    %13 = vector.broadcast %cst_11 : f32 to vector<2x512xf32>
    %14 = arith.maximumf %12, %13 : vector<2x512xf32>
    %c0_12 = arith.constant 0 : index
    %c0_13 = arith.constant 0 : index
    %15 = vector.load %arg10[%c0_12, %c0_13] : memref<2x512xf32, #tpu.memory_space<vmem>>, vector<2x512xf32>
    %16 = arith.truncf %14 : vector<2x512xf32> to vector<2x512xbf16>
    %c0_14 = arith.constant 0 : index
    %c0_15 = arith.constant 0 : index
    %17 = vector.load %arg6[%c0_14, %c0_15] : memref<512x512xbf16, #tpu.memory_space<vmem>>, vector<512x512xbf16>
    %cst_16 = arith.constant dense<0.000000e+00> : vector<2x512xf32>
    %18 = tpu.matmul %16, %17, %cst_16 {dimension_numbers = #tpu.dot_dimension_numbers<[1], [0], [0], [1], [0, 0, 1, 1], [], []>} : vector<2x512xbf16>, vector<512x512xbf16>, vector<2x512xf32> -> vector<2x512xf32>
    %19 = arith.addf %15, %18 : vector<2x512xf32>
    %c0_17 = arith.constant 0 : index
    %c0_18 = arith.constant 0 : index
    %20 = vector.load %arg10[%c0_17, %c0_18] : memref<2x512xf32, #tpu.memory_space<vmem>>, vector<2x512xf32>
    tpu.vector_store %arg10[%c0_17, %c0_18], %19 {strides = array<i32>} : memref<2x512xf32, #tpu.memory_space<vmem>>, vector<2x512xf32>,
    %c3_i32 = arith.constant 3 : i32
    %21 = arith.cmpi eq, %arg0, %c3_i32 : i32
    %22 = arith.extui %21 : i1 to i32
    %c0_i32_19 = arith.constant 0 : i32
    %23 = arith.cmpi ne, %22, %c0_i32_19 : i32
    scf.if %23 {
      %c0_20 = arith.constant 0 : index
      %c0_21 = arith.constant 0 : index
      %24 = vector.load %arg10[%c0_20, %c0_21] : memref<2x512xf32, #tpu.memory_space<vmem>>, vector<2x512xf32>
      %c0_22 = arith.constant 0 : index
      %c0_23 = arith.constant 0 : index
      %25 = vector.load %arg2[%c0_22, %c0_23] : memref<2x8xbf16, #tpu.memory_space<vmem>>, vector<2x8xbf16>
      %c0_24 = arith.constant 0 : index
      %c0_25 = arith.constant 0 : index
      %26 = vector.load %arg7[%c0_24, %c0_25] : memref<8x512xbf16, #tpu.memory_space<vmem>>, vector<8x512xbf16>
      %cst_26 = arith.constant dense<0.000000e+00> : vector<2x512xf32>
      %27 = tpu.matmul %25, %26, %cst_26 {dimension_numbers = #tpu.dot_dimension_numbers<[1], [0], [0], [1], [0, 0, 1, 1], [], []>} : vector<2x8xbf16>, vector<8x512xbf16>, vector<2x512xf32> -> vector<2x512xf32>
      %28 = arith.addf %24, %27 : vector<2x512xf32>
      %c0_27 = arith.constant 0 : index
      %c0_28 = arith.constant 0 : index
      %29 = vector.load %arg8[%c0_27, %c0_28] : memref<1x512xf32, #tpu.memory_space<vmem>>, vector<1x512xf32>
      %30 = vector.broadcast %29 : vector<1x512xf32> to vector<2x512xf32>
      %31 = arith.addf %28, %30 : vector<2x512xf32>
      %cst_29 = arith.constant 0.000000e+00 : f32
      %32 = vector.broadcast %cst_29 : f32 to vector<2x512xf32>
      %33 = arith.maximumf %31, %32 : vector<2x512xf32>
      %c0_30 = arith.constant 0 : index
      %c0_31 = arith.constant 0 : index
      %34 = vector.load %arg9[%c0_30, %c0_31] : memref<2x512xf32, #tpu.memory_space<vmem>>, vector<2x512xf32>
      tpu.vector_store %arg9[%c0_30, %c0_31], %33 {strides = array<i32>} : memref<2x512xf32, #tpu.memory_space<vmem>>, vector<2x512xf32>,
    } else {
    }
    return
  }
  func.func @transform_0(%arg0: i32) -> (i32, i32) {
    %c0_i32 = arith.constant 0 : i32
    %c0_i32_0 = arith.constant 0 : i32
    %c0_i32_1 = arith.constant 0 : i32
    return %c0_i32, %c0_i32_0 : i32, i32
  }
  func.func @transform_1(%arg0: i32) -> (i32, i32) {
    %c0_i32 = arith.constant 0 : i32
    %c0_i32_0 = arith.constant 0 : i32
    %c0_i32_1 = arith.constant 0 : i32
    return %c0_i32, %c0_i32_0 : i32, i32
  }
  func.func @transform_2(%arg0: i32) -> (i32, i32) {
    %c0_i32 = arith.constant 0 : i32
    %c0_i32_0 = arith.constant 0 : i32
    return %c0_i32, %arg0 : i32, i32
  }
  func.func @transform_3(%arg0: i32) -> (i32, i32) {
    %c0_i32 = arith.constant 0 : i32
    %c0_i32_0 = arith.constant 0 : i32
    return %c0_i32, %arg0 : i32, i32
  }
  func.func @transform_4(%arg0: i32) -> (i32, i32) {
    %c0_i32 = arith.constant 0 : i32
    %c0_i32_0 = arith.constant 0 : i32
    return %c0_i32, %arg0 : i32, i32
  }
  func.func @transform_5(%arg0: i32) -> (i32, i32) {
    %c0_i32 = arith.constant 0 : i32
    %c0_i32_0 = arith.constant 0 : i32
    return %arg0, %c0_i32 : i32, i32
  }
  func.func @transform_6(%arg0: i32) -> (i32, i32) {
    %c0_i32 = arith.constant 0 : i32
    %c0_i32_0 = arith.constant 0 : i32
    %c0_i32_1 = arith.constant 0 : i32
    return %c0_i32, %c0_i32_0 : i32, i32
  }
  func.func @transform_7(%arg0: i32) -> (i32, i32) {
    %c0_i32 = arith.constant 0 : i32
    %c0_i32_0 = arith.constant 0 : i32
    %c0_i32_1 = arith.constant 0 : i32
    return %c0_i32, %c0_i32_0 : i32, i32
  }
  func.func @transform_8(%arg0: i32) -> (i32, i32) {
    %c0_i32 = arith.constant 0 : i32
    %c0_i32_0 = arith.constant 0 : i32
    %c0_i32_1 = arith.constant 0 : i32
    return %c0_i32, %c0_i32_0 : i32, i32
  }
}

</mosaic_0001>

<llo_original>
// kernel: curiosity_forward.3
$region0: #{curiosity_forward.3}
  #allocation0 [shape = 'u32[]', space=smem, size = 0x4, offset = 0x4, fixed_abs, tag = 'smem constant byte address 0x4 - core index']
  #allocation1 [shape = 'u32[72,128]{1,0:T(1,128)}', space=vmem, size = 0x9000, scoped, tag = 'internal scratch']
  %s0 = inlined_call_operand.vmem [shape: f32[128,36], index: 0, kind: input, shape index: {}]
  %s1 = inlined_call_operand.vmem [shape: f32[36,16], index: 1, kind: input, shape index: {}]
  %s2 = inlined_call_operand.vmem [shape: f32[1,16], index: 2, kind: input, shape index: {}]
  %s3 = inlined_call_operand.vmem [shape: f32[128,16], index: 3, kind: output, shape index: {}]
  %s4 = sld [smem:[#allocation0]]
  $region22: #{curiosity_forward.3} parent=0
    _
  %s6 = ssub.s32 1, %s4
  %s7 = scalar_select 0, %s6, %s4
  // Predicated region
  $region2: #{curiosity_forward.3} parent=0 // pred_check
    _
  $region3: #{curiosity_forward.3} parent=0 // pred_check_branch
    %9 = sbr.rel (0) target = $region5
  $region4: #{curiosity_forward.3} parent=0 // pred_region
    _
  $region5: #{curiosity_forward.3} parent=0 // pred_fallthru
    _
  // Predicated region
  $region6: #{curiosity_forward.3} parent=0 // pred_check
    _
  $region7: #{curiosity_forward.3} parent=0 // pred_check_branch
    %11 = sbr.rel (0) target = $region9
  $region8: #{curiosity_forward.3} parent=0 // pred_region
    _
  $region9: #{curiosity_forward.3} parent=0 // pred_fallthru
    _
  // Predicated region
  $region10: #{curiosity_forward.3} parent=0 // pred_check
    _
  $region11: #{curiosity_forward.3} parent=0 // pred_check_branch
    %13 = sbr.rel (0) target = $region13
  $region12: #{curiosity_forward.3} parent=0 // pred_region
    _
  $region13: #{curiosity_forward.3} parent=0 // pred_fallthru
    _
  %v14 = vld [vmem:[%s0] sm:$0xff]
  %v15 = vld [vmem:[%s0 + $0x8] sm:$0xff]
  %v16 = vld [vmem:[%s0 + $0x10] sm:$0xff]
  %v17 = vld [vmem:[%s0 + $0x18] sm:$0xff]
  %v18 = vld [vmem:[%s0 + $0x20] sm:$0xff]
  %v19 = vld [vmem:[%s0 + $0x28] sm:$0xff]
  %v20 = vld [vmem:[%s0 + $0x30] sm:$0xff]
  %v21 = vld [vmem:[%s0 + $0x38] sm:$0xff]
  %v22 = vld [vmem:[%s0 + $0x40] sm:$0xff]
  %v23 = vld [vmem:[%s0 + $0x48] sm:$0xff]
  %v24 = vld [vmem:[%s0 + $0x50] sm:$0xff]
  %v25 = vld [vmem:[%s0 + $0x58] sm:$0xff]
  %v26 = vld [vmem:[%s0 + $0x60] sm:$0xff]
  %v27 = vld [vmem:[%s0 + $0x68] sm:$0xff]
  %v28 = vld [vmem:[%s0 + $0x70] sm:$0xff]
  %v29 = vld [vmem:[%s0 + $0x78] sm:$0xff]
  %v30 = vld [vmem:[%s1] sm:$0xff]
  %v31 = vld [vmem:[%s1 + $0x8] sm:$0xff]
  %v32 = vld [vmem:[%s1 + $0x10] sm:$0xff]
  %v33 = vld [vmem:[%s1 + $0x18] sm:$0xff]
  %v34 = vld [vmem:[%s1 + $0x20] sm:$0xf]
  %v35 = vld [vmem:[%s2] sm:$0x1]
  %v37 = vperm.slane %v35, 0
  %vm39 = vcmask 293888
  %v41 = vsel %vm39, %v14, 0
  %v44 = vsel %vm39, %v15, 0
  %v47 = vsel %vm39, %v16, 0
  %v50 = vsel %vm39, %v17, 0
  %v53 = vsel %vm39, %v18, 0
  %v56 = vsel %vm39, %v19, 0
  %v59 = vsel %vm39, %v20, 0
  %v62 = vsel %vm39, %v21, 0
  %v65 = vsel %vm39, %v22, 0
  %v68 = vsel %vm39, %v23, 0
  %v71 = vsel %vm39, %v24, 0
  %v74 = vsel %vm39, %v25, 0
  %v77 = vsel %vm39, %v26, 0
  %v80 = vsel %vm39, %v27, 0
  %v83 = vsel %vm39, %v28, 0
  %v86 = vsel %vm39, %v29, 0
  %vm88 = vcmask 1043456
  %v90 = vsel %vm88, %v34, 0
  %92 = vmatpush.msra.mxu0 0.0
  %93 = vmatpush.msra.mxu0 0.0
  %94 = vmatpush.msra.mxu0 0.0
  %95 = vmatpush.msra.mxu0 0.0
  %96 = vmatpush.msra.mxu0 0.0
  %97 = vmatpush.msra.mxu0 0.0
  %98 = vmatpush.msra.mxu0 0.0
  %99 = vmatpush.msra.mxu0 0.0
  %100 = vmatpush.msra.mxu0 0.0
  %101 = vmatpush.msra.mxu0 0.0
  %102 = vmatpush.msra.mxu0 0.0
  %103 = vmatpush.msra.mxu0 %v90
  %104 = vmatpush.msra.mxu0 %v33
  %105 = vmatpush.msra.mxu0 %v32
  %106 = vmatpush.msra.mxu0 %v31
  %107 = vmatpush.msra.mxu0 %v30
  %108 = vmatmul.f32.gmra.mxu0 %v41
  %v109 = vpop.f32.mrf.mxu0
  %v110 = vadd.f32 %v37, %v109
  %111 = vmatmul.f32.gmra.mxu0 %v44
  %v112 = vpop.f32.mrf.mxu0
  %v113 = vadd.f32 %v37, %v112
  %114 = vmatmul.f32.gmra.mxu0 %v47
  %v115 = vpop.f32.mrf.mxu0
  %v116 = vadd.f32 %v37, %v115
  %117 = vmatmul.f32.gmra.mxu0 %v50
  %v118 = vpop.f32.mrf.mxu0
  %v119 = vadd.f32 %v37, %v118
  %120 = vmatmul.f32.gmra.mxu0 %v53
  %v121 = vpop.f32.mrf.mxu0
  %v122 = vadd.f32 %v37, %v121
  %123 = vmatmul.f32.gmra.mxu0 %v56
  %v124 = vpop.f32.mrf.mxu0
  %v125 = vadd.f32 %v37, %v124
  %126 = vmatmul.f32.gmra.mxu0 %v59
  %v127 = vpop.f32.mrf.mxu0
  %v128 = vadd.f32 %v37, %v127
  %129 = vmatmul.f32.gmra.mxu0 %v62
  %v130 = vpop.f32.mrf.mxu0
  %v131 = vadd.f32 %v37, %v130
  %132 = vmatmul.f32.gmra.mxu0 %v65
  %v133 = vpop.f32.mrf.mxu0
  %v134 = vadd.f32 %v37, %v133
  %135 = vmatmul.f32.gmra.mxu0 %v68
  %v136 = vpop.f32.mrf.mxu0
  %v137 = vadd.f32 %v37, %v136
  %138 = vmatmul.f32.gmra.mxu0 %v71
  %v139 = vpop.f32.mrf.mxu0
  %v140 = vadd.f32 %v37, %v139
  %141 = vmatmul.f32.gmra.mxu0 %v74
  %v142 = vpop.f32.mrf.mxu0
  %v143 = vadd.f32 %v37, %v142
  %144 = vmatmul.f32.gmra.mxu0 %v77
  %v145 = vpop.f32.mrf.mxu0
  %v146 = vadd.f32 %v37, %v145
  %147 = vmatmul.f32.gmra.mxu0 %v80
  %v148 = vpop.f32.mrf.mxu0
  %v149 = vadd.f32 %v37, %v148
  %150 = vmatmul.f32.gmra.mxu0 %v83
  %v151 = vpop.f32.mrf.mxu0
  %v152 = vadd.f32 %v37, %v151
  %153 = vmatmul.f32.gmra.mxu0 %v86
  %v154 = vpop.f32.mrf.mxu0
  %v155 = vadd.f32 %v37, %v154
  %156 = vdwg.mxu0
  %v157 = vmax.f32 %v110, 0.0
  %v158 = vmax.f32 %v113, 0.0
  %v159 = vmax.f32 %v116, 0.0
  %v160 = vmax.f32 %v119, 0.0
  %v161 = vmax.f32 %v122, 0.0
  %v162 = vmax.f32 %v125, 0.0
  %v163 = vmax.f32 %v128, 0.0
  %v164 = vmax.f32 %v131, 0.0
  %v165 = vmax.f32 %v134, 0.0
  %v166 = vmax.f32 %v137, 0.0
  %v167 = vmax.f32 %v140, 0.0
  %v168 = vmax.f32 %v143, 0.0
  %v169 = vmax.f32 %v146, 0.0
  %v170 = vmax.f32 %v149, 0.0
  %v171 = vmax.f32 %v152, 0.0
  %v172 = vmax.f32 %v155, 0.0
  %vm173 = vcmask 130048
  %174 = vst.msk [vmem:[%s3] sm:$0xff] %vm173, %v157
  %175 = vst.msk [vmem:[%s3 + $0x8] sm:$0xff] %vm173, %v158
  %176 = vst.msk [vmem:[%s3 + $0x10] sm:$0xff] %vm173, %v159
  %177 = vst.msk [vmem:[%s3 + $0x18] sm:$0xff] %vm173, %v160
  %178 = vst.msk [vmem:[%s3 + $0x20] sm:$0xff] %vm173, %v161
  %179 = vst.msk [vmem:[%s3 + $0x28] sm:$0xff] %vm173, %v162
  %180 = vst.msk [vmem:[%s3 + $0x30] sm:$0xff] %vm173, %v163
  %181 = vst.msk [vmem:[%s3 + $0x38] sm:$0xff] %vm173, %v164
  %182 = vst.msk [vmem:[%s3 + $0x40] sm:$0xff] %vm173, %v165
  %183 = vst.msk [vmem:[%s3 + $0x48] sm:$0xff] %vm173, %v166
  %184 = vst.msk [vmem:[%s3 + $0x50] sm:$0xff] %vm173, %v167
  %185 = vst.msk [vmem:[%s3 + $0x58] sm:$0xff] %vm173, %v168
  %186 = vst.msk [vmem:[%s3 + $0x60] sm:$0xff] %vm173, %v169
  %187 = vst.msk [vmem:[%s3 + $0x68] sm:$0xff] %vm173, %v170
  %188 = vst.msk [vmem:[%s3 + $0x70] sm:$0xff] %vm173, %v171
  %189 = vst.msk [vmem:[%s3 + $0x78] sm:$0xff] %vm173, %v172
  // Predicated region
  $region14: #{curiosity_forward.3} parent=0 // pred_check
    _
  $region15: #{curiosity_forward.3} parent=0 // pred_check_branch
    %191 = sbr.rel (0) target = $region17
  $region16: #{curiosity_forward.3} parent=0 // pred_region
    _
  $region17: #{curiosity_forward.3} parent=0 // pred_fallthru
    _
  // Predicated region
  $region18: #{curiosity_forward.3} parent=0 // pred_check
    _
  $region19: #{curiosity_forward.3} parent=0 // pred_check_branch
    %193 = sbr.rel (0) target = $region21
  $region20: #{curiosity_forward.3} parent=0 // pred_region
    _
  $region21: #{curiosity_forward.3} parent=0 // pred_fallthru
    _

// kernel: curiosity_forward.4
$region0: #{curiosity_forward.4}
  #allocation0 [shape = 'u32[]', space=smem, size = 0x4, offset = 0x4, fixed_abs, tag = 'smem constant byte address 0x4 - core index']
  #allocation1 [shape = 'u32[72,128]{1,0:T(1,128)}', space=vmem, size = 0x9000, scoped, tag = 'internal scratch']
  %s0 = inlined_call_operand.vmem [shape: f32[32,144], index: 0, kind: input, shape index: {}]
  %s1 = inlined_call_operand.vmem [shape: f32[144,32], index: 1, kind: input, shape index: {}]
  %s2 = inlined_call_operand.vmem [shape: f32[1,32], index: 2, kind: input, shape index: {}]
  %s3 = inlined_call_operand.vmem [shape: f32[32,32], index: 3, kind: output, shape index: {}]
  %s4 = sld [smem:[#allocation0]]
  $region22: #{curiosity_forward.4} parent=0
    _
  %s6 = ssub.s32 1, %s4
  %s7 = scalar_select 0, %s6, %s4
  // Predicated region
  $region2: #{curiosity_forward.4} parent=0 // pred_check
    _
  $region3: #{curiosity_forward.4} parent=0 // pred_check_branch
    %9 = sbr.rel (0) target = $region5
  $region4: #{curiosity_forward.4} parent=0 // pred_region
    _
  $region5: #{curiosity_forward.4} parent=0 // pred_fallthru
    _
  // Predicated region
  $region6: #{curiosity_forward.4} parent=0 // pred_check
    _
  $region7: #{curiosity_forward.4} parent=0 // pred_check_branch
    %11 = sbr.rel (0) target = $region9
  $region8: #{curiosity_forward.4} parent=0 // pred_region
    _
  $region9: #{curiosity_forward.4} parent=0 // pred_fallthru
    _
  // Predicated region
  $region10: #{curiosity_forward.4} parent=0 // pred_check
    _
  $region11: #{curiosity_forward.4} parent=0 // pred_check_branch
    %13 = sbr.rel (0) target = $region13
  $region12: #{curiosity_forward.4} parent=0 // pred_region
    _
  $region13: #{curiosity_forward.4} parent=0 // pred_fallthru
    _
  %v14 = vld [vmem:[%s0] sm:$0xff]
  %v15 = vld [vmem:[%s0 + $0x8] sm:$0xff]
  %v16 = vld [vmem:[%s0 + $0x10] sm:$0xff]
  %v17 = vld [vmem:[%s0 + $0x18] sm:$0xff]
  %v18 = vld [vmem:[%s0 + $0x20] sm:$0xff]
  %v19 = vld [vmem:[%s0 + $0x28] sm:$0xff]
  %v20 = vld [vmem:[%s0 + $0x30] sm:$0xff]
  %v21 = vld [vmem:[%s0 + $0x38] sm:$0xff]
  %v22 = vld [vmem:[%s1] sm:$0xff]
  %v23 = vld [vmem:[%s1 + $0x8] sm:$0xff]
  %v24 = vld [vmem:[%s1 + $0x10] sm:$0xff]
  %v25 = vld [vmem:[%s1 + $0x18] sm:$0xff]
  %v26 = vld [vmem:[%s1 + $0x20] sm:$0xff]
  %v27 = vld [vmem:[%s1 + $0x28] sm:$0xff]
  %v28 = vld [vmem:[%s1 + $0x30] sm:$0xff]
  %v29 = vld [vmem:[%s1 + $0x38] sm:$0xff]
  %v30 = vld [vmem:[%s1 + $0x40] sm:$0xff]
  %v31 = vld [vmem:[%s1 + $0x48] sm:$0xff]
  %v32 = vld [vmem:[%s1 + $0x50] sm:$0xff]
  %v33 = vld [vmem:[%s1 + $0x58] sm:$0xff]
  %v34 = vld [vmem:[%s1 + $0x60] sm:$0xff]
  %v35 = vld [vmem:[%s1 + $0x68] sm:$0xff]
  %v36 = vld [vmem:[%s1 + $0x70] sm:$0xff]
  %v37 = vld [vmem:[%s1 + $0x78] sm:$0xff]
  %v38 = vld [vmem:[%s1 + $0x80] sm:$0xff]
  %v39 = vld [vmem:[%s1 + $0x88] sm:$0xff]
  %v40 = vld [vmem:[%s2] sm:$0x1]
  %v42 = vperm.slane %v40, 0
  %vm44 = vcmask 130048
  %v46 = vsel %vm44, %v15, 0
  %v49 = vsel %vm44, %v17, 0
  %v52 = vsel %vm44, %v19, 0
  %v55 = vsel %vm44, %v21, 0
  %57 = vmatpush.msra.mxu0 %v37
  %58 = vmatpush.msra.mxu0 %v36
  %59 = vmatpush.msra.mxu0 %v35
  %60 = vmatpush.msra.mxu0 %v34
  %61 = vmatpush.msra.mxu0 %v33
  %62 = vmatpush.msra.mxu0 %v32
  %63 = vmatpush.msra.mxu0 %v31
  %64 = vmatpush.msra.mxu0 %v30
  %65 = vmatpush.msra.mxu0 %v29
  %66 = vmatpush.msra.mxu0 %v28
  %67 = vmatpush.msra.mxu0 %v27
  %68 = vmatpush.msra.mxu0 %v26
  %69 = vmatpush.msra.mxu0 %v25
  %70 = vmatpush.msra.mxu0 %v24
  %71 = vmatpush.msra.mxu0 %v23
  %72 = vmatpush.msra.mxu0 %v22
  %73 = vmatmul.f32.gmra.mxu0 %v14
  %v74 = vpop.f32.mrf.mxu0
  %v75 = vadd.f32 %v42, %v74
  %76 = vmatmul.f32.gmra.mxu0 %v16
  %v77 = vpop.f32.mrf.mxu0
  %v78 = vadd.f32 %v42, %v77
  %79 = vmatmul.f32.gmra.mxu0 %v18
  %v80 = vpop.f32.mrf.mxu0
  %v81 = vadd.f32 %v42, %v80
  %82 = vmatmul.f32.gmra.mxu0 %v20
  %v83 = vpop.f32.mrf.mxu0
  %v84 = vadd.f32 %v42, %v83
  %85 = vdwg.mxu0
  %86 = vmatpush.msra.mxu0 0.0
  %87 = vmatpush.msra.mxu0 0.0
  %88 = vmatpush.msra.mxu0 0.0
  %89 = vmatpush.msra.mxu0 0.0
  %90 = vmatpush.msra.mxu0 0.0
  %91 = vmatpush.msra.mxu0 0.0
  %92 = vmatpush.msra.mxu0 0.0
  %93 = vmatpush.msra.mxu0 0.0
  %94 = vmatpush.msra.mxu0 0.0
  %95 = vmatpush.msra.mxu0 0.0
  %96 = vmatpush.msra.mxu0 0.0
  %97 = vmatpush.msra.mxu0 0.0
  %98 = vmatpush.msra.mxu0 0.0
  %99 = vmatpush.msra.mxu0 0.0
  %100 = vmatpush.msra.mxu0 %v39
  %101 = vmatpush.msra.mxu0 %v38
  %102 = vmatmul.f32.gmra.mxu0 %v46
  %v103 = vpop.f32.mrf.mxu0
  %v104 = vadd.f32 %v75, %v103
  %105 = vmatmul.f32.gmra.mxu0 %v49
  %v106 = vpop.f32.mrf.mxu0
  %v107 = vadd.f32 %v78, %v106
  %108 = vmatmul.f32.gmra.mxu0 %v52
  %v109 = vpop.f32.mrf.mxu0
  %v110 = vadd.f32 %v81, %v109
  %111 = vmatmul.f32.gmra.mxu0 %v55
  %v112 = vpop.f32.mrf.mxu0
  %v113 = vadd.f32 %v84, %v112
  %114 = vdwg.mxu0
  %v115 = vmax.f32 %v104, 0.0
  %v116 = vmax.f32 %v107, 0.0
  %v117 = vmax.f32 %v110, 0.0
  %v118 = vmax.f32 %v113, 0.0
  %vm119 = vcmask 261120
  %120 = vst.msk [vmem:[%s3] sm:$0xff] %vm119, %v115
  %121 = vst.msk [vmem:[%s3 + $0x8] sm:$0xff] %vm119, %v116
  %122 = vst.msk [vmem:[%s3 + $0x10] sm:$0xff] %vm119, %v117
  %123 = vst.msk [vmem:[%s3 + $0x18] sm:$0xff] %vm119, %v118
  // Predicated region
  $region14: #{curiosity_forward.4} parent=0 // pred_check
    _
  $region15: #{curiosity_forward.4} parent=0 // pred_check_branch
    %125 = sbr.rel (0) target = $region17
  $region16: #{curiosity_forward.4} parent=0 // pred_region
    _
  $region17: #{curiosity_forward.4} parent=0 // pred_fallthru
    _
  // Predicated region
  $region18: #{curiosity_forward.4} parent=0 // pred_check
    _
  $region19: #{curiosity_forward.4} parent=0 // pred_check_branch
    %127 = sbr.rel (0) target = $region21
  $region20: #{curiosity_forward.4} parent=0 // pred_region
    _
  $region21: #{curiosity_forward.4} parent=0 // pred_fallthru
    _

// kernel: curiosity_forward.5
$region0: #{curiosity_forward.5}
  #allocation0 [shape = 'u32[]', space=smem, size = 0x4, offset = 0x4, fixed_abs, tag = 'smem constant byte address 0x4 - core index']
  #allocation1 [shape = 'u32[72,128]{1,0:T(1,128)}', space=vmem, size = 0x9000, scoped, tag = 'internal scratch']
  #allocation2 [shape = 'f32[2,512]{1,0:T(2,128)}', space=vmem, size = 0x1000, scoped, tag = 'scratch operand']
  %s0 = inlined_call_operand.vmem [shape: bf16[2,512], index: 0, kind: input, shape index: {}]
  %s1 = inlined_call_operand.vmem [shape: bf16[2,8], index: 1, kind: input, shape index: {}]
  %s2 = inlined_call_operand.vmem [shape: bf16[512,2048], index: 2, kind: input, shape index: {}]
  %s3 = inlined_call_operand.vmem [shape: bf16[8,2048], index: 3, kind: input, shape index: {}]
  %s4 = inlined_call_operand.vmem [shape: f32[1,2048], index: 4, kind: input, shape index: {}]
  %s5 = inlined_call_operand.hbm [shape: bf16[2048,512], index: 5, kind: input, shape index: {}]
  %s6 = inlined_call_operand.vmem [shape: bf16[8,512], index: 6, kind: input, shape index: {}]
  %s7 = inlined_call_operand.vmem [shape: f32[1,512], index: 7, kind: input, shape index: {}]
  %s8 = inlined_call_operand.hbm [shape: f32[2,512], index: 8, kind: output, shape index: {}]
  %s9 = sld [smem:[#allocation0]]
  $region100: #{curiosity_forward.5} parent=0
    _
  %s11 = ssub.s32 1, %s9
  %s12 = scalar_select 0, %s11, %s9
  $region1: #{curiosity_forward.5} parent=0
    #allocation3 [shape = 'u8[1048576]{0}', space=vmem, size = 0x100000, scoped, tag = 'input window, operand 2']
    #allocation4 [shape = 'u8[1048576]{0}', space=vmem, size = 0x100000, scoped, tag = 'input window, operand 5']
    #allocation5 [shape = 's32[2]{0}', space=sflag, size = 0x8, scoped, tag = 'scoped memory for curiosity_forward.5']
    #allocation6 [shape = 's32[2]{0}', space=sflag, size = 0x8, scoped, tag = 'scoped memory for curiosity_forward.5']
    #allocation7 [shape = 'u8[4096]{0}', space=vmem, size = 0x1000, scoped, tag = 'output window, operand 0, single buffered']
    %13 = vsyncpa [#allocation5], 0
    %s14 = scalar_lea.sflag [#allocation5], 1
    %15 = vsyncpa %s14, 0
    %16 = vsyncpa [#allocation6], 0
    loop: start=0, step=1, limit=6
    $region2: #{curiosity_forward.5} parent=1 // loop_pre_header
      _
    $region3: #{curiosity_forward.5} parent=1 // loop_header
      %s18 = sphi 0, %s22
      %p19 = scmp.ge.s32.totalorder %s18, 6
      %s26 = sphi 0, %s26
      %s28 = sphi 0, %s26
      %s29 = sphi 0, %s28
      %s43 = sphi 0, %s29
      %s47 = sphi 0, %s47
      %s49 = sphi 0, %s47
      %s50 = sphi 0, %s49
      %s64 = sphi 0, %s50
      %s70 = sphi 0, %s72
      %s73 = sphi 0, %s70
      %s74 = sphi 0, %s73
      %s90 = sphi 0, %s74
      %s96 = sphi 0, %s98
      %s99 = sphi 0, %s96
      %s100 = sphi 0, %s99
      %s116 = sphi 0, %s100
      %s122 = sphi 0, %s124
      %s125 = sphi 0, %s122
      %s126 = sphi 0, %s125
      %s142 = sphi 0, %s126
      %s148 = sphi 0, %s150
      %s151 = sphi 0, %s148
      %s152 = sphi 0, %s151
      %s168 = sphi 0, %s152
      %s172 = sphi 0, %s172
      %s174 = sphi 0, %s172
      %s175 = sphi 0, %s174
      %s189 = sphi 0, %s175
      %s193 = sphi 0, %s193
      %s195 = sphi 0, %s193
      %s196 = sphi 0, %s195
      %s210 = sphi 0, %s196
      %s214 = sphi 0, %s214
      %s216 = sphi 0, %s214
      %s217 = sphi 0, %s216
      %s231 = sphi 0, %s217
    $region4: #{curiosity_forward.5} parent=1 // loop_header_branch
      %21 = sbr.rel (%p19) target = $region8
    $region5: #{curiosity_forward.5} parent=1 // loop_body
      %s23 = ssub.s32 %s18, 1
      %s24 = ssub.s32 %s18, 2
      %s25 = sadd.s32 %s18, 1
      %s27 = sadd.s32 %s26, 1
      %p30 = scmp.eq.s32.totalorder %s18, 3
      %p31 = scmp.ne.s32.totalorder %s26, %s28
      %p32 = scmp.eq.s32.totalorder %s18, 0
      %p33 = por %p31, %p32
      %p34 = scmp.ne.s32.totalorder %s26, %s28
      %p35 = scmp.eq.s32.totalorder %s23, 3
      %p36 = por %p34, %p35
      %p37 = scmp.ne.s32.totalorder %s28, %s29
      %p38 = scmp.eq.s32.totalorder %s23, 0
      %p39 = por %p37, %p38
      %p40 = scmp.ne.s32.totalorder %s28, %s29
      %p41 = scmp.eq.s32.totalorder %s24, 3
      %p42 = por %p40, %p41
      %p44 = scmp.ne.s32.totalorder %s29, %s43
      %p45 = scmp.eq.s32.totalorder %s24, 0
      %p46 = por %p44, %p45
      %s48 = sadd.s32 %s47, 1
      %p51 = scmp.eq.s32.totalorder %s18, 3
      %p52 = scmp.ne.s32.totalorder %s47, %s49
      %p53 = scmp.eq.s32.totalorder %s18, 0
      %p54 = por %p52, %p53
      %p55 = scmp.ne.s32.totalorder %s47, %s49
      %p56 = scmp.eq.s32.totalorder %s23, 3
      %p57 = por %p55, %p56
      %p58 = scmp.ne.s32.totalorder %s49, %s50
      %p59 = scmp.eq.s32.totalorder %s23, 0
      %p60 = por %p58, %p59
      %p61 = scmp.ne.s32.totalorder %s49, %s50
      %p62 = scmp.eq.s32.totalorder %s24, 3
      %p63 = por %p61, %p62
      %p65 = scmp.ne.s32.totalorder %s50, %s64
      %p66 = scmp.eq.s32.totalorder %s24, 0
      %p67 = por %p65, %p66
      %s68 = ssub.s32 %s18, %s25
      %p69 = scmp.eq.s32.totalorder %s68, 0
      %s71 = sadd.s32 %s70, 1
      %s72 = scalar_select %p69, %s70, %s71
      %p75 = pneg %p69
      %p76 = scmp.eq.s32.totalorder %s18, 3
      %p77 = por %p75, %p76
      %p78 = scmp.ne.s32.totalorder %s70, %s73
      %p79 = scmp.eq.s32.totalorder %s18, 0
      %p80 = por %p78, %p79
      %p81 = scmp.ne.s32.totalorder %s70, %s73
      %p82 = scmp.eq.s32.totalorder %s23, 3
      %p83 = por %p81, %p82
      %p84 = scmp.ne.s32.totalorder %s73, %s74
      %p85 = scmp.eq.s32.totalorder %s23, 0
      %p86 = por %p84, %p85
      %p87 = scmp.ne.s32.totalorder %s73, %s74
      %p88 = scmp.eq.s32.totalorder %s24, 3
      %p89 = por %p87, %p88
      %p91 = scmp.ne.s32.totalorder %s74, %s90
      %p92 = scmp.eq.s32.totalorder %s24, 0
      %p93 = por %p91, %p92
      %s94 = ssub.s32 %s18, %s25
      %p95 = scmp.eq.s32.totalorder %s94, 0
      %s97 = sadd.s32 %s96, 1
      %s98 = scalar_select %p95, %s96, %s97
      %p101 = pneg %p95
      %p102 = scmp.eq.s32.totalorder %s18, 3
      %p103 = por %p101, %p102
      %p104 = scmp.ne.s32.totalorder %s96, %s99
      %p105 = scmp.eq.s32.totalorder %s18, 0
      %p106 = por %p104, %p105
      %p107 = scmp.ne.s32.totalorder %s96, %s99
      %p108 = scmp.eq.s32.totalorder %s23, 3
      %p109 = por %p107, %p108
      %p110 = scmp.ne.s32.totalorder %s99, %s100
      %p111 = scmp.eq.s32.totalorder %s23, 0
      %p112 = por %p110, %p111
      %p113 = scmp.ne.s32.totalorder %s99, %s100
      %p114 = scmp.eq.s32.totalorder %s24, 3
      %p115 = por %p113, %p114
      %p117 = scmp.ne.s32.totalorder %s100, %s116
      %p118 = scmp.eq.s32.totalorder %s24, 0
      %p119 = por %p117, %p118
      %s120 = ssub.s32 %s18, %s25
      %p121 = scmp.eq.s32.totalorder %s120, 0
      %s123 = sadd.s32 %s122, 1
      %s124 = scalar_select %p121, %s122, %s123
      %p127 = pneg %p121
      %p128 = scmp.eq.s32.totalorder %s18, 3
      %p129 = por %p127, %p128
      %p130 = scmp.ne.s32.totalorder %s122, %s125
      %p131 = scmp.eq.s32.totalorder %s18, 0
      %p132 = por %p130, %p131
      %p133 = scmp.ne.s32.totalorder %s122, %s125
      %p134 = scmp.eq.s32.totalorder %s23, 3
      %p135 = por %p133, %p134
      %p136 = scmp.ne.s32.totalorder %s125, %s126
      %p137 = scmp.eq.s32.totalorder %s23, 0
      %p138 = por %p136, %p137
      %p139 = scmp.ne.s32.totalorder %s125, %s126
      %p140 = scmp.eq.s32.totalorder %s24, 3
      %p141 = por %p139, %p140
      %p143 = scmp.ne.s32.totalorder %s126, %s142
      %p144 = scmp.eq.s32.totalorder %s24, 0
      %p145 = por %p143, %p144
      %s146 = ssub.s32 %s18, %s25
      %p147 = scmp.eq.s32.totalorder %s146, 0
      %s149 = sadd.s32 %s148, 1
      %s150 = scalar_select %p147, %s148, %s149
      %p153 = pneg %p147
      %p154 = scmp.eq.s32.totalorder %s18, 3
      %p155 = por %p153, %p154
      %p156 = scmp.ne.s32.totalorder %s148, %s151
      %p157 = scmp.eq.s32.totalorder %s18, 0
      %p158 = por %p156, %p157
      %p159 = scmp.ne.s32.totalorder %s148, %s151
      %p160 = scmp.eq.s32.totalorder %s23, 3
      %p161 = por %p159, %p160
      %p162 = scmp.ne.s32.totalorder %s151, %s152
      %p163 = scmp.eq.s32.totalorder %s23, 0
      %p164 = por %p162, %p163
      %p165 = scmp.ne.s32.totalorder %s151, %s152
      %p166 = scmp.eq.s32.totalorder %s24, 3
      %p167 = por %p165, %p166
      %p169 = scmp.ne.s32.totalorder %s152, %s168
      %p170 = scmp.eq.s32.totalorder %s24, 0
      %p171 = por %p169, %p170
      %s173 = sadd.s32 %s172, 1
      %p176 = scmp.eq.s32.totalorder %s18, 3
      %p177 = scmp.ne.s32.totalorder %s172, %s174
      %p178 = scmp.eq.s32.totalorder %s18, 0
      %p179 = por %p177, %p178
      %p180 = scmp.ne.s32.totalorder %s172, %s174
      %p181 = scmp.eq.s32.totalorder %s23, 3
      %p182 = por %p180, %p181
      %p183 = scmp.ne.s32.totalorder %s174, %s175
      %p184 = scmp.eq.s32.totalorder %s23, 0
      %p185 = por %p183, %p184
      %p186 = scmp.ne.s32.totalorder %s174, %s175
      %p187 = scmp.eq.s32.totalorder %s24, 3
      %p188 = por %p186, %p187
      %p190 = scmp.ne.s32.totalorder %s175, %s189
      %p191 = scmp.eq.s32.totalorder %s24, 0
      %p192 = por %p190, %p191
      %s194 = sadd.s32 %s193, 1
      %p197 = scmp.eq.s32.totalorder %s18, 3
      %p198 = scmp.ne.s32.totalorder %s193, %s195
      %p199 = scmp.eq.s32.totalorder %s18, 0
      %p200 = por %p198, %p199
      %p201 = scmp.ne.s32.totalorder %s193, %s195
      %p202 = scmp.eq.s32.totalorder %s23, 3
      %p203 = por %p201, %p202
      %p204 = scmp.ne.s32.totalorder %s195, %s196
      %p205 = scmp.eq.s32.totalorder %s23, 0
      %p206 = por %p204, %p205
      %p207 = scmp.ne.s32.totalorder %s195, %s196
      %p208 = scmp.eq.s32.totalorder %s24, 3
      %p209 = por %p207, %p208
      %p211 = scmp.ne.s32.totalorder %s196, %s210
      %p212 = scmp.eq.s32.totalorder %s24, 0
      %p213 = por %p211, %p212
      %s215 = sadd.s32 %s214, 1
      %p218 = scmp.eq.s32.totalorder %s18, 3
      %p219 = scmp.ne.s32.totalorder %s214, %s216
      %p220 = scmp.eq.s32.totalorder %s18, 0
      %p221 = por %p219, %p220
      %p222 = scmp.ne.s32.totalorder %s214, %s216
      %p223 = scmp.eq.s32.totalorder %s23, 3
      %p224 = por %p222, %p223
      %p225 = scmp.ne.s32.totalorder %s216, %s217
      %p226 = scmp.eq.s32.totalorder %s23, 0
      %p227 = por %p225, %p226
      %p228 = scmp.ne.s32.totalorder %s216, %s217
      %p229 = scmp.eq.s32.totalorder %s24, 3
      %p230 = por %p228, %p229
      %p232 = scmp.ne.s32.totalorder %s217, %s231
      %p233 = scmp.eq.s32.totalorder %s24, 0
      %p234 = por %p232, %p233
      %p235 = scmp.le.s32.totalorder 1, %s18
      %p236 = scmp.lt.s32.totalorder %s18, 5
      %p237 = pnand %p235, %p236
      %p238 = pneg %p237
      // Predicated region
      $region9: #{curiosity_forward.5} parent=5 // pred_check
        _
      $region10: #{curiosity_forward.5} parent=5 // pred_check_branch
        %240 = sbr.rel (%p237) target = $region12
      $region11: #{curiosity_forward.5} parent=5 // pred_region
        %s241 = ssub.s32 %s18, 1
        // Predicated region
        $region13: #{curiosity_forward.5} parent=11 // pred_check
          %p242 = pneg %p39
        $region14: #{curiosity_forward.5} parent=11 // pred_check_branch
          %244 = sbr.rel (%p242) target = $region16
        $region15: #{curiosity_forward.5} parent=11 // pred_region
          _
        $region16: #{curiosity_forward.5} parent=11 // pred_fallthru
          _
        // Predicated region
        $region17: #{curiosity_forward.5} parent=11 // pred_check
          %p245 = pneg %p60
        $region18: #{curiosity_forward.5} parent=11 // pred_check_branch
          %247 = sbr.rel (%p245) target = $region20
        $region19: #{curiosity_forward.5} parent=11 // pred_region
          _
        $region20: #{curiosity_forward.5} parent=11 // pred_fallthru
          _
        // Predicated region
        $region21: #{curiosity_forward.5} parent=11 // pred_check
          %p248 = pneg %p185
        $region22: #{curiosity_forward.5} parent=11 // pred_check_branch
          %250 = sbr.rel (%p248) target = $region24
        $region23: #{curiosity_forward.5} parent=11 // pred_region
          _
        $region24: #{curiosity_forward.5} parent=11 // pred_fallthru
          _
        // Predicated region
        $region25: #{curiosity_forward.5} parent=11 // pred_check
          %p251 = pneg %p206
        $region26: #{curiosity_forward.5} parent=11 // pred_check_branch
          %253 = sbr.rel (%p251) target = $region28
        $region27: #{curiosity_forward.5} parent=11 // pred_region
          _
        $region28: #{curiosity_forward.5} parent=11 // pred_fallthru
          _
      $region12: #{curiosity_forward.5} parent=5 // pred_fallthru
        _
      %p254 = scmp.lt.s32.totalorder %s18, 4
      // Predicated region
      $region29: #{curiosity_forward.5} parent=5 // pred_check
        %p255 = pneg %p254
      $region30: #{curiosity_forward.5} parent=5 // pred_check_branch
        %257 = sbr.rel (%p255) target = $region32
      $region31: #{curiosity_forward.5} parent=5 // pred_region
        // Predicated region
        $region33: #{curiosity_forward.5} parent=31 // pred_check
          %p258 = pneg %p80
        $region34: #{curiosity_forward.5} parent=31 // pred_check_branch
          %260 = sbr.rel (%p258) target = $region36
        $region35: #{curiosity_forward.5} parent=31 // pred_region
          %s261 = sand.u32 %s70, 1
          %s262 = sand.u32 %s70, 1
          %s263 = smul.addr %s262, 1024
          %s264 = scalar_lea.vmem [#allocation3], %s263
          %s265 = smul.u32 4, %s18
          %s266 = smul.addr %s265, 4
          %s267 = scalar_lea.vmem %s2, %s266
          // Predicated region
          $region37: #{curiosity_forward.5} parent=35 // pred_check
            _
          $region38: #{curiosity_forward.5} parent=35 // pred_check_branch
            %269 = sbr.rel (0) target = $region40
          $region39: #{curiosity_forward.5} parent=35 // pred_region
            // Predicated region
            $region41: #{curiosity_forward.5} parent=39 // pred_check
              _
            $region42: #{curiosity_forward.5} parent=39 // pred_check_branch
              %271 = sbr.rel (0) target = $region44
            $region43: #{curiosity_forward.5} parent=39 // pred_region
              loop: start=0, step=1, limit=1
              $region45: #{curiosity_forward.5} parent=43 // loop_pre_header
                _
              $region46: #{curiosity_forward.5} parent=43 // loop_header
                %s273 = sphi 0, %s277
                %p274 = scmp.ge.s32.totalorder %s273, 1
                %s278 = sphi %s267, %s267
                %s279 = sphi %s264, %s264
              $region47: #{curiosity_forward.5} parent=43 // loop_header_branch
                %276 = sbr.rel (%p274) target = $region51
              $region48: #{curiosity_forward.5} parent=43 // loop_body
                %v280 = vld [vmem:[%s278] sm:$0xff]
                %281 = vst [vmem:[%s279] sm:$0xff] %v280
                %v282 = vld [vmem:[%s278 + $0x8] sm:$0xff]
                %283 = vst [vmem:[%s279 + $0x8] sm:$0xff] %v282
                %v284 = vld [vmem:[%s278 + $0x40] sm:$0xff]
                %285 = vst [vmem:[%s279 + $0x10] sm:$0xff] %v284
                %v286 = vld [vmem:[%s278 + $0x48] sm:$0xff]
                %287 = vst [vmem:[%s279 + $0x18] sm:$0xff] %v286
                %v288 = vld [vmem:[%s278 + $0x80] sm:$0xff]
                %289 = vst [vmem:[%s279 + $0x20] sm:$0xff] %v288
                %v290 = vld [vmem:[%s278 + $0x88] sm:$0xff]
                %291 = vst [vmem:[%s279 + $0x28] sm:$0xff] %v290
                %v292 = vld [vmem:[%s278 + $0xc0] sm:$0xff]
                %293 = vst [vmem:[%s279 + $0x30] sm:$0xff] %v292
                %v294 = vld [vmem:[%s278 + $0xc8] sm:$0xff]
                %295 = vst [vmem:[%s279 + $0x38] sm:$0xff] %v294
                %v296 = vld [vmem:[%s278 + $0x100] sm:$0xff]
                %297 = vst [vmem:[%s279 + $0x40] sm:$0xff] %v296
                %v298 = vld [vmem:[%s278 + $0x108] sm:$0xff]
                %299 = vst [vmem:[%s279 + $0x48] sm:$0xff] %v298
                %v300 = vld [vmem:[%s278 + $0x140] sm:$0xff]
                %301 = vst [vmem:[%s279 + $0x50] sm:$0xff] %v300
                %v302 = vld [vmem:[%s278 + $0x148] sm:$0xff]
                %303 = vst [vmem:[%s279 + $0x58] sm:$0xff] %v302
                %v304 = vld [vmem:[%s278 + $0x180] sm:$0xff]
                %305 = vst [vmem:[%s279 + $0x60] sm:$0xff] %v304
                %v306 = vld [vmem:[%s278 + $0x188] sm:$0xff]
                %307 = vst [vmem:[%s279 + $0x68] sm:$0xff] %v306
                %v308 = vld [vmem:[%s278 + $0x1c0] sm:$0xff]
                %309 = vst [vmem:[%s279 + $0x70] sm:$0xff] %v308
                %v310 = vld [vmem:[%s278 + $0x1c8] sm:$0xff]
                %311 = vst [vmem:[%s279 + $0x78] sm:$0xff] %v310
                %v312 = vld [vmem:[%s278 + $0x200] sm:$0xff]
                %313 = vst [vmem:[%s279 + $0x80] sm:$0xff] %v312
                %v314 = vld [vmem:[%s278 + $0x208] sm:$0xff]
                %315 = vst [vmem:[%s279 + $0x88] sm:$0xff] %v314
                %v316 = vld [vmem:[%s278 + $0x240] sm:$0xff]
                %317 = vst [vmem:[%s279 + $0x90] sm:$0xff] %v316
                %v318 = vld [vmem:[%s278 + $0x248] sm:$0xff]
                %319 = vst [vmem:[%s279 + $0x98] sm:$0xff] %v318
                %v320 = vld [vmem:[%s278 + $0x280] sm:$0xff]
                %321 = vst [vmem:[%s279 + $0xa0] sm:$0xff] %v320
                %v322 = vld [vmem:[%s278 + $0x288] sm:$0xff]
                %323 = vst [vmem:[%s279 + $0xa8] sm:$0xff] %v322
                %v324 = vld [vmem:[%s278 + $0x2c0] sm:$0xff]
                %325 = vst [vmem:[%s279 + $0xb0] sm:$0xff] %v324
                %v326 = vld [vmem:[%s278 + $0x2c8] sm:$0xff]
                %327 = vst [vmem:[%s279 + $0xb8] sm:$0xff] %v326
                %v328 = vld [vmem:[%s278 + $0x300] sm:$0xff]
                %329 = vst [vmem:[%s279 + $0xc0] sm:$0xff] %v328
                %v330 = vld [vmem:[%s278 + $0x308] sm:$0xff]
                %331 = vst [vmem:[%s279 + $0xc8] sm:$0xff] %v330
                %v332 = vld [vmem:[%s278 + $0x340] sm:$0xff]
                %333 = vst [vmem:[%s279 + $0xd0] sm:$0xff] %v332
                %v334 = vld [vmem:[%s278 + $0x348] sm:$0xff]
                %335 = vst [vmem:[%s279 + $0xd8] sm:$0xff] %v334
                %v336 = vld [vmem:[%s278 + $0x380] sm:$0xff]
                %337 = vst [vmem:[%s279 + $0xe0] sm:$0xff] %v336
                %v338 = vld [vmem:[%s278 + $0x388] sm:$0xff]
                %339 = vst [vmem:[%s279 + $0xe8] sm:$0xff] %v338
                %v340 = vld [vmem:[%s278 + $0x3c0] sm:$0xff]
                %341 = vst [vmem:[%s279 + $0xf0] sm:$0xff] %v340
                %v342 = vld [vmem:[%s278 + $0x3c8] sm:$0xff]
                %343 = vst [vmem:[%s279 + $0xf8] sm:$0xff] %v342
                %v344 = vld [vmem:[%s278 + $0x400] sm:$0xff]
                %345 = vst [vmem:[%s279 + $0x100] sm:$0xff] %v344
                %v346 = vld [vmem:[%s278 + $0x408] sm:$0xff]
                %347 = vst [vmem:[%s279 + $0x108] sm:$0xff] %v346
                %v348 = vld [vmem:[%s278 + $0x440] sm:$0xff]
                %349 = vst [vmem:[%s279 + $0x110] sm:$0xff] %v348
                %v350 = vld [vmem:[%s278 + $0x448] sm:$0xff]
                %351 = vst [vmem:[%s279 + $0x118] sm:$0xff] %v350
                %v352 = vld [vmem:[%s278 + $0x480] sm:$0xff]
                %353 = vst [vmem:[%s279 + $0x120] sm:$0xff] %v352
                %v354 = vld [vmem:[%s278 + $0x488] sm:$0xff]
                %355 = vst [vmem:[%s279 + $0x128] sm:$0xff] %v354
                %v356 = vld [vmem:[%s278 + $0x4c0] sm:$0xff]
                %357 = vst [vmem:[%s279 + $0x130] sm:$0xff] %v356
                %v358 = vld [vmem:[%s278 + $0x4c8] sm:$0xff]
                %359 = vst [vmem:[%s279 + $0x138] sm:$0xff] %v358
                %v360 = vld [vmem:[%s278 + $0x500] sm:$0xff]
                %361 = vst [vmem:[%s279 + $0x140] sm:$0xff] %v360
                %v362 = vld [vmem:[%s278 + $0x508] sm:$0xff]
                %363 = vst [vmem:[%s279 + $0x148] sm:$0xff] %v362
                %v364 = vld [vmem:[%s278 + $0x540] sm:$0xff]
                %365 = vst [vmem:[%s279 + $0x150] sm:$0xff] %v364
                %v366 = vld [vmem:[%s278 + $0x548] sm:$0xff]
                %367 = vst [vmem:[%s279 + $0x158] sm:$0xff] %v366
                %v368 = vld [vmem:[%s278 + $0x580] sm:$0xff]
                %369 = vst [vmem:[%s279 + $0x160] sm:$0xff] %v368
                %v370 = vld [vmem:[%s278 + $0x588] sm:$0xff]
                %371 = vst [vmem:[%s279 + $0x168] sm:$0xff] %v370
                %v372 = vld [vmem:[%s278 + $0x5c0] sm:$0xff]
                %373 = vst [vmem:[%s279 + $0x170] sm:$0xff] %v372
                %v374 = vld [vmem:[%s278 + $0x5c8] sm:$0xff]
                %375 = vst [vmem:[%s279 + $0x178] sm:$0xff] %v374
                %v376 = vld [vmem:[%s278 + $0x600] sm:$0xff]
                %377 = vst [vmem:[%s279 + $0x180] sm:$0xff] %v376
                %v378 = vld [vmem:[%s278 + $0x608] sm:$0xff]
                %379 = vst [vmem:[%s279 + $0x188] sm:$0xff] %v378
                %v380 = vld [vmem:[%s278 + $0x640] sm:$0xff]
                %381 = vst [vmem:[%s279 + $0x190] sm:$0xff] %v380
                %v382 = vld [vmem:[%s278 + $0x648] sm:$0xff]
                %383 = vst [vmem:[%s279 + $0x198] sm:$0xff] %v382
                %v384 = vld [vmem:[%s278 + $0x680] sm:$0xff]
                %385 = vst [vmem:[%s279 + $0x1a0] sm:$0xff] %v384
                %v386 = vld [vmem:[%s278 + $0x688] sm:$0xff]
                %387 = vst [vmem:[%s279 + $0x1a8] sm:$0xff] %v386
                %v388 = vld [vmem:[%s278 + $0x6c0] sm:$0xff]
                %389 = vst [vmem:[%s279 + $0x1b0] sm:$0xff] %v388
                %v390 = vld [vmem:[%s278 + $0x6c8] sm:$0xff]
                %391 = vst [vmem:[%s279 + $0x1b8] sm:$0xff] %v390
                %v392 = vld [vmem:[%s278 + $0x700] sm:$0xff]
                %393 = vst [vmem:[%s279 + $0x1c0] sm:$0xff] %v392
                %v394 = vld [vmem:[%s278 + $0x708] sm:$0xff]
                %395 = vst [vmem:[%s279 + $0x1c8] sm:$0xff] %v394
                %v396 = vld [vmem:[%s278 + $0x740] sm:$0xff]
                %397 = vst [vmem:[%s279 + $0x1d0] sm:$0xff] %v396
                %v398 = vld [vmem:[%s278 + $0x748] sm:$0xff]
                %399 = vst [vmem:[%s279 + $0x1d8] sm:$0xff] %v398
                %v400 = vld [vmem:[%s278 + $0x780] sm:$0xff]
                %401 = vst [vmem:[%s279 + $0x1e0] sm:$0xff] %v400
                %v402 = vld [vmem:[%s278 + $0x788] sm:$0xff]
                %403 = vst [vmem:[%s279 + $0x1e8] sm:$0xff] %v402
                %v404 = vld [vmem:[%s278 + $0x7c0] sm:$0xff]
                %405 = vst [vmem:[%s279 + $0x1f0] sm:$0xff] %v404
                %v406 = vld [vmem:[%s278 + $0x7c8] sm:$0xff]
                %407 = vst [vmem:[%s279 + $0x1f8] sm:$0xff] %v406
                %v408 = vld [vmem:[%s278 + $0x800] sm:$0xff]
                %409 = vst [vmem:[%s279 + $0x200] sm:$0xff] %v408
                %v410 = vld [vmem:[%s278 + $0x808] sm:$0xff]
                %411 = vst [vmem:[%s279 + $0x208] sm:$0xff] %v410
                %v412 = vld [vmem:[%s278 + $0x840] sm:$0xff]
                %413 = vst [vmem:[%s279 + $0x210] sm:$0xff] %v412
                %v414 = vld [vmem:[%s278 + $0x848] sm:$0xff]
                %415 = vst [vmem:[%s279 + $0x218] sm:$0xff] %v414
                %v416 = vld [vmem:[%s278 + $0x880] sm:$0xff]
                %417 = vst [vmem:[%s279 + $0x220] sm:$0xff] %v416
                %v418 = vld [vmem:[%s278 + $0x888] sm:$0xff]
                %419 = vst [vmem:[%s279 + $0x228] sm:$0xff] %v418
                %v420 = vld [vmem:[%s278 + $0x8c0] sm:$0xff]
                %421 = vst [vmem:[%s279 + $0x230] sm:$0xff] %v420
                %v422 = vld [vmem:[%s278 + $0x8c8] sm:$0xff]
                %423 = vst [vmem:[%s279 + $0x238] sm:$0xff] %v422
                %v424 = vld [vmem:[%s278 + $0x900] sm:$0xff]
                %425 = vst [vmem:[%s279 + $0x240] sm:$0xff] %v424
                %v426 = vld [vmem:[%s278 + $0x908] sm:$0xff]
                %427 = vst [vmem:[%s279 + $0x248] sm:$0xff] %v426
                %v428 = vld [vmem:[%s278 + $0x940] sm:$0xff]
                %429 = vst [vmem:[%s279 + $0x250] sm:$0xff] %v428
                %v430 = vld [vmem:[%s278 + $0x948] sm:$0xff]
                %431 = vst [vmem:[%s279 + $0x258] sm:$0xff] %v430
                %v432 = vld [vmem:[%s278 + $0x980] sm:$0xff]
                %433 = vst [vmem:[%s279 + $0x260] sm:$0xff] %v432
                %v434 = vld [vmem:[%s278 + $0x988] sm:$0xff]
                %435 = vst [vmem:[%s279 + $0x268] sm:$0xff] %v434
                %v436 = vld [vmem:[%s278 + $0x9c0] sm:$0xff]
                %437 = vst [vmem:[%s279 + $0x270] sm:$0xff] %v436
                %v438 = vld [vmem:[%s278 + $0x9c8] sm:$0xff]
                %439 = vst [vmem:[%s279 + $0x278] sm:$0xff] %v438
                %v440 = vld [vmem:[%s278 + $0xa00] sm:$0xff]
                %441 = vst [vmem:[%s279 + $0x280] sm:$0xff] %v440
                %v442 = vld [vmem:[%s278 + $0xa08] sm:$0xff]
                %443 = vst [vmem:[%s279 + $0x288] sm:$0xff] %v442
                %v444 = vld [vmem:[%s278 + $0xa40] sm:$0xff]
                %445 = vst [vmem:[%s279 + $0x290] sm:$0xff] %v444
                %v446 = vld [vmem:[%s278 + $0xa48] sm:$0xff]
                %447 = vst [vmem:[%s279 + $0x298] sm:$0xff] %v446
                %v448 = vld [vmem:[%s278 + $0xa80] sm:$0xff]
                %449 = vst [vmem:[%s279 + $0x2a0] sm:$0xff] %v448
                %v450 = vld [vmem:[%s278 + $0xa88] sm:$0xff]
                %451 = vst [vmem:[%s279 + $0x2a8] sm:$0xff] %v450
                %v452 = vld [vmem:[%s278 + $0xac0] sm:$0xff]
                %453 = vst [vmem:[%s279 + $0x2b0] sm:$0xff] %v452
                %v454 = vld [vmem:[%s278 + $0xac8] sm:$0xff]
                %455 = vst [vmem:[%s279 + $0x2b8] sm:$0xff] %v454
                %v456 = vld [vmem:[%s278 + $0xb00] sm:$0xff]
                %457 = vst [vmem:[%s279 + $0x2c0] sm:$0xff] %v456
                %v458 = vld [vmem:[%s278 + $0xb08] sm:$0xff]
                %459 = vst [vmem:[%s279 + $0x2c8] sm:$0xff] %v458
                %v460 = vld [vmem:[%s278 + $0xb40] sm:$0xff]
                %461 = vst [vmem:[%s279 + $0x2d0] sm:$0xff] %v460
                %v462 = vld [vmem:[%s278 + $0xb48] sm:$0xff]
                %463 = vst [vmem:[%s279 + $0x2d8] sm:$0xff] %v462
                %v464 = vld [vmem:[%s278 + $0xb80] sm:$0xff]
                %465 = vst [vmem:[%s279 + $0x2e0] sm:$0xff] %v464
                %v466 = vld [vmem:[%s278 + $0xb88] sm:$0xff]
                %467 = vst [vmem:[%s279 + $0x2e8] sm:$0xff] %v466
                %v468 = vld [vmem:[%s278 + $0xbc0] sm:$0xff]
                %469 = vst [vmem:[%s279 + $0x2f0] sm:$0xff] %v468
                %v470 = vld [vmem:[%s278 + $0xbc8] sm:$0xff]
                %471 = vst [vmem:[%s279 + $0x2f8] sm:$0xff] %v470
                %v472 = vld [vmem:[%s278 + $0xc00] sm:$0xff]
                %473 = vst [vmem:[%s279 + $0x300] sm:$0xff] %v472
                %v474 = vld [vmem:[%s278 + $0xc08] sm:$0xff]
                %475 = vst [vmem:[%s279 + $0x308] sm:$0xff] %v474
                %v476 = vld [vmem:[%s278 + $0xc40] sm:$0xff]
                %477 = vst [vmem:[%s279 + $0x310] sm:$0xff] %v476
                %v478 = vld [vmem:[%s278 + $0xc48] sm:$0xff]
                %479 = vst [vmem:[%s279 + $0x318] sm:$0xff] %v478
                %v480 = vld [vmem:[%s278 + $0xc80] sm:$0xff]
                %481 = vst [vmem:[%s279 + $0x320] sm:$0xff] %v480
                %v482 = vld [vmem:[%s278 + $0xc88] sm:$0xff]
                %483 = vst [vmem:[%s279 + $0x328] sm:$0xff] %v482
                %v484 = vld [vmem:[%s278 + $0xcc0] sm:$0xff]
                %485 = vst [vmem:[%s279 + $0x330] sm:$0xff] %v484
                %v486 = vld [vmem:[%s278 + $0xcc8] sm:$0xff]
                %487 = vst [vmem:[%s279 + $0x338] sm:$0xff] %v486
                %v488 = vld [vmem:[%s278 + $0xd00] sm:$0xff]
                %489 = vst [vmem:[%s279 + $0x340] sm:$0xff] %v488
                %v490 = vld [vmem:[%s278 + $0xd08] sm:$0xff]
                %491 = vst [vmem:[%s279 + $0x348] sm:$0xff] %v490
                %v492 = vld [vmem:[%s278 + $0xd40] sm:$0xff]
                %493 = vst [vmem:[%s279 + $0x350] sm:$0xff] %v492
                %v494 = vld [vmem:[%s278 + $0xd48] sm:$0xff]
                %495 = vst [vmem:[%s279 + $0x358] sm:$0xff] %v494
                %v496 = vld [vmem:[%s278 + $0xd80] sm:$0xff]
                %497 = vst [vmem:[%s279 + $0x360] sm:$0xff] %v496
                %v498 = vld [vmem:[%s278 + $0xd88] sm:$0xff]
                %499 = vst [vmem:[%s279 + $0x368] sm:$0xff] %v498
                %v500 = vld [vmem:[%s278 + $0xdc0] sm:$0xff]
                %501 = vst [vmem:[%s279 + $0x370] sm:$0xff] %v500
                %v502 = vld [vmem:[%s278 + $0xdc8] sm:$0xff]
                %503 = vst [vmem:[%s279 + $0x378] sm:$0xff] %v502
                %v504 = vld [vmem:[%s278 + $0xe00] sm:$0xff]
                %505 = vst [vmem:[%s279 + $0x380] sm:$0xff] %v504
                %v506 = vld [vmem:[%s278 + $0xe08] sm:$0xff]
                %507 = vst [vmem:[%s279 + $0x388] sm:$0xff] %v506
                %v508 = vld [vmem:[%s278 + $0xe40] sm:$0xff]
                %509 = vst [vmem:[%s279 + $0x390] sm:$0xff] %v508
                %v510 = vld [vmem:[%s278 + $0xe48] sm:$0xff]
                %511 = vst [vmem:[%s279 + $0x398] sm:$0xff] %v510
                %v512 = vld [vmem:[%s278 + $0xe80] sm:$0xff]
                %513 = vst [vmem:[%s279 + $0x3a0] sm:$0xff] %v512
                %v514 = vld [vmem:[%s278 + $0xe88] sm:$0xff]
                %515 = vst [vmem:[%s279 + $0x3a8] sm:$0xff] %v514
                %v516 = vld [vmem:[%s278 + $0xec0] sm:$0xff]
                %517 = vst [vmem:[%s279 + $0x3b0] sm:$0xff] %v516
                %v518 = vld [vmem:[%s278 + $0xec8] sm:$0xff]
                %519 = vst [vmem:[%s279 + $0x3b8] sm:$0xff] %v518
                %v520 = vld [vmem:[%s278 + $0xf00] sm:$0xff]
                %521 = vst [vmem:[%s279 + $0x3c0] sm:$0xff] %v520
                %v522 = vld [vmem:[%s278 + $0xf08] sm:$0xff]
                %523 = vst [vmem:[%s279 + $0x3c8] sm:$0xff] %v522
                %v524 = vld [vmem:[%s278 + $0xf40] sm:$0xff]
                %525 = vst [vmem:[%s279 + $0x3d0] sm:$0xff] %v524
                %v526 = vld [vmem:[%s278 + $0xf48] sm:$0xff]
                %527 = vst [vmem:[%s279 + $0x3d8] sm:$0xff] %v526
                %v528 = vld [vmem:[%s278 + $0xf80] sm:$0xff]
                %529 = vst [vmem:[%s279 + $0x3e0] sm:$0xff] %v528
                %v530 = vld [vmem:[%s278 + $0xf88] sm:$0xff]
                %531 = vst [vmem:[%s279 + $0x3e8] sm:$0xff] %v530
                %v532 = vld [vmem:[%s278 + $0xfc0] sm:$0xff]
                %533 = vst [vmem:[%s279 + $0x3f0] sm:$0xff] %v532
                %v534 = vld [vmem:[%s278 + $0xfc8] sm:$0xff]
                %535 = vst [vmem:[%s279 + $0x3f8] sm:$0xff] %v534
              $region49: #{curiosity_forward.5} parent=43 // loop_footer
                %s277 = sadd.s32 1, %s273
              $region50: #{curiosity_forward.5} parent=43 // loop_footer_branch
                %272 = sbr.rel target = $region46
              $region51: #{curiosity_forward.5} parent=43 // loop_exit
                _
            $region44: #{curiosity_forward.5} parent=39 // pred_fallthru
              _
            // Predicated region
            $region52: #{curiosity_forward.5} parent=39 // pred_check
              _
            $region53: #{curiosity_forward.5} parent=39 // pred_check_branch
              %537 = sbr.rel target = $region55
            $region54: #{curiosity_forward.5} parent=39 // pred_region
              _
            $region55: #{curiosity_forward.5} parent=39 // pred_fallthru
              _
          $region40: #{curiosity_forward.5} parent=35 // pred_fallthru
            _
          %538 = vnop
        $region36: #{curiosity_forward.5} parent=31 // pred_fallthru
          _
        // Predicated region
        $region56: #{curiosity_forward.5} parent=31 // pred_check
          %p539 = pneg %p106
        $region57: #{curiosity_forward.5} parent=31 // pred_check_branch
          %541 = sbr.rel (%p539) target = $region59
        $region58: #{curiosity_forward.5} parent=31 // pred_region
          %s542 = smul.u32 4, %s18
          %p543 = scmp.lt.s32.totalorder %s542, 15
          %s544 = scalar_select %p543, %s542, 15
          %s545 = smul.addr %s544, 4
          %s546 = scalar_lea.vmem %s3, %s545
          %s547 = smul.u32 4, %s18
        $region59: #{curiosity_forward.5} parent=31 // pred_fallthru
          _
        // Predicated region
        $region60: #{curiosity_forward.5} parent=31 // pred_check
          %p548 = pneg %p132
        $region61: #{curiosity_forward.5} parent=31 // pred_check_branch
          %550 = sbr.rel (%p548) target = $region63
        $region62: #{curiosity_forward.5} parent=31 // pred_region
          %s551 = smul.u32 4, %s18
          %p552 = scmp.lt.s32.totalorder %s551, 15
          %s553 = scalar_select %p552, %s551, 15
          %s554 = scalar_lea.vmem %s4, %s553
          %s555 = smul.u32 4, %s18
        $region63: #{curiosity_forward.5} parent=31 // pred_fallthru
          _
        // Predicated region
        $region64: #{curiosity_forward.5} parent=31 // pred_check
          %p556 = pneg %p158
        $region65: #{curiosity_forward.5} parent=31 // pred_check_branch
          %558 = sbr.rel (%p556) target = $region67
        $region66: #{curiosity_forward.5} parent=31 // pred_region
          %s559 = sand.u32 %s148, 1
          %s560 = scalar_lea.sflag [#allocation5], %s559
          %s561 = sand.u32 %s148, 1
          %s562 = smul.addr %s561, 1024
          %s563 = scalar_lea.vmem [#allocation4], %s562
          %s564 = smul.u32 64, %s18
          %566 = vsyncadd %s560, 0
          %s567 = smul.addr %s564, 4
          %s568 = smul.addr %s567, 4
          %s569 = scalar_lea.hbm %s5, %s568
          %s570 = sshll.u32 %s569, 4
          %s571 = int_to_ptr.hbm [resolvable:$true] %s570
          %s572 = sshll.u32 %s563, 4
          %s573 = int_to_ptr.vmem [resolvable:$true] %s572
          %578 = dma.hbm_to_vmem [thread:$0]  %s571, 16384, %s573, %s560, 256, 256, 16
        $region67: #{curiosity_forward.5} parent=31 // pred_fallthru
          _
      $region32: #{curiosity_forward.5} parent=5 // pred_fallthru
        _
      %p579 = scmp.le.s32.totalorder 1, %s18
      %p580 = scmp.lt.s32.totalorder %s18, 5
      %p581 = pnand %p579, %p580
      %p582 = pneg %p581
      // Predicated region
      $region68: #{curiosity_forward.5} parent=5 // pred_check
        _
      $region69: #{curiosity_forward.5} parent=5 // pred_check_branch
        %584 = sbr.rel (%p581) target = $region71
      $region70: #{curiosity_forward.5} parent=5 // pred_region
        %s585 = ssub.s32 %s18, 1
        %s586 = sand.u32 %s73, 1
        %s587 = sand.u32 %s73, 1
        %s588 = smul.addr %s587, 1024
        %s589 = scalar_lea.vmem [#allocation3], %s588
        // Predicated region
        $region72: #{curiosity_forward.5} parent=70 // pred_check
          %p590 = pneg %p86
        $region73: #{curiosity_forward.5} parent=70 // pred_check_branch
          %592 = sbr.rel (%p590) target = $region75
        $region74: #{curiosity_forward.5} parent=70 // pred_region
          _
        $region75: #{curiosity_forward.5} parent=70 // pred_fallthru
          _
        %s593 = sand.u32 %s151, 1
        %s594 = scalar_lea.sflag [#allocation5], %s593
        %s595 = sand.u32 %s151, 1
        %s596 = smul.addr %s595, 1024
        %s597 = scalar_lea.vmem [#allocation4], %s596
        // Predicated region
        $region76: #{curiosity_forward.5} parent=70 // pred_check
          %p598 = pneg %p164
        $region77: #{curiosity_forward.5} parent=70 // pred_check_branch
          %600 = sbr.rel (%p598) target = $region79
        $region78: #{curiosity_forward.5} parent=70 // pred_region
          %602 = dma.done %s594, 16384
        $region79: #{curiosity_forward.5} parent=70 // pred_fallthru
          _
        %p603 = pneg %p39
        %p604 = pneg %p36
        %p605 = pneg %p60
        %p606 = pneg %p57
        %s607 = sand.u32 %s73, 1
        %s608 = sand.u32 %s73, 1
        %s609 = smul.addr %s608, 1024
        %s610 = scalar_lea.vmem [#allocation3], %s609
        %p611 = pneg %p86
        %p612 = pneg %p83
        %s613 = smul.u32 4, %s23
        %p614 = scmp.lt.s32.totalorder %s613, 15
        %s615 = scalar_select %p614, %s613, 15
        %s616 = smul.addr %s615, 4
        %s617 = scalar_lea.vmem %s3, %s616
        %p618 = pneg %p112
        %p619 = pneg %p109
        %s620 = smul.u32 4, %s23
        %p621 = scmp.lt.s32.totalorder %s620, 15
        %s622 = scalar_select %p621, %s620, 15
        %s623 = scalar_lea.vmem %s4, %s622
        %p624 = pneg %p138
        %p625 = pneg %p135
        %s626 = sand.u32 %s151, 1
        %s627 = scalar_lea.sflag [#allocation5], %s626
        %s628 = sand.u32 %s151, 1
        %s629 = smul.addr %s628, 1024
        %s630 = scalar_lea.vmem [#allocation4], %s629
        %p631 = pneg %p164
        %p632 = pneg %p161
        %p633 = pneg %p185
        %p634 = pneg %p182
        %p635 = pneg %p206
        %p636 = pneg %p203
        %p637 = pneg %p227
        %p638 = pneg %p224
        %s639 = smul.u32 4, %s23
        %s640 = smul.u32 4, %s23
        %p641 = scmp.lt.s32.totalorder %s640, 15
        %s642 = scalar_select %p641, %s640, 15
        %s643 = smul.addr %s642, 4
        %s644 = scalar_lea.vmem %s3, %s643
        %s645 = smul.u32 4, %s23
        %s646 = smul.u32 4, %s23
        %p647 = scmp.lt.s32.totalorder %s646, 15
        %s648 = scalar_select %p647, %s646, 15
        %s649 = scalar_lea.vmem %s4, %s648
        %s650 = smul.u32 4, %s23
        %s651 = smul.u32 64, %s23
        %p653 = scmp.eq.s32.totalorder %s23, 0
        // Predicated region
        $region80: #{curiosity_forward.5} parent=70 // pred_check
          %p654 = pneg %p653
        $region81: #{curiosity_forward.5} parent=70 // pred_check_branch
          %656 = sbr.rel (%p654) target = $region83
        $region82: #{curiosity_forward.5} parent=70 // pred_region
          %657 = vst [vmem:[#allocation2] sm:$0xff] 0.0
        $region83: #{curiosity_forward.5} parent=70 // pred_fallthru
          _
        %v658 = vld [vmem:[%s0] sm:$0xf]
        %v659 = vld [vmem:[%s589] sm:$0xff]
        %v660 = vld [vmem:[%s589 + $0x8] sm:$0xff]
        %v661 = vld [vmem:[%s589 + $0x10] sm:$0xff]
        %v662 = vld [vmem:[%s589 + $0x18] sm:$0xff]
        %v663 = vld [vmem:[%s589 + $0x20] sm:$0xff]
        %v664 = vld [vmem:[%s589 + $0x28] sm:$0xff]
        %v665 = vld [vmem:[%s589 + $0x30] sm:$0xff]
        %v666 = vld [vmem:[%s589 + $0x38] sm:$0xff]
        %v667 = vld [vmem:[%s589 + $0x40] sm:$0xff]
        %v668 = vld [vmem:[%s589 + $0x48] sm:$0xff]
        %v669 = vld [vmem:[%s589 + $0x50] sm:$0xff]
        %v670 = vld [vmem:[%s589 + $0x58] sm:$0xff]
        %v671 = vld [vmem:[%s589 + $0x60] sm:$0xff]
        %v672 = vld [vmem:[%s589 + $0x68] sm:$0xff]
        %v673 = vld [vmem:[%s589 + $0x70] sm:$0xff]
        %v674 = vld [vmem:[%s589 + $0x78] sm:$0xff]
        %v675 = vld [vmem:[%s589 + $0x80] sm:$0xff]
        %v676 = vld [vmem:[%s589 + $0x88] sm:$0xff]
        %v677 = vld [vmem:[%s589 + $0x90] sm:$0xff]
        %v678 = vld [vmem:[%s589 + $0x98] sm:$0xff]
        %v679 = vld [vmem:[%s589 + $0xa0] sm:$0xff]
        %v680 = vld [vmem:[%s589 + $0xa8] sm:$0xff]
        %v681 = vld [vmem:[%s589 + $0xb0] sm:$0xff]
        %v682 = vld [vmem:[%s589 + $0xb8] sm:$0xff]
        %v683 = vld [vmem:[%s589 + $0xc0] sm:$0xff]
        %v684 = vld [vmem:[%s589 + $0xc8] sm:$0xff]
        %v685 = vld [vmem:[%s589 + $0xd0] sm:$0xff]
        %v686 = vld [vmem:[%s589 + $0xd8] sm:$0xff]
        %v687 = vld [vmem:[%s589 + $0xe0] sm:$0xff]
        %v688 = vld [vmem:[%s589 + $0xe8] sm:$0xff]
        %v689 = vld [vmem:[%s589 + $0xf0] sm:$0xff]
        %v690 = vld [vmem:[%s589 + $0xf8] sm:$0xff]
        %v691 = vld [vmem:[%s589 + $0x100] sm:$0xff]
        %v692 = vld [vmem:[%s589 + $0x108] sm:$0xff]
        %v693 = vld [vmem:[%s589 + $0x110] sm:$0xff]
        %v694 = vld [vmem:[%s589 + $0x118] sm:$0xff]
        %v695 = vld [vmem:[%s589 + $0x120] sm:$0xff]
        %v696 = vld [vmem:[%s589 + $0x128] sm:$0xff]
        %v697 = vld [vmem:[%s589 + $0x130] sm:$0xff]
        %v698 = vld [vmem:[%s589 + $0x138] sm:$0xff]
        %v699 = vld [vmem:[%s589 + $0x140] sm:$0xff]
        %v700 = vld [vmem:[%s589 + $0x148] sm:$0xff]
        %v701 = vld [vmem:[%s589 + $0x150] sm:$0xff]
        %v702 = vld [vmem:[%s589 + $0x158] sm:$0xff]
        %v703 = vld [vmem:[%s589 + $0x160] sm:$0xff]
        %v704 = vld [vmem:[%s589 + $0x168] sm:$0xff]
        %v705 = vld [vmem:[%s589 + $0x170] sm:$0xff]
        %v706 = vld [vmem:[%s589 + $0x178] sm:$0xff]
        %v707 = vld [vmem:[%s589 + $0x180] sm:$0xff]
        %v708 = vld [vmem:[%s589 + $0x188] sm:$0xff]
        %v709 = vld [vmem:[%s589 + $0x190] sm:$0xff]
        %v710 = vld [vmem:[%s589 + $0x198] sm:$0xff]
        %v711 = vld [vmem:[%s589 + $0x1a0] sm:$0xff]
        %v712 = vld [vmem:[%s589 + $0x1a8] sm:$0xff]
        %v713 = vld [vmem:[%s589 + $0x1b0] sm:$0xff]
        %v714 = vld [vmem:[%s589 + $0x1b8] sm:$0xff]
        %v715 = vld [vmem:[%s589 + $0x1c0] sm:$0xff]
        %v716 = vld [vmem:[%s589 + $0x1c8] sm:$0xff]
        %v717 = vld [vmem:[%s589 + $0x1d0] sm:$0xff]
        %v718 = vld [vmem:[%s589 + $0x1d8] sm:$0xff]
        %v719 = vld [vmem:[%s589 + $0x1e0] sm:$0xff]
        %v720 = vld [vmem:[%s589 + $0x1e8] sm:$0xff]
        %v721 = vld [vmem:[%s589 + $0x1f0] sm:$0xff]
        %v722 = vld [vmem:[%s589 + $0x1f8] sm:$0xff]
        %v723 = vld [vmem:[%s589 + $0x200] sm:$0xff]
        %v724 = vld [vmem:[%s589 + $0x208] sm:$0xff]
        %v725 = vld [vmem:[%s589 + $0x210] sm:$0xff]
        %v726 = vld [vmem:[%s589 + $0x218] sm:$0xff]
        %v727 = vld [vmem:[%s589 + $0x220] sm:$0xff]
        %v728 = vld [vmem:[%s589 + $0x228] sm:$0xff]
        %v729 = vld [vmem:[%s589 + $0x230] sm:$0xff]
        %v730 = vld [vmem:[%s589 + $0x238] sm:$0xff]
        %v731 = vld [vmem:[%s589 + $0x240] sm:$0xff]
        %v732 = vld [vmem:[%s589 + $0x248] sm:$0xff]
        %v733 = vld [vmem:[%s589 + $0x250] sm:$0xff]
        %v734 = vld [vmem:[%s589 + $0x258] sm:$0xff]
        %v735 = vld [vmem:[%s589 + $0x260] sm:$0xff]
        %v736 = vld [vmem:[%s589 + $0x268] sm:$0xff]
        %v737 = vld [vmem:[%s589 + $0x270] sm:$0xff]
        %v738 = vld [vmem:[%s589 + $0x278] sm:$0xff]
        %v739 = vld [vmem:[%s589 + $0x280] sm:$0xff]
        %v740 = vld [vmem:[%s589 + $0x288] sm:$0xff]
        %v741 = vld [vmem:[%s589 + $0x290] sm:$0xff]
        %v742 = vld [vmem:[%s589 + $0x298] sm:$0xff]
        %v743 = vld [vmem:[%s589 + $0x2a0] sm:$0xff]
        %v744 = vld [vmem:[%s589 + $0x2a8] sm:$0xff]
        %v745 = vld [vmem:[%s589 + $0x2b0] sm:$0xff]
        %v746 = vld [vmem:[%s589 + $0x2b8] sm:$0xff]
        %v747 = vld [vmem:[%s589 + $0x2c0] sm:$0xff]
        %v748 = vld [vmem:[%s589 + $0x2c8] sm:$0xff]
        %v749 = vld [vmem:[%s589 + $0x2d0] sm:$0xff]
        %v750 = vld [vmem:[%s589 + $0x2d8] sm:$0xff]
        %v751 = vld [vmem:[%s589 + $0x2e0] sm:$0xff]
        %v752 = vld [vmem:[%s589 + $0x2e8] sm:$0xff]
        %v753 = vld [vmem:[%s589 + $0x2f0] sm:$0xff]
        %v754 = vld [vmem:[%s589 + $0x2f8] sm:$0xff]
        %v755 = vld [vmem:[%s589 + $0x300] sm:$0xff]
        %v756 = vld [vmem:[%s589 + $0x308] sm:$0xff]
        %v757 = vld [vmem:[%s589 + $0x310] sm:$0xff]
        %v758 = vld [vmem:[%s589 + $0x318] sm:$0xff]
        %v759 = vld [vmem:[%s589 + $0x320] sm:$0xff]
        %v760 = vld [vmem:[%s589 + $0x328] sm:$0xff]
        %v761 = vld [vmem:[%s589 + $0x330] sm:$0xff]
        %v762 = vld [vmem:[%s589 + $0x338] sm:$0xff]
        %v763 = vld [vmem:[%s589 + $0x340] sm:$0xff]
        %v764 = vld [vmem:[%s589 + $0x348] sm:$0xff]
        %v765 = vld [vmem:[%s589 + $0x350] sm:$0xff]
        %v766 = vld [vmem:[%s589 + $0x358] sm:$0xff]
        %v767 = vld [vmem:[%s589 + $0x360] sm:$0xff]
        %v768 = vld [vmem:[%s589 + $0x368] sm:$0xff]
        %v769 = vld [vmem:[%s589 + $0x370] sm:$0xff]
        %v770 = vld [vmem:[%s589 + $0x378] sm:$0xff]
        %v771 = vld [vmem:[%s589 + $0x380] sm:$0xff]
        %v772 = vld [vmem:[%s589 + $0x388] sm:$0xff]
        %v773 = vld [vmem:[%s589 + $0x390] sm:$0xff]
        %v774 = vld [vmem:[%s589 + $0x398] sm:$0xff]
        %v775 = vld [vmem:[%s589 + $0x3a0] sm:$0xff]
        %v776 = vld [vmem:[%s589 + $0x3a8] sm:$0xff]
        %v777 = vld [vmem:[%s589 + $0x3b0] sm:$0xff]
        %v778 = vld [vmem:[%s589 + $0x3b8] sm:$0xff]
        %v779 = vld [vmem:[%s589 + $0x3c0] sm:$0xff]
        %v780 = vld [vmem:[%s589 + $0x3c8] sm:$0xff]
        %v781 = vld [vmem:[%s589 + $0x3d0] sm:$0xff]
        %v782 = vld [vmem:[%s589 + $0x3d8] sm:$0xff]
        %v783 = vld [vmem:[%s589 + $0x3e0] sm:$0xff]
        %v784 = vld [vmem:[%s589 + $0x3e8] sm:$0xff]
        %v785 = vld [vmem:[%s589 + $0x3f0] sm:$0xff]
        %v786 = vld [vmem:[%s589 + $0x3f8] sm:$0xff]
        %v787 = vld [vmem:[%s1] sm:$0x1]
        %v788 = vld [vmem:[%s644] sm:$0xff]
        %v789 = vld [vmem:[%s644 + $0x8] sm:$0xff]
        %v792 = vunpack.c.l.b16 %v788
        %v793 = vunpack.c.h.b16 %v788
        %v794 = vunpack.c.l.b16 %v789
        %v795 = vunpack.c.h.b16 %v789
        %v796 = vpack.c.b16 %v792, %v792
        %v797 = vpack.c.b16 %v793, %v793
        %v798 = vpack.c.b16 %v794, %v794
        %v799 = vpack.c.b16 %v795, %v795
        %vm800 = vcmask 64512
        %v802 = vsel %vm800, %v787, 0
        %vm804 = vcmask 1043456
        %v806 = vsel %vm804, %v796, 0
        %v809 = vsel %vm804, %v797, 0
        %v812 = vsel %vm804, %v798, 0
        %v815 = vsel %vm804, %v799, 0
        %817 = vmatpush.bf16.msra.mxu0 0
        %818 = vmatpush.bf16.msra.mxu0 0
        %819 = vmatpush.bf16.msra.mxu0 0
        %820 = vmatpush.bf16.msra.mxu0 0
        %821 = vmatpush.bf16.msra.mxu0 0
        %822 = vmatpush.bf16.msra.mxu0 0
        %823 = vmatpush.bf16.msra.mxu0 0
        %824 = vmatpush.bf16.msra.mxu0 %v806
        %825 = vmatmul.bf16.gmra.mxu0 %v802
        %v826 = vpop.f32.mrf.mxu0
        %v827 = vadd.f32 0.0, %v826
        %v828 = vpop.f32.mrf.mxu0
        %829 = vdwg.mxu0
        %830 = vmatpush.bf16.msra.mxu0 0
        %831 = vmatpush.bf16.msra.mxu0 0
        %832 = vmatpush.bf16.msra.mxu0 0
        %833 = vmatpush.bf16.msra.mxu0 0
        %834 = vmatpush.bf16.msra.mxu0 0
        %835 = vmatpush.bf16.msra.mxu0 0
        %836 = vmatpush.bf16.msra.mxu0 0
        %837 = vmatpush.bf16.msra.mxu0 %v809
        %838 = vmatmul.bf16.gmra.mxu0 %v802
        %v839 = vpop.f32.mrf.mxu0
        %v840 = vadd.f32 0.0, %v839
        %v841 = vpop.f32.mrf.mxu0
        %842 = vdwg.mxu0
        %843 = vmatpush.bf16.msra.mxu0 0
        %844 = vmatpush.bf16.msra.mxu0 0
        %845 = vmatpush.bf16.msra.mxu0 0
        %846 = vmatpush.bf16.msra.mxu0 0
        %847 = vmatpush.bf16.msra.mxu0 0
        %848 = vmatpush.bf16.msra.mxu0 0
        %849 = vmatpush.bf16.msra.mxu0 0
        %850 = vmatpush.bf16.msra.mxu0 %v812
        %851 = vmatmul.bf16.gmra.mxu0 %v802
        %v852 = vpop.f32.mrf.mxu0
        %v853 = vadd.f32 0.0, %v852
        %v854 = vpop.f32.mrf.mxu0
        %855 = vdwg.mxu0
        %856 = vmatpush.bf16.msra.mxu0 0
        %857 = vmatpush.bf16.msra.mxu0 0
        %858 = vmatpush.bf16.msra.mxu0 0
        %859 = vmatpush.bf16.msra.mxu0 0
        %860 = vmatpush.bf16.msra.mxu0 0
        %861 = vmatpush.bf16.msra.mxu0 0
        %862 = vmatpush.bf16.msra.mxu0 0
        %863 = vmatpush.bf16.msra.mxu0 %v815
        %864 = vmatmul.bf16.gmra.mxu0 %v802
        %v865 = vpop.f32.mrf.mxu0
        %v866 = vadd.f32 0.0, %v865
        %v867 = vpop.f32.mrf.mxu0
        %868 = vdwg.mxu0
        %870 = vst [vmem:[#allocation1] ss:$9 sm:$0xff] %v658
        %v871 = vld [vmem:[#allocation1] sm:$0xff]
        %v872 = vld [vmem:[#allocation1 + $0x9] sm:$0xff]
        %v873 = vld [vmem:[#allocation1 + $0x12] sm:$0xff]
        %v874 = vld [vmem:[#allocation1 + $0x1b] sm:$0xff]
        %v1007 = vunpack.c.l.b16 %v659
        %v1008 = vunpack.c.h.b16 %v659
        %v1009 = vunpack.c.l.b16 %v660
        %v1010 = vunpack.c.h.b16 %v660
        %v1011 = vunpack.c.l.b16 %v661
        %v1012 = vunpack.c.h.b16 %v661
        %v1013 = vunpack.c.l.b16 %v662
        %v1014 = vunpack.c.h.b16 %v662
        %v1015 = vunpack.c.l.b16 %v663
        %v1016 = vunpack.c.h.b16 %v663
        %v1017 = vunpack.c.l.b16 %v664
        %v1018 = vunpack.c.h.b16 %v664
        %v1019 = vunpack.c.l.b16 %v665
        %v1020 = vunpack.c.h.b16 %v665
        %v1021 = vunpack.c.l.b16 %v666
        %v1022 = vunpack.c.h.b16 %v666
        %v1023 = vunpack.c.l.b16 %v667
        %v1024 = vunpack.c.h.b16 %v667
        %v1025 = vunpack.c.l.b16 %v668
        %v1026 = vunpack.c.h.b16 %v668
        %v1027 = vunpack.c.l.b16 %v669
        %v1028 = vunpack.c.h.b16 %v669
        %v1029 = vunpack.c.l.b16 %v670
        %v1030 = vunpack.c.h.b16 %v670
        %v1031 = vunpack.c.l.b16 %v671
        %v1032 = vunpack.c.h.b16 %v671
        %v1033 = vunpack.c.l.b16 %v672
        %v1034 = vunpack.c.h.b16 %v672
        %v1035 = vunpack.c.l.b16 %v673
        %v1036 = vunpack.c.h.b16 %v673
        %v1037 = vunpack.c.l.b16 %v674
        %v1038 = vunpack.c.h.b16 %v674
        %v1039 = vunpack.c.l.b16 %v675
        %v1040 = vunpack.c.h.b16 %v675
        %v1041 = vunpack.c.l.b16 %v676
        %v1042 = vunpack.c.h.b16 %v676
        %v1043 = vunpack.c.l.b16 %v677
        %v1044 = vunpack.c.h.b16 %v677
        %v1045 = vunpack.c.l.b16 %v678
        %v1046 = vunpack.c.h.b16 %v678
        %v1047 = vunpack.c.l.b16 %v679
        %v1048 = vunpack.c.h.b16 %v679
        %v1049 = vunpack.c.l.b16 %v680
        %v1050 = vunpack.c.h.b16 %v680
        %v1051 = vunpack.c.l.b16 %v681
        %v1052 = vunpack.c.h.b16 %v681
        %v1053 = vunpack.c.l.b16 %v682
        %v1054 = vunpack.c.h.b16 %v682
        %v1055 = vunpack.c.l.b16 %v683
        %v1056 = vunpack.c.h.b16 %v683
        %v1057 = vunpack.c.l.b16 %v684
        %v1058 = vunpack.c.h.b16 %v684
        %v1059 = vunpack.c.l.b16 %v685
        %v1060 = vunpack.c.h.b16 %v685
        %v1061 = vunpack.c.l.b16 %v686
        %v1062 = vunpack.c.h.b16 %v686
        %v1063 = vunpack.c.l.b16 %v687
        %v1064 = vunpack.c.h.b16 %v687
        %v1065 = vunpack.c.l.b16 %v688
        %v1066 = vunpack.c.h.b16 %v688
        %v1067 = vunpack.c.l.b16 %v689
        %v1068 = vunpack.c.h.b16 %v689
        %v1069 = vunpack.c.l.b16 %v690
        %v1070 = vunpack.c.h.b16 %v690
        %v1071 = vunpack.c.l.b16 %v691
        %v1072 = vunpack.c.h.b16 %v691
        %v1073 = vunpack.c.l.b16 %v692
        %v1074 = vunpack.c.h.b16 %v692
        %v1075 = vunpack.c.l.b16 %v693
        %v1076 = vunpack.c.h.b16 %v693
        %v1077 = vunpack.c.l.b16 %v694
        %v1078 = vunpack.c.h.b16 %v694
        %v1079 = vunpack.c.l.b16 %v695
        %v1080 = vunpack.c.h.b16 %v695
        %v1081 = vunpack.c.l.b16 %v696
        %v1082 = vunpack.c.h.b16 %v696
        %v1083 = vunpack.c.l.b16 %v697
        %v1084 = vunpack.c.h.b16 %v697
        %v1085 = vunpack.c.l.b16 %v698
        %v1086 = vunpack.c.h.b16 %v698
        %v1087 = vunpack.c.l.b16 %v699
        %v1088 = vunpack.c.h.b16 %v699
        %v1089 = vunpack.c.l.b16 %v700
        %v1090 = vunpack.c.h.b16 %v700
        %v1091 = vunpack.c.l.b16 %v701
        %v1092 = vunpack.c.h.b16 %v701
        %v1093 = vunpack.c.l.b16 %v702
        %v1094 = vunpack.c.h.b16 %v702
        %v1095 = vunpack.c.l.b16 %v703
        %v1096 = vunpack.c.h.b16 %v703
        %v1097 = vunpack.c.l.b16 %v704
        %v1098 = vunpack.c.h.b16 %v704
        %v1099 = vunpack.c.l.b16 %v705
        %v1100 = vunpack.c.h.b16 %v705
        %v1101 = vunpack.c.l.b16 %v706
        %v1102 = vunpack.c.h.b16 %v706
        %v1103 = vunpack.c.l.b16 %v707
        %v1104 = vunpack.c.h.b16 %v707
        %v1105 = vunpack.c.l.b16 %v708
        %v1106 = vunpack.c.h.b16 %v708
        %v1107 = vunpack.c.l.b16 %v709
        %v1108 = vunpack.c.h.b16 %v709
        %v1109 = vunpack.c.l.b16 %v710
        %v1110 = vunpack.c.h.b16 %v710
        %v1111 = vunpack.c.l.b16 %v711
        %v1112 = vunpack.c.h.b16 %v711
        %v1113 = vunpack.c.l.b16 %v712
        %v1114 = vunpack.c.h.b16 %v712
        %v1115 = vunpack.c.l.b16 %v713
        %v1116 = vunpack.c.h.b16 %v713
        %v1117 = vunpack.c.l.b16 %v714
        %v1118 = vunpack.c.h.b16 %v714
        %v1119 = vunpack.c.l.b16 %v715
        %v1120 = vunpack.c.h.b16 %v715
        %v1121 = vunpack.c.l.b16 %v716
        %v1122 = vunpack.c.h.b16 %v716
        %v1123 = vunpack.c.l.b16 %v717
        %v1124 = vunpack.c.h.b16 %v717
        %v1125 = vunpack.c.l.b16 %v718
        %v1126 = vunpack.c.h.b16 %v718
        %v1127 = vunpack.c.l.b16 %v719
        %v1128 = vunpack.c.h.b16 %v719
        %v1129 = vunpack.c.l.b16 %v720
        %v1130 = vunpack.c.h.b16 %v720
        %v1131 = vunpack.c.l.b16 %v721
        %v1132 = vunpack.c.h.b16 %v721
        %v1133 = vunpack.c.l.b16 %v722
        %v1134 = vunpack.c.h.b16 %v722
        %v1135 = vunpack.c.l.b16 %v723
        %v1136 = vunpack.c.h.b16 %v723
        %v1137 = vunpack.c.l.b16 %v724
        %v1138 = vunpack.c.h.b16 %v724
        %v1139 = vunpack.c.l.b16 %v725
        %v1140 = vunpack.c.h.b16 %v725
        %v1141 = vunpack.c.l.b16 %v726
        %v1142 = vunpack.c.h.b16 %v726
        %v1143 = vunpack.c.l.b16 %v727
        %v1144 = vunpack.c.h.b16 %v727
        %v1145 = vunpack.c.l.b16 %v728
        %v1146 = vunpack.c.h.b16 %v728
        %v1147 = vunpack.c.l.b16 %v729
        %v1148 = vunpack.c.h.b16 %v729
        %v1149 = vunpack.c.l.b16 %v730
        %v1150 = vunpack.c.h.b16 %v730
        %v1151 = vunpack.c.l.b16 %v731
        %v1152 = vunpack.c.h.b16 %v731
        %v1153 = vunpack.c.l.b16 %v732
        %v1154 = vunpack.c.h.b16 %v732
        %v1155 = vunpack.c.l.b16 %v733
        %v1156 = vunpack.c.h.b16 %v733
        %v1157 = vunpack.c.l.b16 %v734
        %v1158 = vunpack.c.h.b16 %v734
        %v1159 = vunpack.c.l.b16 %v735
        %v1160 = vunpack.c.h.b16 %v735
        %v1161 = vunpack.c.l.b16 %v736
        %v1162 = vunpack.c.h.b16 %v736
        %v1163 = vunpack.c.l.b16 %v737
        %v1164 = vunpack.c.h.b16 %v737
        %v1165 = vunpack.c.l.b16 %v738
        %v1166 = vunpack.c.h.b16 %v738
        %v1167 = vunpack.c.l.b16 %v739
        %v1168 = vunpack.c.h.b16 %v739
        %v1169 = vunpack.c.l.b16 %v740
        %v1170 = vunpack.c.h.b16 %v740
        %v1171 = vunpack.c.l.b16 %v741
        %v1172 = vunpack.c.h.b16 %v741
        %v1173 = vunpack.c.l.b16 %v742
        %v1174 = vunpack.c.h.b16 %v742
        %v1175 = vunpack.c.l.b16 %v743
        %v1176 = vunpack.c.h.b16 %v743
        %v1177 = vunpack.c.l.b16 %v744
        %v1178 = vunpack.c.h.b16 %v744
        %v1179 = vunpack.c.l.b16 %v745
        %v1180 = vunpack.c.h.b16 %v745
        %v1181 = vunpack.c.l.b16 %v746
        %v1182 = vunpack.c.h.b16 %v746
        %v1183 = vunpack.c.l.b16 %v747
        %v1184 = vunpack.c.h.b16 %v747
        %v1185 = vunpack.c.l.b16 %v748
        %v1186 = vunpack.c.h.b16 %v748
        %v1187 = vunpack.c.l.b16 %v749
        %v1188 = vunpack.c.h.b16 %v749
        %v1189 = vunpack.c.l.b16 %v750
        %v1190 = vunpack.c.h.b16 %v750
        %v1191 = vunpack.c.l.b16 %v751
        %v1192 = vunpack.c.h.b16 %v751
        %v1193 = vunpack.c.l.b16 %v752
        %v1194 = vunpack.c.h.b16 %v752
        %v1195 = vunpack.c.l.b16 %v753
        %v1196 = vunpack.c.h.b16 %v753
        %v1197 = vunpack.c.l.b16 %v754
        %v1198 = vunpack.c.h.b16 %v754
        %v1199 = vunpack.c.l.b16 %v755
        %v1200 = vunpack.c.h.b16 %v755
        %v1201 = vunpack.c.l.b16 %v756
        %v1202 = vunpack.c.h.b16 %v756
        %v1203 = vunpack.c.l.b16 %v757
        %v1204 = vunpack.c.h.b16 %v757
        %v1205 = vunpack.c.l.b16 %v758
        %v1206 = vunpack.c.h.b16 %v758
        %v1207 = vunpack.c.l.b16 %v759
        %v1208 = vunpack.c.h.b16 %v759
        %v1209 = vunpack.c.l.b16 %v760
        %v1210 = vunpack.c.h.b16 %v760
        %v1211 = vunpack.c.l.b16 %v761
        %v1212 = vunpack.c.h.b16 %v761
        %v1213 = vunpack.c.l.b16 %v762
        %v1214 = vunpack.c.h.b16 %v762
        %v1215 = vunpack.c.l.b16 %v763
        %v1216 = vunpack.c.h.b16 %v763
        %v1217 = vunpack.c.l.b16 %v764
        %v1218 = vunpack.c.h.b16 %v764
        %v1219 = vunpack.c.l.b16 %v765
        %v1220 = vunpack.c.h.b16 %v765
        %v1221 = vunpack.c.l.b16 %v766
        %v1222 = vunpack.c.h.b16 %v766
        %v1223 = vunpack.c.l.b16 %v767
        %v1224 = vunpack.c.h.b16 %v767
        %v1225 = vunpack.c.l.b16 %v768
        %v1226 = vunpack.c.h.b16 %v768
        %v1227 = vunpack.c.l.b16 %v769
        %v1228 = vunpack.c.h.b16 %v769
        %v1229 = vunpack.c.l.b16 %v770
        %v1230 = vunpack.c.h.b16 %v770
        %v1231 = vunpack.c.l.b16 %v771
        %v1232 = vunpack.c.h.b16 %v771
        %v1233 = vunpack.c.l.b16 %v772
        %v1234 = vunpack.c.h.b16 %v772
        %v1235 = vunpack.c.l.b16 %v773
        %v1236 = vunpack.c.h.b16 %v773
        %v1237 = vunpack.c.l.b16 %v774
        %v1238 = vunpack.c.h.b16 %v774
        %v1239 = vunpack.c.l.b16 %v775
        %v1240 = vunpack.c.h.b16 %v775
        %v1241 = vunpack.c.l.b16 %v776
        %v1242 = vunpack.c.h.b16 %v776
        %v1243 = vunpack.c.l.b16 %v777
        %v1244 = vunpack.c.h.b16 %v777
        %v1245 = vunpack.c.l.b16 %v778
        %v1246 = vunpack.c.h.b16 %v778
        %v1247 = vunpack.c.l.b16 %v779
        %v1248 = vunpack.c.h.b16 %v779
        %v1249 = vunpack.c.l.b16 %v780
        %v1250 = vunpack.c.h.b16 %v780
        %v1251 = vunpack.c.l.b16 %v781
        %v1252 = vunpack.c.h.b16 %v781
        %v1253 = vunpack.c.l.b16 %v782
        %v1254 = vunpack.c.h.b16 %v782
        %v1255 = vunpack.c.l.b16 %v783
        %v1256 = vunpack.c.h.b16 %v783
        %v1257 = vunpack.c.l.b16 %v784
        %v1258 = vunpack.c.h.b16 %v784
        %v1259 = vunpack.c.l.b16 %v785
        %v1260 = vunpack.c.h.b16 %v785
        %v1261 = vunpack.c.l.b16 %v786
        %v1262 = vunpack.c.h.b16 %v786
        %v1263 = vpack.c.b16 %v1011, %v1007
        %v1264 = vpack.c.b16 %v1012, %v1008
        %v1265 = vpack.c.b16 %v1013, %v1009
        %v1266 = vpack.c.b16 %v1014, %v1010
        %v1267 = vpack.c.b16 %v1019, %v1015
        %v1268 = vpack.c.b16 %v1020, %v1016
        %v1269 = vpack.c.b16 %v1021, %v1017
        %v1270 = vpack.c.b16 %v1022, %v1018
        %v1271 = vpack.c.b16 %v1027, %v1023
        %v1272 = vpack.c.b16 %v1028, %v1024
        %v1273 = vpack.c.b16 %v1029, %v1025
        %v1274 = vpack.c.b16 %v1030, %v1026
        %v1275 = vpack.c.b16 %v1035, %v1031
        %v1276 = vpack.c.b16 %v1036, %v1032
        %v1277 = vpack.c.b16 %v1037, %v1033
        %v1278 = vpack.c.b16 %v1038, %v1034
        %v1279 = vpack.c.b16 %v1043, %v1039
        %v1280 = vpack.c.b16 %v1044, %v1040
        %v1281 = vpack.c.b16 %v1045, %v1041
        %v1282 = vpack.c.b16 %v1046, %v1042
        %v1283 = vpack.c.b16 %v1051, %v1047
        %v1284 = vpack.c.b16 %v1052, %v1048
        %v1285 = vpack.c.b16 %v1053, %v1049
        %v1286 = vpack.c.b16 %v1054, %v1050
        %v1287 = vpack.c.b16 %v1059, %v1055
        %v1288 = vpack.c.b16 %v1060, %v1056
        %v1289 = vpack.c.b16 %v1061, %v1057
        %v1290 = vpack.c.b16 %v1062, %v1058
        %v1291 = vpack.c.b16 %v1067, %v1063
        %v1292 = vpack.c.b16 %v1068, %v1064
        %v1293 = vpack.c.b16 %v1069, %v1065
        %v1294 = vpack.c.b16 %v1070, %v1066
        %v1295 = vpack.c.b16 %v1075, %v1071
        %v1296 = vpack.c.b16 %v1076, %v1072
        %v1297 = vpack.c.b16 %v1077, %v1073
        %v1298 = vpack.c.b16 %v1078, %v1074
        %v1299 = vpack.c.b16 %v1083, %v1079
        %v1300 = vpack.c.b16 %v1084, %v1080
        %v1301 = vpack.c.b16 %v1085, %v1081
        %v1302 = vpack.c.b16 %v1086, %v1082
        %v1303 = vpack.c.b16 %v1091, %v1087
        %v1304 = vpack.c.b16 %v1092, %v1088
        %v1305 = vpack.c.b16 %v1093, %v1089
        %v1306 = vpack.c.b16 %v1094, %v1090
        %v1307 = vpack.c.b16 %v1099, %v1095
        %v1308 = vpack.c.b16 %v1100, %v1096
        %v1309 = vpack.c.b16 %v1101, %v1097
        %v1310 = vpack.c.b16 %v1102, %v1098
        %v1311 = vpack.c.b16 %v1107, %v1103
        %v1312 = vpack.c.b16 %v1108, %v1104
        %v1313 = vpack.c.b16 %v1109, %v1105
        %v1314 = vpack.c.b16 %v1110, %v1106
        %v1315 = vpack.c.b16 %v1115, %v1111
        %v1316 = vpack.c.b16 %v1116, %v1112
        %v1317 = vpack.c.b16 %v1117, %v1113
        %v1318 = vpack.c.b16 %v1118, %v1114
        %v1319 = vpack.c.b16 %v1123, %v1119
        %v1320 = vpack.c.b16 %v1124, %v1120
        %v1321 = vpack.c.b16 %v1125, %v1121
        %v1322 = vpack.c.b16 %v1126, %v1122
        %v1323 = vpack.c.b16 %v1131, %v1127
        %v1324 = vpack.c.b16 %v1132, %v1128
        %v1325 = vpack.c.b16 %v1133, %v1129
        %v1326 = vpack.c.b16 %v1134, %v1130
        %v1327 = vpack.c.b16 %v1139, %v1135
        %v1328 = vpack.c.b16 %v1140, %v1136
        %v1329 = vpack.c.b16 %v1141, %v1137
        %v1330 = vpack.c.b16 %v1142, %v1138
        %v1331 = vpack.c.b16 %v1147, %v1143
        %v1332 = vpack.c.b16 %v1148, %v1144
        %v1333 = vpack.c.b16 %v1149, %v1145
        %v1334 = vpack.c.b16 %v1150, %v1146
        %v1335 = vpack.c.b16 %v1155, %v1151
        %v1336 = vpack.c.b16 %v1156, %v1152
        %v1337 = vpack.c.b16 %v1157, %v1153
        %v1338 = vpack.c.b16 %v1158, %v1154
        %v1339 = vpack.c.b16 %v1163, %v1159
        %v1340 = vpack.c.b16 %v1164, %v1160
        %v1341 = vpack.c.b16 %v1165, %v1161
        %v1342 = vpack.c.b16 %v1166, %v1162
        %v1343 = vpack.c.b16 %v1171, %v1167
        %v1344 = vpack.c.b16 %v1172, %v1168
        %v1345 = vpack.c.b16 %v1173, %v1169
        %v1346 = vpack.c.b16 %v1174, %v1170
        %v1347 = vpack.c.b16 %v1179, %v1175
        %v1348 = vpack.c.b16 %v1180, %v1176
        %v1349 = vpack.c.b16 %v1181, %v1177
        %v1350 = vpack.c.b16 %v1182, %v1178
        %v1351 = vpack.c.b16 %v1187, %v1183
        %v1352 = vpack.c.b16 %v1188, %v1184
        %v1353 = vpack.c.b16 %v1189, %v1185
        %v1354 = vpack.c.b16 %v1190, %v1186
        %v1355 = vpack.c.b16 %v1195, %v1191
        %v1356 = vpack.c.b16 %v1196, %v1192
        %v1357 = vpack.c.b16 %v1197, %v1193
        %v1358 = vpack.c.b16 %v1198, %v1194
        %v1359 = vpack.c.b16 %v1203, %v1199
        %v1360 = vpack.c.b16 %v1204, %v1200
        %v1361 = vpack.c.b16 %v1205, %v1201
        %v1362 = vpack.c.b16 %v1206, %v1202
        %v1363 = vpack.c.b16 %v1211, %v1207
        %v1364 = vpack.c.b16 %v1212, %v1208
        %v1365 = vpack.c.b16 %v1213, %v1209
        %v1366 = vpack.c.b16 %v1214, %v1210
        %v1367 = vpack.c.b16 %v1219, %v1215
        %v1368 = vpack.c.b16 %v1220, %v1216
        %v1369 = vpack.c.b16 %v1221, %v1217
        %v1370 = vpack.c.b16 %v1222, %v1218
        %v1371 = vpack.c.b16 %v1227, %v1223
        %v1372 = vpack.c.b16 %v1228, %v1224
        %v1373 = vpack.c.b16 %v1229, %v1225
        %v1374 = vpack.c.b16 %v1230, %v1226
        %v1375 = vpack.c.b16 %v1235, %v1231
        %v1376 = vpack.c.b16 %v1236, %v1232
        %v1377 = vpack.c.b16 %v1237, %v1233
        %v1378 = vpack.c.b16 %v1238, %v1234
        %v1379 = vpack.c.b16 %v1243, %v1239
        %v1380 = vpack.c.b16 %v1244, %v1240
        %v1381 = vpack.c.b16 %v1245, %v1241
        %v1382 = vpack.c.b16 %v1246, %v1242
        %v1383 = vpack.c.b16 %v1251, %v1247
        %v1384 = vpack.c.b16 %v1252, %v1248
        %v1385 = vpack.c.b16 %v1253, %v1249
        %v1386 = vpack.c.b16 %v1254, %v1250
        %v1387 = vpack.c.b16 %v1259, %v1255
        %v1388 = vpack.c.b16 %v1260, %v1256
        %v1389 = vpack.c.b16 %v1261, %v1257
        %v1390 = vpack.c.b16 %v1262, %v1258
        %1519 = vmatpush.bf16.msra.mxu0 %v1291
        %1520 = vmatpush.bf16.msra.mxu0 %v1287
        %1521 = vmatpush.bf16.msra.mxu0 %v1283
        %1522 = vmatpush.bf16.msra.mxu0 %v1279
        %1523 = vmatpush.bf16.msra.mxu0 %v1275
        %1524 = vmatpush.bf16.msra.mxu0 %v1271
        %1525 = vmatpush.bf16.msra.mxu0 %v1267
        %1526 = vmatpush.bf16.msra.mxu0 %v1263
        %1527 = vmatmul.bf16.gmra.mxu0 %v871
        %v1528 = vpop.f32.mrf.mxu0
        %v1529 = vadd.f32 %v827, %v1528
        %v1530 = vpop.f32.mrf.mxu0
        %1531 = vdwg.mxu0
        %1532 = vmatpush.bf16.msra.mxu0 %v1323
        %1533 = vmatpush.bf16.msra.mxu0 %v1319
        %1534 = vmatpush.bf16.msra.mxu0 %v1315
        %1535 = vmatpush.bf16.msra.mxu0 %v1311
        %1536 = vmatpush.bf16.msra.mxu0 %v1307
        %1537 = vmatpush.bf16.msra.mxu0 %v1303
        %1538 = vmatpush.bf16.msra.mxu0 %v1299
        %1539 = vmatpush.bf16.msra.mxu0 %v1295
        %1540 = vmatmul.bf16.gmra.mxu0 %v872
        %v1541 = vpop.f32.mrf.mxu0
        %v1542 = vadd.f32 %v1529, %v1541
        %v1543 = vpop.f32.mrf.mxu0
        %1544 = vdwg.mxu0
        %1545 = vmatpush.bf16.msra.mxu0 %v1355
        %1546 = vmatpush.bf16.msra.mxu0 %v1351
        %1547 = vmatpush.bf16.msra.mxu0 %v1347
        %1548 = vmatpush.bf16.msra.mxu0 %v1343
        %1549 = vmatpush.bf16.msra.mxu0 %v1339
        %1550 = vmatpush.bf16.msra.mxu0 %v1335
        %1551 = vmatpush.bf16.msra.mxu0 %v1331
        %1552 = vmatpush.bf16.msra.mxu0 %v1327
        %1553 = vmatmul.bf16.gmra.mxu0 %v873
        %v1554 = vpop.f32.mrf.mxu0
        %v1555 = vadd.f32 %v1542, %v1554
        %v1556 = vpop.f32.mrf.mxu0
        %1557 = vdwg.mxu0
        %1558 = vmatpush.bf16.msra.mxu0 %v1387
        %1559 = vmatpush.bf16.msra.mxu0 %v1383
        %1560 = vmatpush.bf16.msra.mxu0 %v1379
        %1561 = vmatpush.bf16.msra.mxu0 %v1375
        %1562 = vmatpush.bf16.msra.mxu0 %v1371
        %1563 = vmatpush.bf16.msra.mxu0 %v1367
        %1564 = vmatpush.bf16.msra.mxu0 %v1363
        %1565 = vmatpush.bf16.msra.mxu0 %v1359
        %1566 = vmatmul.bf16.gmra.mxu0 %v874
        %v1567 = vpop.f32.mrf.mxu0
        %v1568 = vadd.f32 %v1555, %v1567
        %v1569 = vpop.f32.mrf.mxu0
        %1570 = vdwg.mxu0
        %1571 = vmatpush.bf16.msra.mxu0 %v1292
        %1572 = vmatpush.bf16.msra.mxu0 %v1288
        %1573 = vmatpush.bf16.msra.mxu0 %v1284
        %1574 = vmatpush.bf16.msra.mxu0 %v1280
        %1575 = vmatpush.bf16.msra.mxu0 %v1276
        %1576 = vmatpush.bf16.msra.mxu0 %v1272
        %1577 = vmatpush.bf16.msra.mxu0 %v1268
        %1578 = vmatpush.bf16.msra.mxu0 %v1264
        %1579 = vmatmul.bf16.gmra.mxu0 %v871
        %v1580 = vpop.f32.mrf.mxu0
        %v1581 = vadd.f32 %v840, %v1580
        %v1582 = vpop.f32.mrf.mxu0
        %1583 = vdwg.mxu0
        %1584 = vmatpush.bf16.msra.mxu0 %v1324
        %1585 = vmatpush.bf16.msra.mxu0 %v1320
        %1586 = vmatpush.bf16.msra.mxu0 %v1316
        %1587 = vmatpush.bf16.msra.mxu0 %v1312
        %1588 = vmatpush.bf16.msra.mxu0 %v1308
        %1589 = vmatpush.bf16.msra.mxu0 %v1304
        %1590 = vmatpush.bf16.msra.mxu0 %v1300
        %1591 = vmatpush.bf16.msra.mxu0 %v1296
        %1592 = vmatmul.bf16.gmra.mxu0 %v872
        %v1593 = vpop.f32.mrf.mxu0
        %v1594 = vadd.f32 %v1581, %v1593
        %v1595 = vpop.f32.mrf.mxu0
        %1596 = vdwg.mxu0
        %1597 = vmatpush.bf16.msra.mxu0 %v1356
        %1598 = vmatpush.bf16.msra.mxu0 %v1352
        %1599 = vmatpush.bf16.msra.mxu0 %v1348
        %1600 = vmatpush.bf16.msra.mxu0 %v1344
        %1601 = vmatpush.bf16.msra.mxu0 %v1340
        %1602 = vmatpush.bf16.msra.mxu0 %v1336
        %1603 = vmatpush.bf16.msra.mxu0 %v1332
        %1604 = vmatpush.bf16.msra.mxu0 %v1328
        %1605 = vmatmul.bf16.gmra.mxu0 %v873
        %v1606 = vpop.f32.mrf.mxu0
        %v1607 = vadd.f32 %v1594, %v1606
        %v1608 = vpop.f32.mrf.mxu0
        %1609 = vdwg.mxu0
        %1610 = vmatpush.bf16.msra.mxu0 %v1388
        %1611 = vmatpush.bf16.msra.mxu0 %v1384
        %1612 = vmatpush.bf16.msra.mxu0 %v1380
        %1613 = vmatpush.bf16.msra.mxu0 %v1376
        %1614 = vmatpush.bf16.msra.mxu0 %v1372
        %1615 = vmatpush.bf16.msra.mxu0 %v1368
        %1616 = vmatpush.bf16.msra.mxu0 %v1364
        %1617 = vmatpush.bf16.msra.mxu0 %v1360
        %1618 = vmatmul.bf16.gmra.mxu0 %v874
        %v1619 = vpop.f32.mrf.mxu0
        %v1620 = vadd.f32 %v1607, %v1619
        %v1621 = vpop.f32.mrf.mxu0
        %1622 = vdwg.mxu0
        %1623 = vmatpush.bf16.msra.mxu0 %v1293
        %1624 = vmatpush.bf16.msra.mxu0 %v1289
        %1625 = vmatpush.bf16.msra.mxu0 %v1285
        %1626 = vmatpush.bf16.msra.mxu0 %v1281
        %1627 = vmatpush.bf16.msra.mxu0 %v1277
        %1628 = vmatpush.bf16.msra.mxu0 %v1273
        %1629 = vmatpush.bf16.msra.mxu0 %v1269
        %1630 = vmatpush.bf16.msra.mxu0 %v1265
        %1631 = vmatmul.bf16.gmra.mxu0 %v871
        %v1632 = vpop.f32.mrf.mxu0
        %v1633 = vadd.f32 %v853, %v1632
        %v1634 = vpop.f32.mrf.mxu0
        %1635 = vdwg.mxu0
        %1636 = vmatpush.bf16.msra.mxu0 %v1325
        %1637 = vmatpush.bf16.msra.mxu0 %v1321
        %1638 = vmatpush.bf16.msra.mxu0 %v1317
        %1639 = vmatpush.bf16.msra.mxu0 %v1313
        %1640 = vmatpush.bf16.msra.mxu0 %v1309
        %1641 = vmatpush.bf16.msra.mxu0 %v1305
        %1642 = vmatpush.bf16.msra.mxu0 %v1301
        %1643 = vmatpush.bf16.msra.mxu0 %v1297
        %1644 = vmatmul.bf16.gmra.mxu0 %v872
        %v1645 = vpop.f32.mrf.mxu0
        %v1646 = vadd.f32 %v1633, %v1645
        %v1647 = vpop.f32.mrf.mxu0
        %1648 = vdwg.mxu0
        %1649 = vmatpush.bf16.msra.mxu0 %v1357
        %1650 = vmatpush.bf16.msra.mxu0 %v1353
        %1651 = vmatpush.bf16.msra.mxu0 %v1349
        %1652 = vmatpush.bf16.msra.mxu0 %v1345
        %1653 = vmatpush.bf16.msra.mxu0 %v1341
        %1654 = vmatpush.bf16.msra.mxu0 %v1337
        %1655 = vmatpush.bf16.msra.mxu0 %v1333
        %1656 = vmatpush.bf16.msra.mxu0 %v1329
        %1657 = vmatmul.bf16.gmra.mxu0 %v873
        %v1658 = vpop.f32.mrf.mxu0
        %v1659 = vadd.f32 %v1646, %v1658
        %v1660 = vpop.f32.mrf.mxu0
        %1661 = vdwg.mxu0
        %1662 = vmatpush.bf16.msra.mxu0 %v1389
        %1663 = vmatpush.bf16.msra.mxu0 %v1385
        %1664 = vmatpush.bf16.msra.mxu0 %v1381
        %1665 = vmatpush.bf16.msra.mxu0 %v1377
        %1666 = vmatpush.bf16.msra.mxu0 %v1373
        %1667 = vmatpush.bf16.msra.mxu0 %v1369
        %1668 = vmatpush.bf16.msra.mxu0 %v1365
        %1669 = vmatpush.bf16.msra.mxu0 %v1361
        %1670 = vmatmul.bf16.gmra.mxu0 %v874
        %v1671 = vpop.f32.mrf.mxu0
        %v1672 = vadd.f32 %v1659, %v1671
        %v1673 = vpop.f32.mrf.mxu0
        %1674 = vdwg.mxu0
        %1675 = vmatpush.bf16.msra.mxu0 %v1294
        %1676 = vmatpush.bf16.msra.mxu0 %v1290
        %1677 = vmatpush.bf16.msra.mxu0 %v1286
        %1678 = vmatpush.bf16.msra.mxu0 %v1282
        %1679 = vmatpush.bf16.msra.mxu0 %v1278
        %1680 = vmatpush.bf16.msra.mxu0 %v1274
        %1681 = vmatpush.bf16.msra.mxu0 %v1270
        %1682 = vmatpush.bf16.msra.mxu0 %v1266
        %1683 = vmatmul.bf16.gmra.mxu0 %v871
        %v1684 = vpop.f32.mrf.mxu0
        %v1685 = vadd.f32 %v866, %v1684
        %v1686 = vpop.f32.mrf.mxu0
        %1687 = vdwg.mxu0
        %1688 = vmatpush.bf16.msra.mxu0 %v1326
        %1689 = vmatpush.bf16.msra.mxu0 %v1322
        %1690 = vmatpush.bf16.msra.mxu0 %v1318
        %1691 = vmatpush.bf16.msra.mxu0 %v1314
        %1692 = vmatpush.bf16.msra.mxu0 %v1310
        %1693 = vmatpush.bf16.msra.mxu0 %v1306
        %1694 = vmatpush.bf16.msra.mxu0 %v1302
        %1695 = vmatpush.bf16.msra.mxu0 %v1298
        %1696 = vmatmul.bf16.gmra.mxu0 %v872
        %v1697 = vpop.f32.mrf.mxu0
        %v1698 = vadd.f32 %v1685, %v1697
        %v1699 = vpop.f32.mrf.mxu0
        %1700 = vdwg.mxu0
        %1701 = vmatpush.bf16.msra.mxu0 %v1358
        %1702 = vmatpush.bf16.msra.mxu0 %v1354
        %1703 = vmatpush.bf16.msra.mxu0 %v1350
        %1704 = vmatpush.bf16.msra.mxu0 %v1346
        %1705 = vmatpush.bf16.msra.mxu0 %v1342
        %1706 = vmatpush.bf16.msra.mxu0 %v1338
        %1707 = vmatpush.bf16.msra.mxu0 %v1334
        %1708 = vmatpush.bf16.msra.mxu0 %v1330
        %1709 = vmatmul.bf16.gmra.mxu0 %v873
        %v1710 = vpop.f32.mrf.mxu0
        %v1711 = vadd.f32 %v1698, %v1710
        %v1712 = vpop.f32.mrf.mxu0
        %1713 = vdwg.mxu0
        %1714 = vmatpush.bf16.msra.mxu0 %v1390
        %1715 = vmatpush.bf16.msra.mxu0 %v1386
        %1716 = vmatpush.bf16.msra.mxu0 %v1382
        %1717 = vmatpush.bf16.msra.mxu0 %v1378
        %1718 = vmatpush.bf16.msra.mxu0 %v1374
        %1719 = vmatpush.bf16.msra.mxu0 %v1370
        %1720 = vmatpush.bf16.msra.mxu0 %v1366
        %1721 = vmatpush.bf16.msra.mxu0 %v1362
        %1722 = vmatmul.bf16.gmra.mxu0 %v874
        %v1723 = vpop.f32.mrf.mxu0
        %v1724 = vadd.f32 %v1711, %v1723
        %v1725 = vpop.f32.mrf.mxu0
        %1726 = vdwg.mxu0
        %v1727 = vld [vmem:[%s649] sm:$0xf]
        %v1729 = vperm.slane %v1727, 0
        %v1730 = vperm.slane %v1727, 1
        %v1731 = vperm.slane %v1727, 2
        %v1732 = vperm.slane %v1727, 3
        %v1737 = vadd.f32 %v1568, %v1729
        %v1738 = vadd.f32 %v1620, %v1730
        %v1739 = vadd.f32 %v1672, %v1731
        %v1740 = vadd.f32 %v1724, %v1732
        %v1741 = vmax.f32 %v1737, 0.0
        %v1742 = vmax.f32 %v1738, 0.0
        %v1743 = vmax.f32 %v1739, 0.0
        %v1744 = vmax.f32 %v1740, 0.0
        %v1745 = vld [vmem:[#allocation2] sm:$0xff]
        %v1746 = vpack.c.bf16 %v1741, %v1741
        %v1747 = vpack.c.bf16 %v1742, %v1742
        %v1748 = vpack.c.bf16 %v1743, %v1743
        %v1749 = vpack.c.bf16 %v1744, %v1744
        %v1750 = vld [vmem:[%s597] sm:$0xff]
        %v1751 = vld [vmem:[%s597 + $0x8] sm:$0xff]
        %v1752 = vld [vmem:[%s597 + $0x10] sm:$0xff]
        %v1753 = vld [vmem:[%s597 + $0x18] sm:$0xff]
        %v1754 = vld [vmem:[%s597 + $0x20] sm:$0xff]
        %v1755 = vld [vmem:[%s597 + $0x28] sm:$0xff]
        %v1756 = vld [vmem:[%s597 + $0x30] sm:$0xff]
        %v1757 = vld [vmem:[%s597 + $0x38] sm:$0xff]
        %v1758 = vld [vmem:[%s597 + $0x40] sm:$0xff]
        %v1759 = vld [vmem:[%s597 + $0x48] sm:$0xff]
        %v1760 = vld [vmem:[%s597 + $0x50] sm:$0xff]
        %v1761 = vld [vmem:[%s597 + $0x58] sm:$0xff]
        %v1762 = vld [vmem:[%s597 + $0x60] sm:$0xff]
        %v1763 = vld [vmem:[%s597 + $0x68] sm:$0xff]
        %v1764 = vld [vmem:[%s597 + $0x70] sm:$0xff]
        %v1765 = vld [vmem:[%s597 + $0x78] sm:$0xff]
        %v1766 = vld [vmem:[%s597 + $0x80] sm:$0xff]
        %v1767 = vld [vmem:[%s597 + $0x88] sm:$0xff]
        %v1768 = vld [vmem:[%s597 + $0x90] sm:$0xff]
        %v1769 = vld [vmem:[%s597 + $0x98] sm:$0xff]
        %v1770 = vld [vmem:[%s597 + $0xa0] sm:$0xff]
        %v1771 = vld [vmem:[%s597 + $0xa8] sm:$0xff]
        %v1772 = vld [vmem:[%s597 + $0xb0] sm:$0xff]
        %v1773 = vld [vmem:[%s597 + $0xb8] sm:$0xff]
        %v1774 = vld [vmem:[%s597 + $0xc0] sm:$0xff]
        %v1775 = vld [vmem:[%s597 + $0xc8] sm:$0xff]
        %v1776 = vld [vmem:[%s597 + $0xd0] sm:$0xff]
        %v1777 = vld [vmem:[%s597 + $0xd8] sm:$0xff]
        %v1778 = vld [vmem:[%s597 + $0xe0] sm:$0xff]
        %v1779 = vld [vmem:[%s597 + $0xe8] sm:$0xff]
        %v1780 = vld [vmem:[%s597 + $0xf0] sm:$0xff]
        %v1781 = vld [vmem:[%s597 + $0xf8] sm:$0xff]
        %v1782 = vld [vmem:[%s597 + $0x100] sm:$0xff]
        %v1783 = vld [vmem:[%s597 + $0x108] sm:$0xff]
        %v1784 = vld [vmem:[%s597 + $0x110] sm:$0xff]
        %v1785 = vld [vmem:[%s597 + $0x118] sm:$0xff]
        %v1786 = vld [vmem:[%s597 + $0x120] sm:$0xff]
        %v1787 = vld [vmem:[%s597 + $0x128] sm:$0xff]
        %v1788 = vld [vmem:[%s597 + $0x130] sm:$0xff]
        %v1789 = vld [vmem:[%s597 + $0x138] sm:$0xff]
        %v1790 = vld [vmem:[%s597 + $0x140] sm:$0xff]
        %v1791 = vld [vmem:[%s597 + $0x148] sm:$0xff]
        %v1792 = vld [vmem:[%s597 + $0x150] sm:$0xff]
        %v1793 = vld [vmem:[%s597 + $0x158] sm:$0xff]
        %v1794 = vld [vmem:[%s597 + $0x160] sm:$0xff]
        %v1795 = vld [vmem:[%s597 + $0x168] sm:$0xff]
        %v1796 = vld [vmem:[%s597 + $0x170] sm:$0xff]
        %v1797 = vld [vmem:[%s597 + $0x178] sm:$0xff]
        %v1798 = vld [vmem:[%s597 + $0x180] sm:$0xff]
        %v1799 = vld [vmem:[%s597 + $0x188] sm:$0xff]
        %v1800 = vld [vmem:[%s597 + $0x190] sm:$0xff]
        %v1801 = vld [vmem:[%s597 + $0x198] sm:$0xff]
        %v1802 = vld [vmem:[%s597 + $0x1a0] sm:$0xff]
        %v1803 = vld [vmem:[%s597 + $0x1a8] sm:$0xff]
        %v1804 = vld [vmem:[%s597 + $0x1b0] sm:$0xff]
        %v1805 = vld [vmem:[%s597 + $0x1b8] sm:$0xff]
        %v1806 = vld [vmem:[%s597 + $0x1c0] sm:$0xff]
        %v1807 = vld [vmem:[%s597 + $0x1c8] sm:$0xff]
        %v1808 = vld [vmem:[%s597 + $0x1d0] sm:$0xff]
        %v1809 = vld [vmem:[%s597 + $0x1d8] sm:$0xff]
        %v1810 = vld [vmem:[%s597 + $0x1e0] sm:$0xff]
        %v1811 = vld [vmem:[%s597 + $0x1e8] sm:$0xff]
        %v1812 = vld [vmem:[%s597 + $0x1f0] sm:$0xff]
        %v1813 = vld [vmem:[%s597 + $0x1f8] sm:$0xff]
        %v1814 = vld [vmem:[%s597 + $0x200] sm:$0xff]
        %v1815 = vld [vmem:[%s597 + $0x208] sm:$0xff]
        %v1816 = vld [vmem:[%s597 + $0x210] sm:$0xff]
        %v1817 = vld [vmem:[%s597 + $0x218] sm:$0xff]
        %v1818 = vld [vmem:[%s597 + $0x220] sm:$0xff]
        %v1819 = vld [vmem:[%s597 + $0x228] sm:$0xff]
        %v1820 = vld [vmem:[%s597 + $0x230] sm:$0xff]
        %v1821 = vld [vmem:[%s597 + $0x238] sm:$0xff]
        %v1822 = vld [vmem:[%s597 + $0x240] sm:$0xff]
        %v1823 = vld [vmem:[%s597 + $0x248] sm:$0xff]
        %v1824 = vld [vmem:[%s597 + $0x250] sm:$0xff]
        %v1825 = vld [vmem:[%s597 + $0x258] sm:$0xff]
        %v1826 = vld [vmem:[%s597 + $0x260] sm:$0xff]
        %v1827 = vld [vmem:[%s597 + $0x268] sm:$0xff]
        %v1828 = vld [vmem:[%s597 + $0x270] sm:$0xff]
        %v1829 = vld [vmem:[%s597 + $0x278] sm:$0xff]
        %v1830 = vld [vmem:[%s597 + $0x280] sm:$0xff]
        %v1831 = vld [vmem:[%s597 + $0x288] sm:$0xff]
        %v1832 = vld [vmem:[%s597 + $0x290] sm:$0xff]
        %v1833 = vld [vmem:[%s597 + $0x298] sm:$0xff]
        %v1834 = vld [vmem:[%s597 + $0x2a0] sm:$0xff]
        %v1835 = vld [vmem:[%s597 + $0x2a8] sm:$0xff]
        %v1836 = vld [vmem:[%s597 + $0x2b0] sm:$0xff]
        %v1837 = vld [vmem:[%s597 + $0x2b8] sm:$0xff]
        %v1838 = vld [vmem:[%s597 + $0x2c0] sm:$0xff]
        %v1839 = vld [vmem:[%s597 + $0x2c8] sm:$0xff]
        %v1840 = vld [vmem:[%s597 + $0x2d0] sm:$0xff]
        %v1841 = vld [vmem:[%s597 + $0x2d8] sm:$0xff]
        %v1842 = vld [vmem:[%s597 + $0x2e0] sm:$0xff]
        %v1843 = vld [vmem:[%s597 + $0x2e8] sm:$0xff]
        %v1844 = vld [vmem:[%s597 + $0x2f0] sm:$0xff]
        %v1845 = vld [vmem:[%s597 + $0x2f8] sm:$0xff]
        %v1846 = vld [vmem:[%s597 + $0x300] sm:$0xff]
        %v1847 = vld [vmem:[%s597 + $0x308] sm:$0xff]
        %v1848 = vld [vmem:[%s597 + $0x310] sm:$0xff]
        %v1849 = vld [vmem:[%s597 + $0x318] sm:$0xff]
        %v1850 = vld [vmem:[%s597 + $0x320] sm:$0xff]
        %v1851 = vld [vmem:[%s597 + $0x328] sm:$0xff]
        %v1852 = vld [vmem:[%s597 + $0x330] sm:$0xff]
        %v1853 = vld [vmem:[%s597 + $0x338] sm:$0xff]
        %v1854 = vld [vmem:[%s597 + $0x340] sm:$0xff]
        %v1855 = vld [vmem:[%s597 + $0x348] sm:$0xff]
        %v1856 = vld [vmem:[%s597 + $0x350] sm:$0xff]
        %v1857 = vld [vmem:[%s597 + $0x358] sm:$0xff]
        %v1858 = vld [vmem:[%s597 + $0x360] sm:$0xff]
        %v1859 = vld [vmem:[%s597 + $0x368] sm:$0xff]
        %v1860 = vld [vmem:[%s597 + $0x370] sm:$0xff]
        %v1861 = vld [vmem:[%s597 + $0x378] sm:$0xff]
        %v1862 = vld [vmem:[%s597 + $0x380] sm:$0xff]
        %v1863 = vld [vmem:[%s597 + $0x388] sm:$0xff]
        %v1864 = vld [vmem:[%s597 + $0x390] sm:$0xff]
        %v1865 = vld [vmem:[%s597 + $0x398] sm:$0xff]
        %v1866 = vld [vmem:[%s597 + $0x3a0] sm:$0xff]
        %v1867 = vld [vmem:[%s597 + $0x3a8] sm:$0xff]
        %v1868 = vld [vmem:[%s597 + $0x3b0] sm:$0xff]
        %v1869 = vld [vmem:[%s597 + $0x3b8] sm:$0xff]
        %v1870 = vld [vmem:[%s597 + $0x3c0] sm:$0xff]
        %v1871 = vld [vmem:[%s597 + $0x3c8] sm:$0xff]
        %v1872 = vld [vmem:[%s597 + $0x3d0] sm:$0xff]
        %v1873 = vld [vmem:[%s597 + $0x3d8] sm:$0xff]
        %v1874 = vld [vmem:[%s597 + $0x3e0] sm:$0xff]
        %v1875 = vld [vmem:[%s597 + $0x3e8] sm:$0xff]
        %v1876 = vld [vmem:[%s597 + $0x3f0] sm:$0xff]
        %v1877 = vld [vmem:[%s597 + $0x3f8] sm:$0xff]
        %v2006 = vunpack.c.l.b16 %v1750
        %v2007 = vunpack.c.h.b16 %v1750
        %v2008 = vunpack.c.l.b16 %v1751
        %v2009 = vunpack.c.h.b16 %v1751
        %v2010 = vunpack.c.l.b16 %v1752
        %v2011 = vunpack.c.h.b16 %v1752
        %v2012 = vunpack.c.l.b16 %v1753
        %v2013 = vunpack.c.h.b16 %v1753
        %v2014 = vunpack.c.l.b16 %v1754
        %v2015 = vunpack.c.h.b16 %v1754
        %v2016 = vunpack.c.l.b16 %v1755
        %v2017 = vunpack.c.h.b16 %v1755
        %v2018 = vunpack.c.l.b16 %v1756
        %v2019 = vunpack.c.h.b16 %v1756
        %v2020 = vunpack.c.l.b16 %v1757
        %v2021 = vunpack.c.h.b16 %v1757
        %v2022 = vunpack.c.l.b16 %v1758
        %v2023 = vunpack.c.h.b16 %v1758
        %v2024 = vunpack.c.l.b16 %v1759
        %v2025 = vunpack.c.h.b16 %v1759
        %v2026 = vunpack.c.l.b16 %v1760
        %v2027 = vunpack.c.h.b16 %v1760
        %v2028 = vunpack.c.l.b16 %v1761
        %v2029 = vunpack.c.h.b16 %v1761
        %v2030 = vunpack.c.l.b16 %v1762
        %v2031 = vunpack.c.h.b16 %v1762
        %v2032 = vunpack.c.l.b16 %v1763
        %v2033 = vunpack.c.h.b16 %v1763
        %v2034 = vunpack.c.l.b16 %v1764
        %v2035 = vunpack.c.h.b16 %v1764
        %v2036 = vunpack.c.l.b16 %v1765
        %v2037 = vunpack.c.h.b16 %v1765
        %v2038 = vunpack.c.l.b16 %v1766
        %v2039 = vunpack.c.h.b16 %v1766
        %v2040 = vunpack.c.l.b16 %v1767
        %v2041 = vunpack.c.h.b16 %v1767
        %v2042 = vunpack.c.l.b16 %v1768
        %v2043 = vunpack.c.h.b16 %v1768
        %v2044 = vunpack.c.l.b16 %v1769
        %v2045 = vunpack.c.h.b16 %v1769
        %v2046 = vunpack.c.l.b16 %v1770
        %v2047 = vunpack.c.h.b16 %v1770
        %v2048 = vunpack.c.l.b16 %v1771
        %v2049 = vunpack.c.h.b16 %v1771
        %v2050 = vunpack.c.l.b16 %v1772
        %v2051 = vunpack.c.h.b16 %v1772
        %v2052 = vunpack.c.l.b16 %v1773
        %v2053 = vunpack.c.h.b16 %v1773
        %v2054 = vunpack.c.l.b16 %v1774
        %v2055 = vunpack.c.h.b16 %v1774
        %v2056 = vunpack.c.l.b16 %v1775
        %v2057 = vunpack.c.h.b16 %v1775
        %v2058 = vunpack.c.l.b16 %v1776
        %v2059 = vunpack.c.h.b16 %v1776
        %v2060 = vunpack.c.l.b16 %v1777
        %v2061 = vunpack.c.h.b16 %v1777
        %v2062 = vunpack.c.l.b16 %v1778
        %v2063 = vunpack.c.h.b16 %v1778
        %v2064 = vunpack.c.l.b16 %v1779
        %v2065 = vunpack.c.h.b16 %v1779
        %v2066 = vunpack.c.l.b16 %v1780
        %v2067 = vunpack.c.h.b16 %v1780
        %v2068 = vunpack.c.l.b16 %v1781
        %v2069 = vunpack.c.h.b16 %v1781
        %v2070 = vunpack.c.l.b16 %v1782
        %v2071 = vunpack.c.h.b16 %v1782
        %v2072 = vunpack.c.l.b16 %v1783
        %v2073 = vunpack.c.h.b16 %v1783
        %v2074 = vunpack.c.l.b16 %v1784
        %v2075 = vunpack.c.h.b16 %v1784
        %v2076 = vunpack.c.l.b16 %v1785
        %v2077 = vunpack.c.h.b16 %v1785
        %v2078 = vunpack.c.l.b16 %v1786
        %v2079 = vunpack.c.h.b16 %v1786
        %v2080 = vunpack.c.l.b16 %v1787
        %v2081 = vunpack.c.h.b16 %v1787
        %v2082 = vunpack.c.l.b16 %v1788
        %v2083 = vunpack.c.h.b16 %v1788
        %v2084 = vunpack.c.l.b16 %v1789
        %v2085 = vunpack.c.h.b16 %v1789
        %v2086 = vunpack.c.l.b16 %v1790
        %v2087 = vunpack.c.h.b16 %v1790
        %v2088 = vunpack.c.l.b16 %v1791
        %v2089 = vunpack.c.h.b16 %v1791
        %v2090 = vunpack.c.l.b16 %v1792
        %v2091 = vunpack.c.h.b16 %v1792
        %v2092 = vunpack.c.l.b16 %v1793
        %v2093 = vunpack.c.h.b16 %v1793
        %v2094 = vunpack.c.l.b16 %v1794
        %v2095 = vunpack.c.h.b16 %v1794
        %v2096 = vunpack.c.l.b16 %v1795
        %v2097 = vunpack.c.h.b16 %v1795
        %v2098 = vunpack.c.l.b16 %v1796
        %v2099 = vunpack.c.h.b16 %v1796
        %v2100 = vunpack.c.l.b16 %v1797
        %v2101 = vunpack.c.h.b16 %v1797
        %v2102 = vunpack.c.l.b16 %v1798
        %v2103 = vunpack.c.h.b16 %v1798
        %v2104 = vunpack.c.l.b16 %v1799
        %v2105 = vunpack.c.h.b16 %v1799
        %v2106 = vunpack.c.l.b16 %v1800
        %v2107 = vunpack.c.h.b16 %v1800
        %v2108 = vunpack.c.l.b16 %v1801
        %v2109 = vunpack.c.h.b16 %v1801
        %v2110 = vunpack.c.l.b16 %v1802
        %v2111 = vunpack.c.h.b16 %v1802
        %v2112 = vunpack.c.l.b16 %v1803
        %v2113 = vunpack.c.h.b16 %v1803
        %v2114 = vunpack.c.l.b16 %v1804
        %v2115 = vunpack.c.h.b16 %v1804
        %v2116 = vunpack.c.l.b16 %v1805
        %v2117 = vunpack.c.h.b16 %v1805
        %v2118 = vunpack.c.l.b16 %v1806
        %v2119 = vunpack.c.h.b16 %v1806
        %v2120 = vunpack.c.l.b16 %v1807
        %v2121 = vunpack.c.h.b16 %v1807
        %v2122 = vunpack.c.l.b16 %v1808
        %v2123 = vunpack.c.h.b16 %v1808
        %v2124 = vunpack.c.l.b16 %v1809
        %v2125 = vunpack.c.h.b16 %v1809
        %v2126 = vunpack.c.l.b16 %v1810
        %v2127 = vunpack.c.h.b16 %v1810
        %v2128 = vunpack.c.l.b16 %v1811
        %v2129 = vunpack.c.h.b16 %v1811
        %v2130 = vunpack.c.l.b16 %v1812
        %v2131 = vunpack.c.h.b16 %v1812
        %v2132 = vunpack.c.l.b16 %v1813
        %v2133 = vunpack.c.h.b16 %v1813
        %v2134 = vunpack.c.l.b16 %v1814
        %v2135 = vunpack.c.h.b16 %v1814
        %v2136 = vunpack.c.l.b16 %v1815
        %v2137 = vunpack.c.h.b16 %v1815
        %v2138 = vunpack.c.l.b16 %v1816
        %v2139 = vunpack.c.h.b16 %v1816
        %v2140 = vunpack.c.l.b16 %v1817
        %v2141 = vunpack.c.h.b16 %v1817
        %v2142 = vunpack.c.l.b16 %v1818
        %v2143 = vunpack.c.h.b16 %v1818
        %v2144 = vunpack.c.l.b16 %v1819
        %v2145 = vunpack.c.h.b16 %v1819
        %v2146 = vunpack.c.l.b16 %v1820
        %v2147 = vunpack.c.h.b16 %v1820
        %v2148 = vunpack.c.l.b16 %v1821
        %v2149 = vunpack.c.h.b16 %v1821
        %v2150 = vunpack.c.l.b16 %v1822
        %v2151 = vunpack.c.h.b16 %v1822
        %v2152 = vunpack.c.l.b16 %v1823
        %v2153 = vunpack.c.h.b16 %v1823
        %v2154 = vunpack.c.l.b16 %v1824
        %v2155 = vunpack.c.h.b16 %v1824
        %v2156 = vunpack.c.l.b16 %v1825
        %v2157 = vunpack.c.h.b16 %v1825
        %v2158 = vunpack.c.l.b16 %v1826
        %v2159 = vunpack.c.h.b16 %v1826
        %v2160 = vunpack.c.l.b16 %v1827
        %v2161 = vunpack.c.h.b16 %v1827
        %v2162 = vunpack.c.l.b16 %v1828
        %v2163 = vunpack.c.h.b16 %v1828
        %v2164 = vunpack.c.l.b16 %v1829
        %v2165 = vunpack.c.h.b16 %v1829
        %v2166 = vunpack.c.l.b16 %v1830
        %v2167 = vunpack.c.h.b16 %v1830
        %v2168 = vunpack.c.l.b16 %v1831
        %v2169 = vunpack.c.h.b16 %v1831
        %v2170 = vunpack.c.l.b16 %v1832
        %v2171 = vunpack.c.h.b16 %v1832
        %v2172 = vunpack.c.l.b16 %v1833
        %v2173 = vunpack.c.h.b16 %v1833
        %v2174 = vunpack.c.l.b16 %v1834
        %v2175 = vunpack.c.h.b16 %v1834
        %v2176 = vunpack.c.l.b16 %v1835
        %v2177 = vunpack.c.h.b16 %v1835
        %v2178 = vunpack.c.l.b16 %v1836
        %v2179 = vunpack.c.h.b16 %v1836
        %v2180 = vunpack.c.l.b16 %v1837
        %v2181 = vunpack.c.h.b16 %v1837
        %v2182 = vunpack.c.l.b16 %v1838
        %v2183 = vunpack.c.h.b16 %v1838
        %v2184 = vunpack.c.l.b16 %v1839
        %v2185 = vunpack.c.h.b16 %v1839
        %v2186 = vunpack.c.l.b16 %v1840
        %v2187 = vunpack.c.h.b16 %v1840
        %v2188 = vunpack.c.l.b16 %v1841
        %v2189 = vunpack.c.h.b16 %v1841
        %v2190 = vunpack.c.l.b16 %v1842
        %v2191 = vunpack.c.h.b16 %v1842
        %v2192 = vunpack.c.l.b16 %v1843
        %v2193 = vunpack.c.h.b16 %v1843
        %v2194 = vunpack.c.l.b16 %v1844
        %v2195 = vunpack.c.h.b16 %v1844
        %v2196 = vunpack.c.l.b16 %v1845
        %v2197 = vunpack.c.h.b16 %v1845
        %v2198 = vunpack.c.l.b16 %v1846
        %v2199 = vunpack.c.h.b16 %v1846
        %v2200 = vunpack.c.l.b16 %v1847
        %v2201 = vunpack.c.h.b16 %v1847
        %v2202 = vunpack.c.l.b16 %v1848
        %v2203 = vunpack.c.h.b16 %v1848
        %v2204 = vunpack.c.l.b16 %v1849
        %v2205 = vunpack.c.h.b16 %v1849
        %v2206 = vunpack.c.l.b16 %v1850
        %v2207 = vunpack.c.h.b16 %v1850
        %v2208 = vunpack.c.l.b16 %v1851
        %v2209 = vunpack.c.h.b16 %v1851
        %v2210 = vunpack.c.l.b16 %v1852
        %v2211 = vunpack.c.h.b16 %v1852
        %v2212 = vunpack.c.l.b16 %v1853
        %v2213 = vunpack.c.h.b16 %v1853
        %v2214 = vunpack.c.l.b16 %v1854
        %v2215 = vunpack.c.h.b16 %v1854
        %v2216 = vunpack.c.l.b16 %v1855
        %v2217 = vunpack.c.h.b16 %v1855
        %v2218 = vunpack.c.l.b16 %v1856
        %v2219 = vunpack.c.h.b16 %v1856
        %v2220 = vunpack.c.l.b16 %v1857
        %v2221 = vunpack.c.h.b16 %v1857
        %v2222 = vunpack.c.l.b16 %v1858
        %v2223 = vunpack.c.h.b16 %v1858
        %v2224 = vunpack.c.l.b16 %v1859
        %v2225 = vunpack.c.h.b16 %v1859
        %v2226 = vunpack.c.l.b16 %v1860
        %v2227 = vunpack.c.h.b16 %v1860
        %v2228 = vunpack.c.l.b16 %v1861
        %v2229 = vunpack.c.h.b16 %v1861
        %v2230 = vunpack.c.l.b16 %v1862
        %v2231 = vunpack.c.h.b16 %v1862
        %v2232 = vunpack.c.l.b16 %v1863
        %v2233 = vunpack.c.h.b16 %v1863
        %v2234 = vunpack.c.l.b16 %v1864
        %v2235 = vunpack.c.h.b16 %v1864
        %v2236 = vunpack.c.l.b16 %v1865
        %v2237 = vunpack.c.h.b16 %v1865
        %v2238 = vunpack.c.l.b16 %v1866
        %v2239 = vunpack.c.h.b16 %v1866
        %v2240 = vunpack.c.l.b16 %v1867
        %v2241 = vunpack.c.h.b16 %v1867
        %v2242 = vunpack.c.l.b16 %v1868
        %v2243 = vunpack.c.h.b16 %v1868
        %v2244 = vunpack.c.l.b16 %v1869
        %v2245 = vunpack.c.h.b16 %v1869
        %v2246 = vunpack.c.l.b16 %v1870
        %v2247 = vunpack.c.h.b16 %v1870
        %v2248 = vunpack.c.l.b16 %v1871
        %v2249 = vunpack.c.h.b16 %v1871
        %v2250 = vunpack.c.l.b16 %v1872
        %v2251 = vunpack.c.h.b16 %v1872
        %v2252 = vunpack.c.l.b16 %v1873
        %v2253 = vunpack.c.h.b16 %v1873
        %v2254 = vunpack.c.l.b16 %v1874
        %v2255 = vunpack.c.h.b16 %v1874
        %v2256 = vunpack.c.l.b16 %v1875
        %v2257 = vunpack.c.h.b16 %v1875
        %v2258 = vunpack.c.l.b16 %v1876
        %v2259 = vunpack.c.h.b16 %v1876
        %v2260 = vunpack.c.l.b16 %v1877
        %v2261 = vunpack.c.h.b16 %v1877
        %v2262 = vpack.c.b16 %v2010, %v2006
        %v2263 = vpack.c.b16 %v2011, %v2007
        %v2264 = vpack.c.b16 %v2012, %v2008
        %v2265 = vpack.c.b16 %v2013, %v2009
        %v2266 = vpack.c.b16 %v2018, %v2014
        %v2267 = vpack.c.b16 %v2019, %v2015
        %v2268 = vpack.c.b16 %v2020, %v2016
        %v2269 = vpack.c.b16 %v2021, %v2017
        %v2270 = vpack.c.b16 %v2026, %v2022
        %v2271 = vpack.c.b16 %v2027, %v2023
        %v2272 = vpack.c.b16 %v2028, %v2024
        %v2273 = vpack.c.b16 %v2029, %v2025
        %v2274 = vpack.c.b16 %v2034, %v2030
        %v2275 = vpack.c.b16 %v2035, %v2031
        %v2276 = vpack.c.b16 %v2036, %v2032
        %v2277 = vpack.c.b16 %v2037, %v2033
        %v2278 = vpack.c.b16 %v2042, %v2038
        %v2279 = vpack.c.b16 %v2043, %v2039
        %v2280 = vpack.c.b16 %v2044, %v2040
        %v2281 = vpack.c.b16 %v2045, %v2041
        %v2282 = vpack.c.b16 %v2050, %v2046
        %v2283 = vpack.c.b16 %v2051, %v2047
        %v2284 = vpack.c.b16 %v2052, %v2048
        %v2285 = vpack.c.b16 %v2053, %v2049
        %v2286 = vpack.c.b16 %v2058, %v2054
        %v2287 = vpack.c.b16 %v2059, %v2055
        %v2288 = vpack.c.b16 %v2060, %v2056
        %v2289 = vpack.c.b16 %v2061, %v2057
        %v2290 = vpack.c.b16 %v2066, %v2062
        %v2291 = vpack.c.b16 %v2067, %v2063
        %v2292 = vpack.c.b16 %v2068, %v2064
        %v2293 = vpack.c.b16 %v2069, %v2065
        %v2294 = vpack.c.b16 %v2074, %v2070
        %v2295 = vpack.c.b16 %v2075, %v2071
        %v2296 = vpack.c.b16 %v2076, %v2072
        %v2297 = vpack.c.b16 %v2077, %v2073
        %v2298 = vpack.c.b16 %v2082, %v2078
        %v2299 = vpack.c.b16 %v2083, %v2079
        %v2300 = vpack.c.b16 %v2084, %v2080
        %v2301 = vpack.c.b16 %v2085, %v2081
        %v2302 = vpack.c.b16 %v2090, %v2086
        %v2303 = vpack.c.b16 %v2091, %v2087
        %v2304 = vpack.c.b16 %v2092, %v2088
        %v2305 = vpack.c.b16 %v2093, %v2089
        %v2306 = vpack.c.b16 %v2098, %v2094
        %v2307 = vpack.c.b16 %v2099, %v2095
        %v2308 = vpack.c.b16 %v2100, %v2096
        %v2309 = vpack.c.b16 %v2101, %v2097
        %v2310 = vpack.c.b16 %v2106, %v2102
        %v2311 = vpack.c.b16 %v2107, %v2103
        %v2312 = vpack.c.b16 %v2108, %v2104
        %v2313 = vpack.c.b16 %v2109, %v2105
        %v2314 = vpack.c.b16 %v2114, %v2110
        %v2315 = vpack.c.b16 %v2115, %v2111
        %v2316 = vpack.c.b16 %v2116, %v2112
        %v2317 = vpack.c.b16 %v2117, %v2113
        %v2318 = vpack.c.b16 %v2122, %v2118
        %v2319 = vpack.c.b16 %v2123, %v2119
        %v2320 = vpack.c.b16 %v2124, %v2120
        %v2321 = vpack.c.b16 %v2125, %v2121
        %v2322 = vpack.c.b16 %v2130, %v2126
        %v2323 = vpack.c.b16 %v2131, %v2127
        %v2324 = vpack.c.b16 %v2132, %v2128
        %v2325 = vpack.c.b16 %v2133, %v2129
        %v2326 = vpack.c.b16 %v2138, %v2134
        %v2327 = vpack.c.b16 %v2139, %v2135
        %v2328 = vpack.c.b16 %v2140, %v2136
        %v2329 = vpack.c.b16 %v2141, %v2137
        %v2330 = vpack.c.b16 %v2146, %v2142
        %v2331 = vpack.c.b16 %v2147, %v2143
        %v2332 = vpack.c.b16 %v2148, %v2144
        %v2333 = vpack.c.b16 %v2149, %v2145
        %v2334 = vpack.c.b16 %v2154, %v2150
        %v2335 = vpack.c.b16 %v2155, %v2151
        %v2336 = vpack.c.b16 %v2156, %v2152
        %v2337 = vpack.c.b16 %v2157, %v2153
        %v2338 = vpack.c.b16 %v2162, %v2158
        %v2339 = vpack.c.b16 %v2163, %v2159
        %v2340 = vpack.c.b16 %v2164, %v2160
        %v2341 = vpack.c.b16 %v2165, %v2161
        %v2342 = vpack.c.b16 %v2170, %v2166
        %v2343 = vpack.c.b16 %v2171, %v2167
        %v2344 = vpack.c.b16 %v2172, %v2168
        %v2345 = vpack.c.b16 %v2173, %v2169
        %v2346 = vpack.c.b16 %v2178, %v2174
        %v2347 = vpack.c.b16 %v2179, %v2175
        %v2348 = vpack.c.b16 %v2180, %v2176
        %v2349 = vpack.c.b16 %v2181, %v2177
        %v2350 = vpack.c.b16 %v2186, %v2182
        %v2351 = vpack.c.b16 %v2187, %v2183
        %v2352 = vpack.c.b16 %v2188, %v2184
        %v2353 = vpack.c.b16 %v2189, %v2185
        %v2354 = vpack.c.b16 %v2194, %v2190
        %v2355 = vpack.c.b16 %v2195, %v2191
        %v2356 = vpack.c.b16 %v2196, %v2192
        %v2357 = vpack.c.b16 %v2197, %v2193
        %v2358 = vpack.c.b16 %v2202, %v2198
        %v2359 = vpack.c.b16 %v2203, %v2199
        %v2360 = vpack.c.b16 %v2204, %v2200
        %v2361 = vpack.c.b16 %v2205, %v2201
        %v2362 = vpack.c.b16 %v2210, %v2206
        %v2363 = vpack.c.b16 %v2211, %v2207
        %v2364 = vpack.c.b16 %v2212, %v2208
        %v2365 = vpack.c.b16 %v2213, %v2209
        %v2366 = vpack.c.b16 %v2218, %v2214
        %v2367 = vpack.c.b16 %v2219, %v2215
        %v2368 = vpack.c.b16 %v2220, %v2216
        %v2369 = vpack.c.b16 %v2221, %v2217
        %v2370 = vpack.c.b16 %v2226, %v2222
        %v2371 = vpack.c.b16 %v2227, %v2223
        %v2372 = vpack.c.b16 %v2228, %v2224
        %v2373 = vpack.c.b16 %v2229, %v2225
        %v2374 = vpack.c.b16 %v2234, %v2230
        %v2375 = vpack.c.b16 %v2235, %v2231
        %v2376 = vpack.c.b16 %v2236, %v2232
        %v2377 = vpack.c.b16 %v2237, %v2233
        %v2378 = vpack.c.b16 %v2242, %v2238
        %v2379 = vpack.c.b16 %v2243, %v2239
        %v2380 = vpack.c.b16 %v2244, %v2240
        %v2381 = vpack.c.b16 %v2245, %v2241
        %v2382 = vpack.c.b16 %v2250, %v2246
        %v2383 = vpack.c.b16 %v2251, %v2247
        %v2384 = vpack.c.b16 %v2252, %v2248
        %v2385 = vpack.c.b16 %v2253, %v2249
        %v2386 = vpack.c.b16 %v2258, %v2254
        %v2387 = vpack.c.b16 %v2259, %v2255
        %v2388 = vpack.c.b16 %v2260, %v2256
        %v2389 = vpack.c.b16 %v2261, %v2257
        %2518 = vmatpush.bf16.msra.mxu0 %v2290
        %2519 = vmatpush.bf16.msra.mxu0 %v2286
        %2520 = vmatpush.bf16.msra.mxu0 %v2282
        %2521 = vmatpush.bf16.msra.mxu0 %v2278
        %2522 = vmatpush.bf16.msra.mxu0 %v2274
        %2523 = vmatpush.bf16.msra.mxu0 %v2270
        %2524 = vmatpush.bf16.msra.mxu0 %v2266
        %2525 = vmatpush.bf16.msra.mxu0 %v2262
        %2526 = vmatmul.bf16.gmra.mxu0 %v1746
        %v2527 = vpop.f32.mrf.mxu0
        %v2528 = vadd.f32 0.0, %v2527
        %v2529 = vpop.f32.mrf.mxu0
        %2530 = vdwg.mxu0
        %2531 = vmatpush.bf16.msra.mxu0 %v2322
        %2532 = vmatpush.bf16.msra.mxu0 %v2318
        %2533 = vmatpush.bf16.msra.mxu0 %v2314
        %2534 = vmatpush.bf16.msra.mxu0 %v2310
        %2535 = vmatpush.bf16.msra.mxu0 %v2306
        %2536 = vmatpush.bf16.msra.mxu0 %v2302
        %2537 = vmatpush.bf16.msra.mxu0 %v2298
        %2538 = vmatpush.bf16.msra.mxu0 %v2294
        %2539 = vmatmul.bf16.gmra.mxu0 %v1747
        %v2540 = vpop.f32.mrf.mxu0
        %v2541 = vadd.f32 %v2528, %v2540
        %v2542 = vpop.f32.mrf.mxu0
        %2543 = vdwg.mxu0
        %2544 = vmatpush.bf16.msra.mxu0 %v2354
        %2545 = vmatpush.bf16.msra.mxu0 %v2350
        %2546 = vmatpush.bf16.msra.mxu0 %v2346
        %2547 = vmatpush.bf16.msra.mxu0 %v2342
        %2548 = vmatpush.bf16.msra.mxu0 %v2338
        %2549 = vmatpush.bf16.msra.mxu0 %v2334
        %2550 = vmatpush.bf16.msra.mxu0 %v2330
        %2551 = vmatpush.bf16.msra.mxu0 %v2326
        %2552 = vmatmul.bf16.gmra.mxu0 %v1748
        %v2553 = vpop.f32.mrf.mxu0
        %v2554 = vadd.f32 %v2541, %v2553
        %v2555 = vpop.f32.mrf.mxu0
        %2556 = vdwg.mxu0
        %2557 = vmatpush.bf16.msra.mxu0 %v2386
        %2558 = vmatpush.bf16.msra.mxu0 %v2382
        %2559 = vmatpush.bf16.msra.mxu0 %v2378
        %2560 = vmatpush.bf16.msra.mxu0 %v2374
        %2561 = vmatpush.bf16.msra.mxu0 %v2370
        %2562 = vmatpush.bf16.msra.mxu0 %v2366
        %2563 = vmatpush.bf16.msra.mxu0 %v2362
        %2564 = vmatpush.bf16.msra.mxu0 %v2358
        %2565 = vmatmul.bf16.gmra.mxu0 %v1749
        %v2566 = vpop.f32.mrf.mxu0
        %v2567 = vadd.f32 %v2554, %v2566
        %v2568 = vpop.f32.mrf.mxu0
        %2569 = vdwg.mxu0
        %2570 = vmatpush.bf16.msra.mxu0 %v2291
        %2571 = vmatpush.bf16.msra.mxu0 %v2287
        %2572 = vmatpush.bf16.msra.mxu0 %v2283
        %2573 = vmatpush.bf16.msra.mxu0 %v2279
        %2574 = vmatpush.bf16.msra.mxu0 %v2275
        %2575 = vmatpush.bf16.msra.mxu0 %v2271
        %2576 = vmatpush.bf16.msra.mxu0 %v2267
        %2577 = vmatpush.bf16.msra.mxu0 %v2263
        %2578 = vmatmul.bf16.gmra.mxu0 %v1746
        %v2579 = vpop.f32.mrf.mxu0
        %v2580 = vadd.f32 0.0, %v2579
        %v2581 = vpop.f32.mrf.mxu0
        %2582 = vdwg.mxu0
        %2583 = vmatpush.bf16.msra.mxu0 %v2323
        %2584 = vmatpush.bf16.msra.mxu0 %v2319
        %2585 = vmatpush.bf16.msra.mxu0 %v2315
        %2586 = vmatpush.bf16.msra.mxu0 %v2311
        %2587 = vmatpush.bf16.msra.mxu0 %v2307
        %2588 = vmatpush.bf16.msra.mxu0 %v2303
        %2589 = vmatpush.bf16.msra.mxu0 %v2299
        %2590 = vmatpush.bf16.msra.mxu0 %v2295
        %2591 = vmatmul.bf16.gmra.mxu0 %v1747
        %v2592 = vpop.f32.mrf.mxu0
        %v2593 = vadd.f32 %v2580, %v2592
        %v2594 = vpop.f32.mrf.mxu0
        %2595 = vdwg.mxu0
        %2596 = vmatpush.bf16.msra.mxu0 %v2355
        %2597 = vmatpush.bf16.msra.mxu0 %v2351
        %2598 = vmatpush.bf16.msra.mxu0 %v2347
        %2599 = vmatpush.bf16.msra.mxu0 %v2343
        %2600 = vmatpush.bf16.msra.mxu0 %v2339
        %2601 = vmatpush.bf16.msra.mxu0 %v2335
        %2602 = vmatpush.bf16.msra.mxu0 %v2331
        %2603 = vmatpush.bf16.msra.mxu0 %v2327
        %2604 = vmatmul.bf16.gmra.mxu0 %v1748
        %v2605 = vpop.f32.mrf.mxu0
        %v2606 = vadd.f32 %v2593, %v2605
        %v2607 = vpop.f32.mrf.mxu0
        %2608 = vdwg.mxu0
        %2609 = vmatpush.bf16.msra.mxu0 %v2387
        %2610 = vmatpush.bf16.msra.mxu0 %v2383
        %2611 = vmatpush.bf16.msra.mxu0 %v2379
        %2612 = vmatpush.bf16.msra.mxu0 %v2375
        %2613 = vmatpush.bf16.msra.mxu0 %v2371
        %2614 = vmatpush.bf16.msra.mxu0 %v2367
        %2615 = vmatpush.bf16.msra.mxu0 %v2363
        %2616 = vmatpush.bf16.msra.mxu0 %v2359
        %2617 = vmatmul.bf16.gmra.mxu0 %v1749
        %v2618 = vpop.f32.mrf.mxu0
        %v2619 = vadd.f32 %v2606, %v2618
        %v2620 = vpop.f32.mrf.mxu0
        %2621 = vdwg.mxu0
        %2622 = vmatpush.bf16.msra.mxu0 %v2292
        %2623 = vmatpush.bf16.msra.mxu0 %v2288
        %2624 = vmatpush.bf16.msra.mxu0 %v2284
        %2625 = vmatpush.bf16.msra.mxu0 %v2280
        %2626 = vmatpush.bf16.msra.mxu0 %v2276
        %2627 = vmatpush.bf16.msra.mxu0 %v2272
        %2628 = vmatpush.bf16.msra.mxu0 %v2268
        %2629 = vmatpush.bf16.msra.mxu0 %v2264
        %2630 = vmatmul.bf16.gmra.mxu0 %v1746
        %v2631 = vpop.f32.mrf.mxu0
        %v2632 = vadd.f32 0.0, %v2631
        %v2633 = vpop.f32.mrf.mxu0
        %2634 = vdwg.mxu0
        %2635 = vmatpush.bf16.msra.mxu0 %v2324
        %2636 = vmatpush.bf16.msra.mxu0 %v2320
        %2637 = vmatpush.bf16.msra.mxu0 %v2316
        %2638 = vmatpush.bf16.msra.mxu0 %v2312
        %2639 = vmatpush.bf16.msra.mxu0 %v2308
        %2640 = vmatpush.bf16.msra.mxu0 %v2304
        %2641 = vmatpush.bf16.msra.mxu0 %v2300
        %2642 = vmatpush.bf16.msra.mxu0 %v2296
        %2643 = vmatmul.bf16.gmra.mxu0 %v1747
        %v2644 = vpop.f32.mrf.mxu0
        %v2645 = vadd.f32 %v2632, %v2644
        %v2646 = vpop.f32.mrf.mxu0
        %2647 = vdwg.mxu0
        %2648 = vmatpush.bf16.msra.mxu0 %v2356
        %2649 = vmatpush.bf16.msra.mxu0 %v2352
        %2650 = vmatpush.bf16.msra.mxu0 %v2348
        %2651 = vmatpush.bf16.msra.mxu0 %v2344
        %2652 = vmatpush.bf16.msra.mxu0 %v2340
        %2653 = vmatpush.bf16.msra.mxu0 %v2336
        %2654 = vmatpush.bf16.msra.mxu0 %v2332
        %2655 = vmatpush.bf16.msra.mxu0 %v2328
        %2656 = vmatmul.bf16.gmra.mxu0 %v1748
        %v2657 = vpop.f32.mrf.mxu0
        %v2658 = vadd.f32 %v2645, %v2657
        %v2659 = vpop.f32.mrf.mxu0
        %2660 = vdwg.mxu0
        %2661 = vmatpush.bf16.msra.mxu0 %v2388
        %2662 = vmatpush.bf16.msra.mxu0 %v2384
        %2663 = vmatpush.bf16.msra.mxu0 %v2380
        %2664 = vmatpush.bf16.msra.mxu0 %v2376
        %2665 = vmatpush.bf16.msra.mxu0 %v2372
        %2666 = vmatpush.bf16.msra.mxu0 %v2368
        %2667 = vmatpush.bf16.msra.mxu0 %v2364
        %2668 = vmatpush.bf16.msra.mxu0 %v2360
        %2669 = vmatmul.bf16.gmra.mxu0 %v1749
        %v2670 = vpop.f32.mrf.mxu0
        %v2671 = vadd.f32 %v2658, %v2670
        %v2672 = vpop.f32.mrf.mxu0
        %2673 = vdwg.mxu0
        %2674 = vmatpush.bf16.msra.mxu0 %v2293
        %2675 = vmatpush.bf16.msra.mxu0 %v2289
        %2676 = vmatpush.bf16.msra.mxu0 %v2285
        %2677 = vmatpush.bf16.msra.mxu0 %v2281
        %2678 = vmatpush.bf16.msra.mxu0 %v2277
        %2679 = vmatpush.bf16.msra.mxu0 %v2273
        %2680 = vmatpush.bf16.msra.mxu0 %v2269
        %2681 = vmatpush.bf16.msra.mxu0 %v2265
        %2682 = vmatmul.bf16.gmra.mxu0 %v1746
        %v2683 = vpop.f32.mrf.mxu0
        %v2684 = vadd.f32 0.0, %v2683
        %v2685 = vpop.f32.mrf.mxu0
        %2686 = vdwg.mxu0
        %2687 = vmatpush.bf16.msra.mxu0 %v2325
        %2688 = vmatpush.bf16.msra.mxu0 %v2321
        %2689 = vmatpush.bf16.msra.mxu0 %v2317
        %2690 = vmatpush.bf16.msra.mxu0 %v2313
        %2691 = vmatpush.bf16.msra.mxu0 %v2309
        %2692 = vmatpush.bf16.msra.mxu0 %v2305
        %2693 = vmatpush.bf16.msra.mxu0 %v2301
        %2694 = vmatpush.bf16.msra.mxu0 %v2297
        %2695 = vmatmul.bf16.gmra.mxu0 %v1747
        %v2696 = vpop.f32.mrf.mxu0
        %v2697 = vadd.f32 %v2684, %v2696
        %v2698 = vpop.f32.mrf.mxu0
        %2699 = vdwg.mxu0
        %2700 = vmatpush.bf16.msra.mxu0 %v2357
        %2701 = vmatpush.bf16.msra.mxu0 %v2353
        %2702 = vmatpush.bf16.msra.mxu0 %v2349
        %2703 = vmatpush.bf16.msra.mxu0 %v2345
        %2704 = vmatpush.bf16.msra.mxu0 %v2341
        %2705 = vmatpush.bf16.msra.mxu0 %v2337
        %2706 = vmatpush.bf16.msra.mxu0 %v2333
        %2707 = vmatpush.bf16.msra.mxu0 %v2329
        %2708 = vmatmul.bf16.gmra.mxu0 %v1748
        %v2709 = vpop.f32.mrf.mxu0
        %v2710 = vadd.f32 %v2697, %v2709
        %v2711 = vpop.f32.mrf.mxu0
        %2712 = vdwg.mxu0
        %2713 = vmatpush.bf16.msra.mxu0 %v2389
        %2714 = vmatpush.bf16.msra.mxu0 %v2385
        %2715 = vmatpush.bf16.msra.mxu0 %v2381
        %2716 = vmatpush.bf16.msra.mxu0 %v2377
        %2717 = vmatpush.bf16.msra.mxu0 %v2373
        %2718 = vmatpush.bf16.msra.mxu0 %v2369
        %2719 = vmatpush.bf16.msra.mxu0 %v2365
        %2720 = vmatpush.bf16.msra.mxu0 %v2361
        %2721 = vmatmul.bf16.gmra.mxu0 %v1749
        %v2722 = vpop.f32.mrf.mxu0
        %v2723 = vadd.f32 %v2710, %v2722
        %v2724 = vpop.f32.mrf.mxu0
        %2725 = vdwg.mxu0
        %v2730 = vrot.slane %v2619, 6
        %v2731 = vrot.slane %v2671, 4
        %v2732 = vrot.slane %v2723, 2
        %vm2733 = vcmask 1041408
        %v2734 = vsel %vm2733, %v2567, %v2730
        %vm2735 = vcmask 1045508
        %v2736 = vsel %vm2735, %v2731, %v2732
        %v2737 = vsel %vm804, %v2734, %v2736
        %v2739 = vadd.f32 %v1745, %v2737
        %2740 = vst [vmem:[#allocation2] sm:$0xff] %v2739
        %p2741 = scmp.eq.s32.totalorder %s23, 3
        // Predicated region
        $region84: #{curiosity_forward.5} parent=70 // pred_check
          %p2742 = pneg %p2741
        $region85: #{curiosity_forward.5} parent=70 // pred_check_branch
          %2744 = sbr.rel (%p2742) target = $region87
        $region86: #{curiosity_forward.5} parent=70 // pred_region
          %v2745 = vld [vmem:[#allocation2] sm:$0xff]
          %v2746 = vld [vmem:[%s1] sm:$0x1]
          %v2747 = vld [vmem:[%s6] sm:$0xff]
          %v2748 = vld [vmem:[%s6 + $0x8] sm:$0xff]
          %v2751 = vunpack.c.l.b16 %v2747
          %v2752 = vunpack.c.h.b16 %v2747
          %v2753 = vunpack.c.l.b16 %v2748
          %v2754 = vunpack.c.h.b16 %v2748
          %v2755 = vpack.c.b16 %v2751, %v2751
          %v2756 = vpack.c.b16 %v2752, %v2752
          %v2757 = vpack.c.b16 %v2753, %v2753
          %v2758 = vpack.c.b16 %v2754, %v2754
          %v2760 = vsel %vm800, %v2746, 0
          %v2763 = vsel %vm804, %v2755, 0
          %v2766 = vsel %vm804, %v2756, 0
          %v2769 = vsel %vm804, %v2757, 0
          %v2772 = vsel %vm804, %v2758, 0
          %2774 = vmatpush.bf16.msra.mxu0 0
          %2775 = vmatpush.bf16.msra.mxu0 0
          %2776 = vmatpush.bf16.msra.mxu0 0
          %2777 = vmatpush.bf16.msra.mxu0 0
          %2778 = vmatpush.bf16.msra.mxu0 0
          %2779 = vmatpush.bf16.msra.mxu0 0
          %2780 = vmatpush.bf16.msra.mxu0 0
          %2781 = vmatpush.bf16.msra.mxu0 %v2763
          %2782 = vmatmul.bf16.gmra.mxu0 %v2760
          %v2783 = vpop.f32.mrf.mxu0
          %v2784 = vadd.f32 0.0, %v2783
          %v2785 = vpop.f32.mrf.mxu0
          %2786 = vdwg.mxu0
          %2787 = vmatpush.bf16.msra.mxu0 0
          %2788 = vmatpush.bf16.msra.mxu0 0
          %2789 = vmatpush.bf16.msra.mxu0 0
          %2790 = vmatpush.bf16.msra.mxu0 0
          %2791 = vmatpush.bf16.msra.mxu0 0
          %2792 = vmatpush.bf16.msra.mxu0 0
          %2793 = vmatpush.bf16.msra.mxu0 0
          %2794 = vmatpush.bf16.msra.mxu0 %v2766
          %2795 = vmatmul.bf16.gmra.mxu0 %v2760
          %v2796 = vpop.f32.mrf.mxu0
          %v2797 = vadd.f32 0.0, %v2796
          %v2798 = vpop.f32.mrf.mxu0
          %2799 = vdwg.mxu0
          %2800 = vmatpush.bf16.msra.mxu0 0
          %2801 = vmatpush.bf16.msra.mxu0 0
          %2802 = vmatpush.bf16.msra.mxu0 0
          %2803 = vmatpush.bf16.msra.mxu0 0
          %2804 = vmatpush.bf16.msra.mxu0 0
          %2805 = vmatpush.bf16.msra.mxu0 0
          %2806 = vmatpush.bf16.msra.mxu0 0
          %2807 = vmatpush.bf16.msra.mxu0 %v2769
          %2808 = vmatmul.bf16.gmra.mxu0 %v2760
          %v2809 = vpop.f32.mrf.mxu0
          %v2810 = vadd.f32 0.0, %v2809
          %v2811 = vpop.f32.mrf.mxu0
          %2812 = vdwg.mxu0
          %2813 = vmatpush.bf16.msra.mxu0 0
          %2814 = vmatpush.bf16.msra.mxu0 0
          %2815 = vmatpush.bf16.msra.mxu0 0
          %2816 = vmatpush.bf16.msra.mxu0 0
          %2817 = vmatpush.bf16.msra.mxu0 0
          %2818 = vmatpush.bf16.msra.mxu0 0
          %2819 = vmatpush.bf16.msra.mxu0 0
          %2820 = vmatpush.bf16.msra.mxu0 %v2772
          %2821 = vmatmul.bf16.gmra.mxu0 %v2760
          %v2822 = vpop.f32.mrf.mxu0
          %v2823 = vadd.f32 0.0, %v2822
          %v2824 = vpop.f32.mrf.mxu0
          %2825 = vdwg.mxu0
          %v2830 = vrot.slane %v2797, 6
          %v2831 = vrot.slane %v2810, 4
          %v2832 = vrot.slane %v2823, 2
          %v2833 = vsel %vm2733, %v2784, %v2830
          %v2834 = vsel %vm2735, %v2831, %v2832
          %v2835 = vsel %vm804, %v2833, %v2834
          %v2837 = vadd.f32 %v2745, %v2835
          %v2838 = vld [vmem:[%s7] sm:$0xf]
          %v2840 = vperm.slane %v2838, 0
          %v2841 = vperm.slane %v2838, 1
          %v2842 = vperm.slane %v2838, 2
          %v2843 = vperm.slane %v2838, 3
          %v2844 = vrot.slane %v2841, 6
          %v2845 = vrot.slane %v2842, 4
          %v2846 = vrot.slane %v2843, 2
          %v2847 = vsel %vm2733, %v2840, %v2844
          %v2848 = vsel %vm2735, %v2845, %v2846
          %v2849 = vsel %vm804, %v2847, %v2848
          %v2851 = vadd.f32 %v2837, %v2849
          %v2852 = vmax.f32 %v2851, 0.0
          %2853 = vst [vmem:[#allocation7] sm:$0xff] %v2852
        $region87: #{curiosity_forward.5} parent=70 // pred_fallthru
          _
        // Predicated region
        $region88: #{curiosity_forward.5} parent=70 // pred_check
          %p2854 = pneg %p224
        $region89: #{curiosity_forward.5} parent=70 // pred_check_branch
          %2856 = sbr.rel (%p2854) target = $region91
        $region90: #{curiosity_forward.5} parent=70 // pred_region
          %2858 = vsyncadd [#allocation6], 0
          %s2860 = sshll.u32 [#allocation7], 4
          %s2861 = int_to_ptr.vmem [resolvable:$true] %s2860
          %s2862 = sshll.u32 %s8, 4
          %s2863 = int_to_ptr.hbm [resolvable:$true] %s2862
          %2865 = dma.vmem_to_hbm [thread:$0]  %s2861, 128, %s2863, [#allocation6]
        $region91: #{curiosity_forward.5} parent=70 // pred_fallthru
          _
        // Predicated region
        $region92: #{curiosity_forward.5} parent=70 // pred_check
          %p2866 = pneg %p224
        $region93: #{curiosity_forward.5} parent=70 // pred_check_branch
          %2868 = sbr.rel (%p2866) target = $region95
        $region94: #{curiosity_forward.5} parent=70 // pred_region
          %2870 = dma.done [#allocation6], 128
        $region95: #{curiosity_forward.5} parent=70 // pred_fallthru
          _
      $region71: #{curiosity_forward.5} parent=5 // pred_fallthru
        _
      %p2871 = scmp.le.s32.totalorder 2, %s18
      // Predicated region
      $region96: #{curiosity_forward.5} parent=5 // pred_check
        %p2872 = pneg %p2871
      $region97: #{curiosity_forward.5} parent=5 // pred_check_branch
        %2874 = sbr.rel (%p2872) target = $region99
      $region98: #{curiosity_forward.5} parent=5 // pred_region
        %s2875 = ssub.s32 %s18, 2
      $region99: #{curiosity_forward.5} parent=5 // pred_fallthru
        _
    $region6: #{curiosity_forward.5} parent=1 // loop_footer
      %s22 = sadd.s32 1, %s18
    $region7: #{curiosity_forward.5} parent=1 // loop_footer_branch
      %17 = sbr.rel target = $region3
    $region8: #{curiosity_forward.5} parent=1 // loop_exit
      _
    %2876 = vsyncpa [#allocation5], 1
    %s2877 = scalar_lea.sflag [#allocation5], 1
    %2878 = vsyncpa %s2877, 1
    %2879 = vsyncpa [#allocation6], 1
    %s2880 = scalar_lea.sflag [#allocation6], 1
    %2881 = vsyncpa %s2880, 1

</llo_original>
